<compile_context>
chip_gen: v6e
topology: v6e:2x2x1
jax: 0.10.0
libtpu: 0.0.40
codegen_flags: <defaults>
</compile_context>

<pallas_src>
import functools

import jax
import jax.numpy as jnp
from jax.experimental import pallas as pl
from jax.experimental.pallas import tpu as pltpu

_VMEM_LIMIT = 32 * 1024 * 1024  # explicit scoped-VMEM cap (>= v5e default, <= v7x physical)


# ----------------------------- Pallas kernels ------------------------------ #
def _lrelu(z):
    return jnp.where(z > 0, z, 0.2 * z)


def _conv1_kernel(p_ref, w_ref, o_ref):
    # Merged x/y first conv (block-diagonal weight) + LeakyReLU(0.2).
    z = jnp.dot(p_ref[...], w_ref[...], preferred_element_type=jnp.float32)
    o_ref[...] = _lrelu(z).astype(o_ref.dtype)


def _conv_bn_lrelu_kernel(p_ref, w_ref, g_ref, b_ref, o_ref):
    # Conv-as-matmul + training-mode BatchNorm2d (one-pass batch stats over the
    # N*OH*OW rows, biased variance, eps=1e-5) + LeakyReLU(0.2).
    z = jnp.dot(p_ref[...], w_ref[...], preferred_element_type=jnp.float32)
    mean = jnp.mean(z, axis=0, keepdims=True)
    mean_sq = jnp.mean(z * z, axis=0, keepdims=True)
    var = jnp.maximum(mean_sq - mean * mean, 0.0)
    zn = (z - mean) * jax.lax.rsqrt(var + 1e-5)
    o_ref[...] = _lrelu(zn * g_ref[...] + b_ref[...]).astype(o_ref.dtype)


def _conv_bn_lrelu_head_kernel(p_ref, w_ref, g_ref, b_ref, w4_ref, s4_ref, o_ref):
    # Layer-3 conv + BN + LeakyReLU with the final 256->1 conv + sigmoid fused:
    # out[n] = sigmoid( sum_{p,c} h3[n,p,c] * w4[p,c] ), done as an elementwise
    # multiply + per-image group-sum matmul (S4) + lane reduction.
    z = jnp.dot(p_ref[...], w_ref[...], preferred_element_type=jnp.float32)
    mean = jnp.mean(z, axis=0, keepdims=True)
    mean_sq = jnp.mean(z * z, axis=0, keepdims=True)
    var = jnp.maximum(mean_sq - mean * mean, 0.0)
    zn = (z - mean) * jax.lax.rsqrt(var + 1e-5)
    h3 = _lrelu(zn * g_ref[...] + b_ref[...])                                # (N*9, 256) f32
    t = h3 * w4_ref[...]                                                      # per-row conv4 products
    grp = jnp.dot(s4_ref[...], t, preferred_element_type=jnp.float32)         # (N, 256) per-image sums
    o_ref[...] = jax.nn.sigmoid(jnp.sum(grp, axis=1, keepdims=True))          # (N, 1)


# --------------------------- pallas_call wrappers --------------------------- #
def _conv1_call(p1, w1, tm):
    m, k = p1.shape
    return pl.pallas_call(
        _conv1_kernel,
        out_shape=jax.ShapeDtypeStruct((m, 64), jnp.bfloat16),
        grid_spec=pltpu.PrefetchScalarGridSpec(
            num_scalar_prefetch=0,
            grid=(m // tm,),
            in_specs=[pl.BlockSpec((tm, k), lambda i: (i, 0)),
                      pl.BlockSpec((k, 64), lambda i: (0, 0))],
            out_specs=pl.BlockSpec((tm, 64), lambda i: (i, 0)),
        ),
        compiler_params=pltpu.CompilerParams(
            dimension_semantics=("parallel",),          # shard M across TCs on v7x
            vmem_limit_bytes=_VMEM_LIMIT,
        ),
    )(p1, w1)


def _single_block_call(kernel, out_shape, *args):
    # Whole operands << VMEM at these sizes: single-block kernel, no grid.
    return pl.pallas_call(
        kernel,
        out_shape=out_shape,
        in_specs=[pl.BlockSpec(memory_space=pltpu.MemorySpace.VMEM)] * len(args),
        out_specs=pl.BlockSpec(memory_space=pltpu.MemorySpace.VMEM),
        compiler_params=pltpu.CompilerParams(vmem_limit_bytes=_VMEM_LIMIT),
    )(*args)


# ------------------------------- JAX glue ---------------------------------- #
def _im2col(x_nhwc, kh, kw, stride, pad):
    """Extract conv patches (pure slicing/stacking). Returns (N*OH*OW, KH*KW*C)."""
    x = jnp.pad(x_nhwc, ((0, 0), (pad, pad), (pad, pad), (0, 0)))
    n, h, w, c = x.shape
    oh = (h - kh) // stride + 1
    ow = (w - kw) // stride + 1
    cols = []
    for i in range(kh):
        for j in range(kw):
            cols.append(x[:, i:i + stride * oh:stride, j:j + stride * ow:stride, :])
    patches = jnp.stack(cols, axis=3)                  # (N, OH, OW, KH*KW, C)
    return patches.reshape(n * oh * ow, kh * kw * c), (n, oh, ow)


def _torch_conv_weight_to_matmul(w_oihw):
    """PyTorch (OC, IC, KH, KW) -> (KH*KW*IC, OC), matching _im2col's (i, j, c) order."""
    oc, ic, kh, kw = w_oihw.shape
    return jnp.transpose(w_oihw, (2, 3, 1, 0)).reshape(kh * kw * ic, oc)


def init_params(key):
    ks = jax.random.split(key, 7)
    f32 = jnp.float32
    # Conv weights ~ N(0, 0.02) (initialize_weights); BN gamma ~ N(1, 0.02), beta = 0.
    w1x = _torch_conv_weight_to_matmul(0.02 * jax.random.normal(ks[0], (32, 1, 4, 4), f32))   # (16, 32)
    w1y = _torch_conv_weight_to_matmul(0.02 * jax.random.normal(ks[1], (32, 10, 4, 4), f32))  # (160, 32)
    # Block-diagonal merged layer-1 weight: [px | py] @ W1 == concat([hx, hy], channels).
    w1 = jnp.zeros((176, 64), f32)
    w1 = w1.at[:16, :32].set(w1x)
    w1 = w1.at[16:, 32:].set(w1y)
    w1 = jnp.pad(w1, ((0, 80), (0, 0)))               # K padded 176 -> 256 (lane-aligned)
    p = {"w1": w1.astype(jnp.bfloat16)}
    p["w2"] = _torch_conv_weight_to_matmul(
        0.02 * jax.random.normal(ks[2], (128, 64, 4, 4), f32)).astype(jnp.bfloat16)   # (1024, 128)
    p["w3"] = _torch_conv_weight_to_matmul(
        0.02 * jax.random.normal(ks[3], (256, 128, 3, 3), f32)).astype(jnp.bfloat16)  # (1152, 256)
    w4 = 0.02 * jax.random.normal(ks[4], (1, 256, 3, 3), f32)
    p["w4"] = jnp.transpose(w4, (0, 2, 3, 1)).reshape(9, 256)                         # f32, row p = (i,j)
    p["g2"] = (1.0 + 0.02 * jax.random.normal(ks[5], (128,), f32)).reshape(1, 128)
    p["b2"] = jnp.zeros((1, 128), f32)
    p["g3"] = (1.0 + 0.02 * jax.random.normal(ks[6], (256,), f32)).reshape(1, 256)
    p["b3"] = jnp.zeros((1, 256), f32)
    return p


@functools.partial(jax.jit)
def discriminator_forward(x_nchw, y_nchw, params):
    n = x_nchw.shape[0]
    x = jnp.transpose(x_nchw, (0, 2, 3, 1)).astype(jnp.float32)  # NHWC
    y = jnp.transpose(y_nchw, (0, 2, 3, 1)).astype(jnp.float32)

    # ---- Layer 1: merged Conv(1->32) & Conv(10->32), k4 s2 p1, LeakyReLU(0.2) ----
    px, (_, oh, ow) = _im2col(x, 4, 4, 2, 1)                     # (N*196, 16)
    py, _ = _im2col(y, 4, 4, 2, 1)                               # (N*196, 160)
    p1 = jnp.concatenate([px, py], axis=1)                       # (N*196, 176)
    p1 = jnp.pad(p1, ((0, 0), (0, 80)))                          # K -> 256
    m1 = p1.shape[0]
    tm = 256
    m1p = ((m1 + tm - 1) // tm) * tm
    p1 = jnp.pad(p1, ((0, m1p - m1), (0, 0))).astype(jnp.bfloat16)
    h1 = _conv1_call(p1, params["w1"], tm)[:m1]                  # (N*196, 64) bf16 == cat([hx, hy])
    h1 = h1.reshape(n, oh, ow, 64)                               # (N, 14, 14, 64)

    # ---- Layer 2: Conv(64->128, k4 s2 p1) + BN(train) + LeakyReLU ----
    # TODO(synk): replace wrapper im2col (16x patch blow-up) with in-kernel tap decomposition.
    p2, (_, oh2, ow2) = _im2col(h1, 4, 4, 2, 1)                  # (N*49, 1024) bf16
    h2 = _single_block_call(
        _conv_bn_lrelu_kernel,
        jax.ShapeDtypeStruct((n * oh2 * ow2, 128), jnp.bfloat16),
        p2, params["w2"], params["g2"], params["b2"])
    h2 = h2.reshape(n, oh2, ow2, 128)                            # (N, 7, 7, 128)

    # ---- Layer 3 + fused layer 4: Conv(128->256, k3 s2) + BN + LReLU, Conv(256->1, k3) + Sigmoid ----
    p3, _ = _im2col(h2, 3, 3, 2, 0)                              # (N*9, 1152) bf16
    w4t = jnp.tile(params["w4"], (n, 1))                         # (N*9, 256) f32
    s4 = jnp.repeat(jnp.eye(n, dtype=jnp.float32), 9, axis=1)    # (N, N*9) per-image group-sum matrix
    out = _single_block_call(
        _conv_bn_lrelu_head_kernel,
        jax.ShapeDtypeStruct((n, 1), jnp.float32),
        p3, params["w3"], params["g3"], params["b3"], w4t, s4)
    return out                                                    # == out.view(-1, 1)


if __name__ == "__main__":
    key = jax.random.PRNGKey(0)
    kx, ky = jax.random.split(key)
    batch = 2
    # MNIST-sized inputs (smallest spatial size consistent with the conv stack: 28x28)
    x = jax.random.normal(kx, (batch, 1, 28, 28), jnp.float32)
    # y: one-hot label maps broadcast over spatial dims, as in a conditional GAN
    labels = jnp.array([3, 7], dtype=jnp.int32)
    y = jnp.broadcast_to(
        jax.nn.one_hot(labels, 10, dtype=jnp.float32)[:, :, None, None],
        (batch, 10, 28, 28),
    )

    params = init_params(jax.random.PRNGKey(1))
    out = discriminator_forward(x, y, params)
    out = jax.block_until_ready(out)
    assert out.shape == (batch, 1) and out.dtype == jnp.float32
    assert bool(jnp.all(jnp.isfinite(out)))
    assert bool(jnp.all((out >= 0.0) & (out <= 1.0)))
    print("KERNEL_OK")
</pallas_src>

<mosaic_0001>
module attributes {stable_mosaic.version = 11 : i64} {
  func.func @_conv1_kernel(%arg0: i32, %arg1: memref<256x256xbf16, #tpu.memory_space<vmem>>, %arg2: memref<256x64xbf16, #tpu.memory_space<vmem>>, %arg3: memref<256x64xbf16, #tpu.memory_space<vmem>>) attributes {dimension_semantics = [#tpu.dimension_semantics<parallel>], iteration_bounds = array<i64: 2>, scalar_prefetch = 0 : i64, scratch_operands = 0 : i64, tpu.core_type = #tpu.core_type<tc>, window_params = [{transform_indices = @transform_0, window_bounds = array<i64: 256, 256>}, {pipeline_mode = #tpu.pipeline_mode<synchronous>, transform_indices = @transform_1, window_bounds = array<i64: 256, 64>}, {transform_indices = @transform_2, window_bounds = array<i64: 256, 64>}]} {
    %c0 = arith.constant 0 : index
    %c0_0 = arith.constant 0 : index
    %0 = vector.load %arg1[%c0, %c0_0] : memref<256x256xbf16, #tpu.memory_space<vmem>>, vector<256x256xbf16>
    %c0_1 = arith.constant 0 : index
    %c0_2 = arith.constant 0 : index
    %1 = vector.load %arg2[%c0_1, %c0_2] : memref<256x64xbf16, #tpu.memory_space<vmem>>, vector<256x64xbf16>
    %cst = arith.constant dense<0.000000e+00> : vector<256x64xf32>
    %2 = tpu.matmul %0, %1, %cst {dimension_numbers = #tpu.dot_dimension_numbers<[1], [0], [0], [1], [0, 0, 1, 1], [], []>} : vector<256x256xbf16>, vector<256x64xbf16>, vector<256x64xf32> -> vector<256x64xf32>
    %cst_3 = arith.constant 0.000000e+00 : f32
    %3 = vector.broadcast %cst_3 : f32 to vector<256x64xf32>
    %4 = arith.cmpf ogt, %2, %3 : vector<256x64xf32>
    %cst_4 = arith.constant 2.000000e-01 : f32
    %5 = vector.broadcast %cst_4 : f32 to vector<256x64xf32>
    %6 = arith.mulf %5, %2 : vector<256x64xf32>
    %7 = arith.select %4, %2, %6 : vector<256x64xi1>, vector<256x64xf32>
    %8 = arith.truncf %7 : vector<256x64xf32> to vector<256x64xbf16>
    %c0_5 = arith.constant 0 : index
    %c0_6 = arith.constant 0 : index
    %9 = vector.load %arg3[%c0_5, %c0_6] : memref<256x64xbf16, #tpu.memory_space<vmem>>, vector<256x64xbf16>
    tpu.vector_store %arg3[%c0_5, %c0_6], %8 {strides = array<i32>} : memref<256x64xbf16, #tpu.memory_space<vmem>>, vector<256x64xbf16>,
    return
  }
  func.func @transform_0(%arg0: i32) -> (i32, i32) {
    %c0_i32 = arith.constant 0 : i32
    %c0_i32_0 = arith.constant 0 : i32
    return %arg0, %c0_i32 : i32, i32
  }
  func.func @transform_1(%arg0: i32) -> (i32, i32) {
    %c0_i32 = arith.constant 0 : i32
    %c0_i32_0 = arith.constant 0 : i32
    %c0_i32_1 = arith.constant 0 : i32
    return %c0_i32, %c0_i32_0 : i32, i32
  }
  func.func @transform_2(%arg0: i32) -> (i32, i32) {
    %c0_i32 = arith.constant 0 : i32
    %c0_i32_0 = arith.constant 0 : i32
    return %arg0, %c0_i32 : i32, i32
  }
}

module attributes {stable_mosaic.version = 11 : i64} {
  func.func @_conv_bn_lrelu_kernel(%arg0: memref<98x1024xbf16, #tpu.memory_space<vmem>>, %arg1: memref<1024x128xbf16, #tpu.memory_space<vmem>>, %arg2: memref<1x128xf32, #tpu.memory_space<vmem>>, %arg3: memref<1x128xf32, #tpu.memory_space<vmem>>, %arg4: memref<98x128xbf16, #tpu.memory_space<vmem>>) attributes {dimension_semantics = [], scalar_prefetch = 0 : i64, scratch_operands = 0 : i64, tpu.core_type = #tpu.core_type<tc>} {
    %c0 = arith.constant 0 : index
    %c0_0 = arith.constant 0 : index
    %0 = vector.load %arg0[%c0, %c0_0] : memref<98x1024xbf16, #tpu.memory_space<vmem>>, vector<98x1024xbf16>
    %c0_1 = arith.constant 0 : index
    %c0_2 = arith.constant 0 : index
    %1 = vector.load %arg1[%c0_1, %c0_2] : memref<1024x128xbf16, #tpu.memory_space<vmem>>, vector<1024x128xbf16>
    %cst = arith.constant dense<0.000000e+00> : vector<98x128xf32>
    %2 = tpu.matmul %0, %1, %cst {dimension_numbers = #tpu.dot_dimension_numbers<[1], [0], [0], [1], [0, 0, 1, 1], [], []>} : vector<98x1024xbf16>, vector<1024x128xbf16>, vector<98x128xf32> -> vector<98x128xf32>
    %cst_3 = arith.constant dense<0.000000e+00> : vector<128xf32>
    %3 = vector.multi_reduction <add>, %2, %cst_3 [0] : vector<98x128xf32> to vector<128xf32>
    %4 = vector.shape_cast %3 : vector<128xf32> to vector<1x128xf32>
    %cst_4 = arith.constant 9.800000e+01 : f32
    %5 = vector.broadcast %cst_4 : f32 to vector<1x128xf32>
    %6 = arith.divf %4, %5 : vector<1x128xf32>
    %7 = arith.mulf %2, %2 : vector<98x128xf32>
    %cst_5 = arith.constant dense<0.000000e+00> : vector<128xf32>
    %8 = vector.multi_reduction <add>, %7, %cst_5 [0] : vector<98x128xf32> to vector<128xf32>
    %9 = vector.shape_cast %8 : vector<128xf32> to vector<1x128xf32>
    %cst_6 = arith.constant 9.800000e+01 : f32
    %10 = vector.broadcast %cst_6 : f32 to vector<1x128xf32>
    %11 = arith.divf %9, %10 : vector<1x128xf32>
    %12 = arith.mulf %6, %6 : vector<1x128xf32>
    %13 = arith.subf %11, %12 : vector<1x128xf32>
    %cst_7 = arith.constant 0.000000e+00 : f32
    %14 = vector.broadcast %cst_7 : f32 to vector<1x128xf32>
    %15 = arith.maximumf %13, %14 : vector<1x128xf32>
    %16 = vector.broadcast %6 : vector<1x128xf32> to vector<98x128xf32>
    %17 = arith.subf %2, %16 : vector<98x128xf32>
    %cst_8 = arith.constant 9.99999974E-6 : f32
    %18 = vector.broadcast %cst_8 : f32 to vector<1x128xf32>
    %19 = arith.addf %15, %18 : vector<1x128xf32>
    %20 = math.rsqrt %19 : vector<1x128xf32>
    %21 = vector.broadcast %20 : vector<1x128xf32> to vector<98x128xf32>
    %22 = arith.mulf %17, %21 : vector<98x128xf32>
    %c0_9 = arith.constant 0 : index
    %c0_10 = arith.constant 0 : index
    %23 = vector.load %arg2[%c0_9, %c0_10] : memref<1x128xf32, #tpu.memory_space<vmem>>, vector<1x128xf32>
    %24 = vector.broadcast %23 : vector<1x128xf32> to vector<98x128xf32>
    %25 = arith.mulf %22, %24 : vector<98x128xf32>
    %c0_11 = arith.constant 0 : index
    %c0_12 = arith.constant 0 : index
    %26 = vector.load %arg3[%c0_11, %c0_12] : memref<1x128xf32, #tpu.memory_space<vmem>>, vector<1x128xf32>
    %27 = vector.broadcast %26 : vector<1x128xf32> to vector<98x128xf32>
    %28 = arith.addf %25, %27 : vector<98x128xf32>
    %cst_13 = arith.constant 0.000000e+00 : f32
    %29 = vector.broadcast %cst_13 : f32 to vector<98x128xf32>
    %30 = arith.cmpf ogt, %28, %29 : vector<98x128xf32>
    %cst_14 = arith.constant 2.000000e-01 : f32
    %31 = vector.broadcast %cst_14 : f32 to vector<98x128xf32>
    %32 = arith.mulf %31, %28 : vector<98x128xf32>
    %33 = arith.select %30, %28, %32 : vector<98x128xi1>, vector<98x128xf32>
    %34 = arith.truncf %33 : vector<98x128xf32> to vector<98x128xbf16>
    %c0_15 = arith.constant 0 : index
    %c0_16 = arith.constant 0 : index
    %35 = vector.load %arg4[%c0_15, %c0_16] : memref<98x128xbf16, #tpu.memory_space<vmem>>, vector<98x128xbf16>
    tpu.vector_store %arg4[%c0_15, %c0_16], %34 {strides = array<i32>} : memref<98x128xbf16, #tpu.memory_space<vmem>>, vector<98x128xbf16>,
    return
  }
}

module attributes {stable_mosaic.version = 11 : i64} {
  func.func @_conv_bn_lrelu_head_kernel(%arg0: memref<18x1152xbf16, #tpu.memory_space<vmem>>, %arg1: memref<1152x256xbf16, #tpu.memory_space<vmem>>, %arg2: memref<1x256xf32, #tpu.memory_space<vmem>>, %arg3: memref<1x256xf32, #tpu.memory_space<vmem>>, %arg4: memref<18x256xf32, #tpu.memory_space<vmem>>, %arg5: memref<2x18xf32, #tpu.memory_space<vmem>>, %arg6: memref<2x1xf32, #tpu.memory_space<vmem>>) attributes {dimension_semantics = [], scalar_prefetch = 0 : i64, scratch_operands = 0 : i64, tpu.core_type = #tpu.core_type<tc>} {
    %c0 = arith.constant 0 : index
    %c0_0 = arith.constant 0 : index
    %0 = vector.load %arg0[%c0, %c0_0] : memref<18x1152xbf16, #tpu.memory_space<vmem>>, vector<18x1152xbf16>
    %c0_1 = arith.constant 0 : index
    %c0_2 = arith.constant 0 : index
    %1 = vector.load %arg1[%c0_1, %c0_2] : memref<1152x256xbf16, #tpu.memory_space<vmem>>, vector<1152x256xbf16>
    %cst = arith.constant dense<0.000000e+00> : vector<18x256xf32>
    %2 = tpu.matmul %0, %1, %cst {dimension_numbers = #tpu.dot_dimension_numbers<[1], [0], [0], [1], [0, 0, 1, 1], [], []>} : vector<18x1152xbf16>, vector<1152x256xbf16>, vector<18x256xf32> -> vector<18x256xf32>
    %cst_3 = arith.constant dense<0.000000e+00> : vector<256xf32>
    %3 = vector.multi_reduction <add>, %2, %cst_3 [0] : vector<18x256xf32> to vector<256xf32>
    %4 = vector.shape_cast %3 : vector<256xf32> to vector<1x256xf32>
    %cst_4 = arith.constant 1.800000e+01 : f32
    %5 = vector.broadcast %cst_4 : f32 to vector<1x256xf32>
    %6 = arith.divf %4, %5 : vector<1x256xf32>
    %7 = arith.mulf %2, %2 : vector<18x256xf32>
    %cst_5 = arith.constant dense<0.000000e+00> : vector<256xf32>
    %8 = vector.multi_reduction <add>, %7, %cst_5 [0] : vector<18x256xf32> to vector<256xf32>
    %9 = vector.shape_cast %8 : vector<256xf32> to vector<1x256xf32>
    %cst_6 = arith.constant 1.800000e+01 : f32
    %10 = vector.broadcast %cst_6 : f32 to vector<1x256xf32>
    %11 = arith.divf %9, %10 : vector<1x256xf32>
    %12 = arith.mulf %6, %6 : vector<1x256xf32>
    %13 = arith.subf %11, %12 : vector<1x256xf32>
    %cst_7 = arith.constant 0.000000e+00 : f32
    %14 = vector.broadcast %cst_7 : f32 to vector<1x256xf32>
    %15 = arith.maximumf %13, %14 : vector<1x256xf32>
    %16 = vector.broadcast %6 : vector<1x256xf32> to vector<18x256xf32>
    %17 = arith.subf %2, %16 : vector<18x256xf32>
    %cst_8 = arith.constant 9.99999974E-6 : f32
    %18 = vector.broadcast %cst_8 : f32 to vector<1x256xf32>
    %19 = arith.addf %15, %18 : vector<1x256xf32>
    %20 = math.rsqrt %19 : vector<1x256xf32>
    %21 = vector.broadcast %20 : vector<1x256xf32> to vector<18x256xf32>
    %22 = arith.mulf %17, %21 : vector<18x256xf32>
    %c0_9 = arith.constant 0 : index
    %c0_10 = arith.constant 0 : index
    %23 = vector.load %arg2[%c0_9, %c0_10] : memref<1x256xf32, #tpu.memory_space<vmem>>, vector<1x256xf32>
    %24 = vector.broadcast %23 : vector<1x256xf32> to vector<18x256xf32>
    %25 = arith.mulf %22, %24 : vector<18x256xf32>
    %c0_11 = arith.constant 0 : index
    %c0_12 = arith.constant 0 : index
    %26 = vector.load %arg3[%c0_11, %c0_12] : memref<1x256xf32, #tpu.memory_space<vmem>>, vector<1x256xf32>
    %27 = vector.broadcast %26 : vector<1x256xf32> to vector<18x256xf32>
    %28 = arith.addf %25, %27 : vector<18x256xf32>
    %cst_13 = arith.constant 0.000000e+00 : f32
    %29 = vector.broadcast %cst_13 : f32 to vector<18x256xf32>
    %30 = arith.cmpf ogt, %28, %29 : vector<18x256xf32>
    %cst_14 = arith.constant 2.000000e-01 : f32
    %31 = vector.broadcast %cst_14 : f32 to vector<18x256xf32>
    %32 = arith.mulf %31, %28 : vector<18x256xf32>
    %33 = arith.select %30, %28, %32 : vector<18x256xi1>, vector<18x256xf32>
    %c0_15 = arith.constant 0 : index
    %c0_16 = arith.constant 0 : index
    %34 = vector.load %arg4[%c0_15, %c0_16] : memref<18x256xf32, #tpu.memory_space<vmem>>, vector<18x256xf32>
    %35 = arith.mulf %33, %34 : vector<18x256xf32>
    %c0_17 = arith.constant 0 : index
    %c0_18 = arith.constant 0 : index
    %36 = vector.load %arg5[%c0_17, %c0_18] : memref<2x18xf32, #tpu.memory_space<vmem>>, vector<2x18xf32>
    %cst_19 = arith.constant dense<0.000000e+00> : vector<2x256xf32>
    %37 = tpu.matmul %36, %35, %cst_19 {dimension_numbers = #tpu.dot_dimension_numbers<[1], [0], [0], [1], [0, 0, 1, 1], [], []>} : vector<2x18xf32>, vector<18x256xf32>, vector<2x256xf32> -> vector<2x256xf32>
    %cst_20 = arith.constant dense<0.000000e+00> : vector<2xf32>
    %38 = vector.multi_reduction <add>, %37, %cst_20 [1] : vector<2x256xf32> to vector<2xf32>
    %39 = vector.shape_cast %38 : vector<2xf32> to vector<2x1xf32>
    %40 = arith.negf %39 : vector<2x1xf32>
    %41 = math.exp %40 : vector<2x1xf32>
    %cst_21 = arith.constant 1.000000e+00 : f32
    %42 = vector.broadcast %cst_21 : f32 to vector<2x1xf32>
    %43 = arith.addf %42, %41 : vector<2x1xf32>
    %44 = arith.divf %42, %43 : vector<2x1xf32>
    %c0_22 = arith.constant 0 : index
    %c0_23 = arith.constant 0 : index
    %45 = vector.load %arg6[%c0_22, %c0_23] : memref<2x1xf32, #tpu.memory_space<vmem>>, vector<2x1xf32>
    tpu.vector_store %arg6[%c0_22, %c0_23], %44 {strides = array<i32>} : memref<2x1xf32, #tpu.memory_space<vmem>>, vector<2x1xf32>,
    return
  }
}

</mosaic_0001>

<llo_original>
// kernel: discriminator_forward.3
$region0: #{discriminator_forward.3}
  #allocation0 [shape = 'u32[]', space=smem, size = 0x4, offset = 0x4, fixed_abs, tag = 'smem constant byte address 0x4 - core index']
  #allocation1 [shape = 'u32[144,128]{1,0:T(1,128)}', space=vmem, size = 0x12000, scoped, tag = 'internal scratch']
  %s0 = inlined_call_operand.vmem [shape: bf16[512,256], index: 0, kind: input, shape index: {}]
  %s1 = inlined_call_operand.vmem [shape: bf16[256,64], index: 1, kind: input, shape index: {}]
  %s2 = inlined_call_operand.vmem [shape: bf16[512,64], index: 2, kind: output, shape index: {}]
  %s3 = sld [smem:[#allocation0]]
  $region41: #{discriminator_forward.3} parent=0
    _
  %s5 = ssub.s32 1, %s3
  %s6 = scalar_select 0, %s5, %s3
  loop: start=0, step=1, limit=4
  $region2: #{discriminator_forward.3} parent=0 // loop_pre_header
    _
  $region3: #{discriminator_forward.3} parent=0 // loop_header
    %s8 = sphi 0, %s12
    %p9 = scmp.ge.s32.totalorder %s8, 4
    %s18 = sphi 0, %s20
    %s21 = sphi 0, %s18
    %s22 = sphi 0, %s21
    %s38 = sphi 0, %s22
    %s42 = sphi 0, %s42
    %s44 = sphi 0, %s42
    %s45 = sphi 0, %s44
    %s59 = sphi 0, %s45
    %s65 = sphi 0, %s67
    %s68 = sphi 0, %s65
    %s69 = sphi 0, %s68
    %s85 = sphi 0, %s69
  $region4: #{discriminator_forward.3} parent=0 // loop_header_branch
    %11 = sbr.rel (%p9) target = $region8
  $region5: #{discriminator_forward.3} parent=0 // loop_body
    %s13 = ssub.s32 %s8, 1
    %s14 = ssub.s32 %s8, 2
    %s15 = sadd.s32 %s8, 1
    %s16 = ssub.s32 %s8, %s15
    %p17 = scmp.eq.s32.totalorder %s16, 0
    %s19 = sadd.s32 %s18, 1
    %s20 = scalar_select %p17, %s18, %s19
    %p23 = pneg %p17
    %p24 = scmp.eq.s32.totalorder %s8, 1
    %p25 = por %p23, %p24
    %p26 = scmp.ne.s32.totalorder %s18, %s21
    %p27 = scmp.eq.s32.totalorder %s8, 0
    %p28 = por %p26, %p27
    %p29 = scmp.ne.s32.totalorder %s18, %s21
    %p30 = scmp.eq.s32.totalorder %s13, 1
    %p31 = por %p29, %p30
    %p32 = scmp.ne.s32.totalorder %s21, %s22
    %p33 = scmp.eq.s32.totalorder %s13, 0
    %p34 = por %p32, %p33
    %p35 = scmp.ne.s32.totalorder %s21, %s22
    %p36 = scmp.eq.s32.totalorder %s14, 1
    %p37 = por %p35, %p36
    %p39 = scmp.ne.s32.totalorder %s22, %s38
    %p40 = scmp.eq.s32.totalorder %s14, 0
    %p41 = por %p39, %p40
    %s43 = sadd.s32 %s42, 1
    %p46 = scmp.eq.s32.totalorder %s8, 1
    %p47 = scmp.ne.s32.totalorder %s42, %s44
    %p48 = scmp.eq.s32.totalorder %s8, 0
    %p49 = por %p47, %p48
    %p50 = scmp.ne.s32.totalorder %s42, %s44
    %p51 = scmp.eq.s32.totalorder %s13, 1
    %p52 = por %p50, %p51
    %p53 = scmp.ne.s32.totalorder %s44, %s45
    %p54 = scmp.eq.s32.totalorder %s13, 0
    %p55 = por %p53, %p54
    %p56 = scmp.ne.s32.totalorder %s44, %s45
    %p57 = scmp.eq.s32.totalorder %s14, 1
    %p58 = por %p56, %p57
    %p60 = scmp.ne.s32.totalorder %s45, %s59
    %p61 = scmp.eq.s32.totalorder %s14, 0
    %p62 = por %p60, %p61
    %s63 = ssub.s32 %s8, %s15
    %p64 = scmp.eq.s32.totalorder %s63, 0
    %s66 = sadd.s32 %s65, 1
    %s67 = scalar_select %p64, %s65, %s66
    %p70 = pneg %p64
    %p71 = scmp.eq.s32.totalorder %s8, 1
    %p72 = por %p70, %p71
    %p73 = scmp.ne.s32.totalorder %s65, %s68
    %p74 = scmp.eq.s32.totalorder %s8, 0
    %p75 = por %p73, %p74
    %p76 = scmp.ne.s32.totalorder %s65, %s68
    %p77 = scmp.eq.s32.totalorder %s13, 1
    %p78 = por %p76, %p77
    %p79 = scmp.ne.s32.totalorder %s68, %s69
    %p80 = scmp.eq.s32.totalorder %s13, 0
    %p81 = por %p79, %p80
    %p82 = scmp.ne.s32.totalorder %s68, %s69
    %p83 = scmp.eq.s32.totalorder %s14, 1
    %p84 = por %p82, %p83
    %p86 = scmp.ne.s32.totalorder %s69, %s85
    %p87 = scmp.eq.s32.totalorder %s14, 0
    %p88 = por %p86, %p87
    %p89 = scmp.le.s32.totalorder 1, %s8
    %p90 = scmp.lt.s32.totalorder %s8, 3
    %p91 = pnand %p89, %p90
    %p92 = pneg %p91
    // Predicated region
    $region9: #{discriminator_forward.3} parent=5 // pred_check
      _
    $region10: #{discriminator_forward.3} parent=5 // pred_check_branch
      %94 = sbr.rel (%p91) target = $region12
    $region11: #{discriminator_forward.3} parent=5 // pred_region
      %s95 = ssub.s32 %s8, 1
      // Predicated region
      $region13: #{discriminator_forward.3} parent=11 // pred_check
        %p96 = pneg %p55
      $region14: #{discriminator_forward.3} parent=11 // pred_check_branch
        %98 = sbr.rel (%p96) target = $region16
      $region15: #{discriminator_forward.3} parent=11 // pred_region
        _
      $region16: #{discriminator_forward.3} parent=11 // pred_fallthru
        _
    $region12: #{discriminator_forward.3} parent=5 // pred_fallthru
      _
    %p99 = scmp.lt.s32.totalorder %s8, 2
    // Predicated region
    $region17: #{discriminator_forward.3} parent=5 // pred_check
      %p100 = pneg %p99
    $region18: #{discriminator_forward.3} parent=5 // pred_check_branch
      %102 = sbr.rel (%p100) target = $region20
    $region19: #{discriminator_forward.3} parent=5 // pred_region
      // Predicated region
      $region21: #{discriminator_forward.3} parent=19 // pred_check
        %p103 = pneg %p28
      $region22: #{discriminator_forward.3} parent=19 // pred_check_branch
        %105 = sbr.rel (%p103) target = $region24
      $region23: #{discriminator_forward.3} parent=19 // pred_region
        %s106 = smul.u32 32, %s8
        %p107 = scmp.lt.s32.totalorder %s106, 63
        %s108 = scalar_select %p107, %s106, 63
        %s109 = smul.addr %s108, 2
        %s110 = smul.addr %s109, 4
        %s111 = scalar_lea.vmem %s0, %s110
        %s112 = smul.u32 32, %s8
      $region24: #{discriminator_forward.3} parent=19 // pred_fallthru
        _
    $region20: #{discriminator_forward.3} parent=5 // pred_fallthru
      _
    %p113 = scmp.le.s32.totalorder 1, %s8
    %p114 = scmp.lt.s32.totalorder %s8, 3
    %p115 = pnand %p113, %p114
    %p116 = pneg %p115
    // Predicated region
    $region25: #{discriminator_forward.3} parent=5 // pred_check
      _
    $region26: #{discriminator_forward.3} parent=5 // pred_check_branch
      %118 = sbr.rel (%p115) target = $region28
    $region27: #{discriminator_forward.3} parent=5 // pred_region
      %s119 = ssub.s32 %s8, 1
      %s120 = smul.u32 32, %s13
      %p121 = scmp.lt.s32.totalorder %s120, 63
      %s122 = scalar_select %p121, %s120, 63
      %s123 = smul.addr %s122, 2
      %s124 = smul.addr %s123, 4
      %s125 = scalar_lea.vmem %s0, %s124
      %p126 = pneg %p34
      %p127 = pneg %p31
      %p128 = pneg %p55
      %p129 = pneg %p52
      %p130 = pneg %p81
      %p131 = pneg %p78
      %s132 = smul.u32 32, %s13
      %p133 = scmp.lt.s32.totalorder %s132, 63
      %s134 = scalar_select %p133, %s132, 63
      %s135 = smul.addr %s134, 4
      %s136 = scalar_lea.vmem %s2, %s135
      %s137 = smul.u32 32, %s13
      %p138 = scmp.lt.s32.totalorder %s137, 63
      %s139 = scalar_select %p138, %s137, 63
      %s140 = smul.addr %s139, 2
      %s141 = smul.addr %s140, 4
      %s142 = scalar_lea.vmem %s0, %s141
      %s143 = smul.u32 32, %s13
      %s144 = smul.u32 32, %s13
      %p145 = scmp.lt.s32.totalorder %s144, 63
      %s146 = scalar_select %p145, %s144, 63
      %s147 = smul.addr %s146, 4
      %s148 = scalar_lea.vmem %s2, %s147
      %s149 = smul.u32 32, %s13
      %v151 = vld [vmem:[%s142] sm:$0xff]
      %v152 = vld [vmem:[%s142 + $0x8] sm:$0xff]
      %v153 = vld [vmem:[%s142 + $0x10] sm:$0xff]
      %v154 = vld [vmem:[%s142 + $0x18] sm:$0xff]
      %v155 = vld [vmem:[%s142 + $0x20] sm:$0xff]
      %v156 = vld [vmem:[%s142 + $0x28] sm:$0xff]
      %v157 = vld [vmem:[%s142 + $0x30] sm:$0xff]
      %v158 = vld [vmem:[%s142 + $0x38] sm:$0xff]
      %v159 = vld [vmem:[%s142 + $0x40] sm:$0xff]
      %v160 = vld [vmem:[%s142 + $0x48] sm:$0xff]
      %v161 = vld [vmem:[%s142 + $0x50] sm:$0xff]
      %v162 = vld [vmem:[%s142 + $0x58] sm:$0xff]
      %v163 = vld [vmem:[%s142 + $0x60] sm:$0xff]
      %v164 = vld [vmem:[%s142 + $0x68] sm:$0xff]
      %v165 = vld [vmem:[%s142 + $0x70] sm:$0xff]
      %v166 = vld [vmem:[%s142 + $0x78] sm:$0xff]
      %v167 = vld [vmem:[%s142 + $0x80] sm:$0xff]
      %v168 = vld [vmem:[%s142 + $0x88] sm:$0xff]
      %v169 = vld [vmem:[%s142 + $0x90] sm:$0xff]
      %v170 = vld [vmem:[%s142 + $0x98] sm:$0xff]
      %v171 = vld [vmem:[%s142 + $0xa0] sm:$0xff]
      %v172 = vld [vmem:[%s142 + $0xa8] sm:$0xff]
      %v173 = vld [vmem:[%s142 + $0xb0] sm:$0xff]
      %v174 = vld [vmem:[%s142 + $0xb8] sm:$0xff]
      %v175 = vld [vmem:[%s142 + $0xc0] sm:$0xff]
      %v176 = vld [vmem:[%s142 + $0xc8] sm:$0xff]
      %v177 = vld [vmem:[%s142 + $0xd0] sm:$0xff]
      %v178 = vld [vmem:[%s142 + $0xd8] sm:$0xff]
      %v179 = vld [vmem:[%s142 + $0xe0] sm:$0xff]
      %v180 = vld [vmem:[%s142 + $0xe8] sm:$0xff]
      %v181 = vld [vmem:[%s142 + $0xf0] sm:$0xff]
      %v182 = vld [vmem:[%s142 + $0xf8] sm:$0xff]
      %v183 = vld [vmem:[%s1] sm:$0xf]
      %v184 = vld [vmem:[%s1 + $0x4] sm:$0xf]
      %v185 = vld [vmem:[%s1 + $0x8] sm:$0xf]
      %v186 = vld [vmem:[%s1 + $0xc] sm:$0xf]
      %v187 = vld [vmem:[%s1 + $0x10] sm:$0xf]
      %v188 = vld [vmem:[%s1 + $0x14] sm:$0xf]
      %v189 = vld [vmem:[%s1 + $0x18] sm:$0xf]
      %v190 = vld [vmem:[%s1 + $0x1c] sm:$0xf]
      %v191 = vld [vmem:[%s1 + $0x20] sm:$0xf]
      %v192 = vld [vmem:[%s1 + $0x24] sm:$0xf]
      %v193 = vld [vmem:[%s1 + $0x28] sm:$0xf]
      %v194 = vld [vmem:[%s1 + $0x2c] sm:$0xf]
      %v195 = vld [vmem:[%s1 + $0x30] sm:$0xf]
      %v196 = vld [vmem:[%s1 + $0x34] sm:$0xf]
      %v197 = vld [vmem:[%s1 + $0x38] sm:$0xf]
      %v198 = vld [vmem:[%s1 + $0x3c] sm:$0xf]
      %v199 = vld [vmem:[%s1 + $0x40] sm:$0xf]
      %v200 = vld [vmem:[%s1 + $0x44] sm:$0xf]
      %v201 = vld [vmem:[%s1 + $0x48] sm:$0xf]
      %v202 = vld [vmem:[%s1 + $0x4c] sm:$0xf]
      %v203 = vld [vmem:[%s1 + $0x50] sm:$0xf]
      %v204 = vld [vmem:[%s1 + $0x54] sm:$0xf]
      %v205 = vld [vmem:[%s1 + $0x58] sm:$0xf]
      %v206 = vld [vmem:[%s1 + $0x5c] sm:$0xf]
      %v207 = vld [vmem:[%s1 + $0x60] sm:$0xf]
      %v208 = vld [vmem:[%s1 + $0x64] sm:$0xf]
      %v209 = vld [vmem:[%s1 + $0x68] sm:$0xf]
      %v210 = vld [vmem:[%s1 + $0x6c] sm:$0xf]
      %v211 = vld [vmem:[%s1 + $0x70] sm:$0xf]
      %v212 = vld [vmem:[%s1 + $0x74] sm:$0xf]
      %v213 = vld [vmem:[%s1 + $0x78] sm:$0xf]
      %v214 = vld [vmem:[%s1 + $0x7c] sm:$0xf]
      %v247 = vunpack.c.l.b16 %v151
      %v248 = vunpack.c.h.b16 %v151
      %v249 = vunpack.c.l.b16 %v152
      %v250 = vunpack.c.h.b16 %v152
      %v251 = vunpack.c.l.b16 %v153
      %v252 = vunpack.c.h.b16 %v153
      %v253 = vunpack.c.l.b16 %v154
      %v254 = vunpack.c.h.b16 %v154
      %v255 = vunpack.c.l.b16 %v155
      %v256 = vunpack.c.h.b16 %v155
      %v257 = vunpack.c.l.b16 %v156
      %v258 = vunpack.c.h.b16 %v156
      %v259 = vunpack.c.l.b16 %v157
      %v260 = vunpack.c.h.b16 %v157
      %v261 = vunpack.c.l.b16 %v158
      %v262 = vunpack.c.h.b16 %v158
      %v263 = vunpack.c.l.b16 %v159
      %v264 = vunpack.c.h.b16 %v159
      %v265 = vunpack.c.l.b16 %v160
      %v266 = vunpack.c.h.b16 %v160
      %v267 = vunpack.c.l.b16 %v161
      %v268 = vunpack.c.h.b16 %v161
      %v269 = vunpack.c.l.b16 %v162
      %v270 = vunpack.c.h.b16 %v162
      %v271 = vunpack.c.l.b16 %v163
      %v272 = vunpack.c.h.b16 %v163
      %v273 = vunpack.c.l.b16 %v164
      %v274 = vunpack.c.h.b16 %v164
      %v275 = vunpack.c.l.b16 %v165
      %v276 = vunpack.c.h.b16 %v165
      %v277 = vunpack.c.l.b16 %v166
      %v278 = vunpack.c.h.b16 %v166
      %v279 = vunpack.c.l.b16 %v167
      %v280 = vunpack.c.h.b16 %v167
      %v281 = vunpack.c.l.b16 %v168
      %v282 = vunpack.c.h.b16 %v168
      %v283 = vunpack.c.l.b16 %v169
      %v284 = vunpack.c.h.b16 %v169
      %v285 = vunpack.c.l.b16 %v170
      %v286 = vunpack.c.h.b16 %v170
      %v287 = vunpack.c.l.b16 %v171
      %v288 = vunpack.c.h.b16 %v171
      %v289 = vunpack.c.l.b16 %v172
      %v290 = vunpack.c.h.b16 %v172
      %v291 = vunpack.c.l.b16 %v173
      %v292 = vunpack.c.h.b16 %v173
      %v293 = vunpack.c.l.b16 %v174
      %v294 = vunpack.c.h.b16 %v174
      %v295 = vunpack.c.l.b16 %v175
      %v296 = vunpack.c.h.b16 %v175
      %v297 = vunpack.c.l.b16 %v176
      %v298 = vunpack.c.h.b16 %v176
      %v299 = vunpack.c.l.b16 %v177
      %v300 = vunpack.c.h.b16 %v177
      %v301 = vunpack.c.l.b16 %v178
      %v302 = vunpack.c.h.b16 %v178
      %v303 = vunpack.c.l.b16 %v179
      %v304 = vunpack.c.h.b16 %v179
      %v305 = vunpack.c.l.b16 %v180
      %v306 = vunpack.c.h.b16 %v180
      %v307 = vunpack.c.l.b16 %v181
      %v308 = vunpack.c.h.b16 %v181
      %v309 = vunpack.c.l.b16 %v182
      %v310 = vunpack.c.h.b16 %v182
      %v311 = vpack.c.b16 %v249, %v247
      %v312 = vpack.c.b16 %v250, %v248
      %v313 = vpack.c.b16 %v253, %v251
      %v314 = vpack.c.b16 %v254, %v252
      %v315 = vpack.c.b16 %v257, %v255
      %v316 = vpack.c.b16 %v258, %v256
      %v317 = vpack.c.b16 %v261, %v259
      %v318 = vpack.c.b16 %v262, %v260
      %v319 = vpack.c.b16 %v265, %v263
      %v320 = vpack.c.b16 %v266, %v264
      %v321 = vpack.c.b16 %v269, %v267
      %v322 = vpack.c.b16 %v270, %v268
      %v323 = vpack.c.b16 %v273, %v271
      %v324 = vpack.c.b16 %v274, %v272
      %v325 = vpack.c.b16 %v277, %v275
      %v326 = vpack.c.b16 %v278, %v276
      %v327 = vpack.c.b16 %v281, %v279
      %v328 = vpack.c.b16 %v282, %v280
      %v329 = vpack.c.b16 %v285, %v283
      %v330 = vpack.c.b16 %v286, %v284
      %v331 = vpack.c.b16 %v289, %v287
      %v332 = vpack.c.b16 %v290, %v288
      %v333 = vpack.c.b16 %v293, %v291
      %v334 = vpack.c.b16 %v294, %v292
      %v335 = vpack.c.b16 %v297, %v295
      %v336 = vpack.c.b16 %v298, %v296
      %v337 = vpack.c.b16 %v301, %v299
      %v338 = vpack.c.b16 %v302, %v300
      %v339 = vpack.c.b16 %v305, %v303
      %v340 = vpack.c.b16 %v306, %v304
      %v341 = vpack.c.b16 %v309, %v307
      %v342 = vpack.c.b16 %v310, %v308
      %v407 = vunpack.c.l.b16 %v183
      %v408 = vunpack.c.l.b16 %v184
      %v409 = vunpack.c.l.b16 %v185
      %v410 = vunpack.c.l.b16 %v186
      %v411 = vunpack.c.l.b16 %v187
      %v412 = vunpack.c.l.b16 %v188
      %v413 = vunpack.c.l.b16 %v189
      %v414 = vunpack.c.l.b16 %v190
      %v415 = vunpack.c.l.b16 %v191
      %v416 = vunpack.c.l.b16 %v192
      %v417 = vunpack.c.l.b16 %v193
      %v418 = vunpack.c.l.b16 %v194
      %v419 = vunpack.c.l.b16 %v195
      %v420 = vunpack.c.l.b16 %v196
      %v421 = vunpack.c.l.b16 %v197
      %v422 = vunpack.c.l.b16 %v198
      %v423 = vunpack.c.l.b16 %v199
      %v424 = vunpack.c.l.b16 %v200
      %v425 = vunpack.c.l.b16 %v201
      %v426 = vunpack.c.l.b16 %v202
      %v427 = vunpack.c.l.b16 %v203
      %v428 = vunpack.c.l.b16 %v204
      %v429 = vunpack.c.l.b16 %v205
      %v430 = vunpack.c.l.b16 %v206
      %v431 = vunpack.c.l.b16 %v207
      %v432 = vunpack.c.l.b16 %v208
      %v433 = vunpack.c.l.b16 %v209
      %v434 = vunpack.c.l.b16 %v210
      %v435 = vunpack.c.l.b16 %v211
      %v436 = vunpack.c.l.b16 %v212
      %v437 = vunpack.c.l.b16 %v213
      %v438 = vunpack.c.l.b16 %v214
      %v439 = vpack.c.b16 %v408, %v407
      %v440 = vpack.c.b16 %v410, %v409
      %v441 = vpack.c.b16 %v412, %v411
      %v442 = vpack.c.b16 %v414, %v413
      %v443 = vpack.c.b16 %v416, %v415
      %v444 = vpack.c.b16 %v418, %v417
      %v445 = vpack.c.b16 %v420, %v419
      %v446 = vpack.c.b16 %v422, %v421
      %v447 = vpack.c.b16 %v424, %v423
      %v448 = vpack.c.b16 %v426, %v425
      %v449 = vpack.c.b16 %v428, %v427
      %v450 = vpack.c.b16 %v430, %v429
      %v451 = vpack.c.b16 %v432, %v431
      %v452 = vpack.c.b16 %v434, %v433
      %v453 = vpack.c.b16 %v436, %v435
      %v454 = vpack.c.b16 %v438, %v437
      %471 = vmatprep.subr.bf16.mxu0 0
      %472 = vmatpush1.bf16.msra.mxu0 %v446
      %473 = vmatprep.subr.bf16.mxu0 0
      %474 = vmatpush1.bf16.msra.mxu0 %v445
      %475 = vmatprep.subr.bf16.mxu0 0
      %476 = vmatpush1.bf16.msra.mxu0 %v444
      %477 = vmatprep.subr.bf16.mxu0 0
      %478 = vmatpush1.bf16.msra.mxu0 %v443
      %479 = vmatprep.subr.bf16.mxu0 0
      %480 = vmatpush1.bf16.msra.mxu0 %v442
      %481 = vmatprep.subr.bf16.mxu0 0
      %482 = vmatpush1.bf16.msra.mxu0 %v441
      %483 = vmatprep.subr.bf16.mxu0 0
      %484 = vmatpush1.bf16.msra.mxu0 %v440
      %485 = vmatprep.subr.bf16.mxu0 0
      %486 = vmatpush1.bf16.msra.mxu0 %v439
      %487 = vmatprep.subr.bf16.mxu0 0
      %488 = vmatpush2.bf16.msra.mxu0 %v454
      %489 = vmatprep.subr.bf16.mxu0 0
      %490 = vmatpush2.bf16.msra.mxu0 %v453
      %491 = vmatprep.subr.bf16.mxu0 0
      %492 = vmatpush2.bf16.msra.mxu0 %v452
      %493 = vmatprep.subr.bf16.mxu0 0
      %494 = vmatpush2.bf16.msra.mxu0 %v451
      %495 = vmatprep.subr.bf16.mxu0 0
      %496 = vmatpush2.bf16.msra.mxu0 %v450
      %497 = vmatprep.subr.bf16.mxu0 0
      %498 = vmatpush2.bf16.msra.mxu0 %v449
      %499 = vmatprep.subr.bf16.mxu0 0
      %500 = vmatpush2.bf16.msra.mxu0 %v448
      %501 = vmatprep.subr.bf16.mxu0 0
      %502 = vmatpush2.bf16.msra.mxu0 %v447
      %503 = vmatprep.mubr.bf16.mxu0 %v312
      %504 = vmatmul.mubr.bf16.gmra.mxu0 %v311
      %v505 = vpop.f32.mrf.mxu0
      %v506 = vadd.f32 0.0, %v505
      %v507 = vpop.f32.mrf.mxu0
      %v508 = vpop.f32.mrf.mxu0
      %v509 = vadd.f32 0.0, %v508
      %v510 = vpop.f32.mrf.mxu0
      %511 = vmatprep.mubr.bf16.mxu0 %v314
      %512 = vmatmul.mubr.bf16.gmra.mxu0 %v313
      %v513 = vpop.f32.mrf.mxu0
      %v514 = vadd.f32 0.0, %v513
      %v515 = vpop.f32.mrf.mxu0
      %v516 = vpop.f32.mrf.mxu0
      %v517 = vadd.f32 0.0, %v516
      %v518 = vpop.f32.mrf.mxu0
      %519 = vmatprep.mubr.bf16.mxu0 %v316
      %520 = vmatmul.mubr.bf16.gmra.mxu0 %v315
      %v521 = vpop.f32.mrf.mxu0
      %v522 = vadd.f32 0.0, %v521
      %v523 = vpop.f32.mrf.mxu0
      %v524 = vpop.f32.mrf.mxu0
      %v525 = vadd.f32 0.0, %v524
      %v526 = vpop.f32.mrf.mxu0
      %527 = vmatprep.mubr.bf16.mxu0 %v318
      %528 = vmatmul.mubr.bf16.gmra.mxu0 %v317
      %v529 = vpop.f32.mrf.mxu0
      %v530 = vadd.f32 0.0, %v529
      %v531 = vpop.f32.mrf.mxu0
      %v532 = vpop.f32.mrf.mxu0
      %v533 = vadd.f32 0.0, %v532
      %v534 = vpop.f32.mrf.mxu0
      %535 = vmatprep.mubr.bf16.mxu0 %v320
      %536 = vmatmul.mubr.bf16.gmra.mxu0 %v319
      %v537 = vpop.f32.mrf.mxu0
      %v538 = vadd.f32 0.0, %v537
      %v539 = vpop.f32.mrf.mxu0
      %v540 = vpop.f32.mrf.mxu0
      %v541 = vadd.f32 0.0, %v540
      %v542 = vpop.f32.mrf.mxu0
      %543 = vmatprep.mubr.bf16.mxu0 %v322
      %544 = vmatmul.mubr.bf16.gmra.mxu0 %v321
      %v545 = vpop.f32.mrf.mxu0
      %v546 = vadd.f32 0.0, %v545
      %v547 = vpop.f32.mrf.mxu0
      %v548 = vpop.f32.mrf.mxu0
      %v549 = vadd.f32 0.0, %v548
      %v550 = vpop.f32.mrf.mxu0
      %551 = vmatprep.mubr.bf16.mxu0 %v324
      %552 = vmatmul.mubr.bf16.gmra.mxu0 %v323
      %v553 = vpop.f32.mrf.mxu0
      %v554 = vadd.f32 0.0, %v553
      %v555 = vpop.f32.mrf.mxu0
      %v556 = vpop.f32.mrf.mxu0
      %v557 = vadd.f32 0.0, %v556
      %v558 = vpop.f32.mrf.mxu0
      %559 = vmatprep.mubr.bf16.mxu0 %v326
      %560 = vmatmul.mubr.bf16.gmra.mxu0 %v325
      %v561 = vpop.f32.mrf.mxu0
      %v562 = vadd.f32 0.0, %v561
      %v563 = vpop.f32.mrf.mxu0
      %v564 = vpop.f32.mrf.mxu0
      %v565 = vadd.f32 0.0, %v564
      %v566 = vpop.f32.mrf.mxu0
      %567 = vmatprep.mubr.bf16.mxu0 %v328
      %568 = vmatmul.mubr.bf16.gmra.mxu0 %v327
      %v569 = vpop.f32.mrf.mxu0
      %v570 = vadd.f32 0.0, %v569
      %v571 = vpop.f32.mrf.mxu0
      %v572 = vpop.f32.mrf.mxu0
      %v573 = vadd.f32 0.0, %v572
      %v574 = vpop.f32.mrf.mxu0
      %575 = vmatprep.mubr.bf16.mxu0 %v330
      %576 = vmatmul.mubr.bf16.gmra.mxu0 %v329
      %v577 = vpop.f32.mrf.mxu0
      %v578 = vadd.f32 0.0, %v577
      %v579 = vpop.f32.mrf.mxu0
      %v580 = vpop.f32.mrf.mxu0
      %v581 = vadd.f32 0.0, %v580
      %v582 = vpop.f32.mrf.mxu0
      %583 = vmatprep.mubr.bf16.mxu0 %v332
      %584 = vmatmul.mubr.bf16.gmra.mxu0 %v331
      %v585 = vpop.f32.mrf.mxu0
      %v586 = vadd.f32 0.0, %v585
      %v587 = vpop.f32.mrf.mxu0
      %v588 = vpop.f32.mrf.mxu0
      %v589 = vadd.f32 0.0, %v588
      %v590 = vpop.f32.mrf.mxu0
      %591 = vmatprep.mubr.bf16.mxu0 %v334
      %592 = vmatmul.mubr.bf16.gmra.mxu0 %v333
      %v593 = vpop.f32.mrf.mxu0
      %v594 = vadd.f32 0.0, %v593
      %v595 = vpop.f32.mrf.mxu0
      %v596 = vpop.f32.mrf.mxu0
      %v597 = vadd.f32 0.0, %v596
      %v598 = vpop.f32.mrf.mxu0
      %599 = vmatprep.mubr.bf16.mxu0 %v336
      %600 = vmatmul.mubr.bf16.gmra.mxu0 %v335
      %v601 = vpop.f32.mrf.mxu0
      %v602 = vadd.f32 0.0, %v601
      %v603 = vpop.f32.mrf.mxu0
      %v604 = vpop.f32.mrf.mxu0
      %v605 = vadd.f32 0.0, %v604
      %v606 = vpop.f32.mrf.mxu0
      %607 = vmatprep.mubr.bf16.mxu0 %v338
      %608 = vmatmul.mubr.bf16.gmra.mxu0 %v337
      %v609 = vpop.f32.mrf.mxu0
      %v610 = vadd.f32 0.0, %v609
      %v611 = vpop.f32.mrf.mxu0
      %v612 = vpop.f32.mrf.mxu0
      %v613 = vadd.f32 0.0, %v612
      %v614 = vpop.f32.mrf.mxu0
      %615 = vmatprep.mubr.bf16.mxu0 %v340
      %616 = vmatmul.mubr.bf16.gmra.mxu0 %v339
      %v617 = vpop.f32.mrf.mxu0
      %v618 = vadd.f32 0.0, %v617
      %v619 = vpop.f32.mrf.mxu0
      %v620 = vpop.f32.mrf.mxu0
      %v621 = vadd.f32 0.0, %v620
      %v622 = vpop.f32.mrf.mxu0
      %623 = vmatprep.mubr.bf16.mxu0 %v342
      %624 = vmatmul.mubr.bf16.gmra.mxu0 %v341
      %v625 = vpop.f32.mrf.mxu0
      %v626 = vadd.f32 0.0, %v625
      %v627 = vpop.f32.mrf.mxu0
      %v628 = vpop.f32.mrf.mxu0
      %v629 = vadd.f32 0.0, %v628
      %v630 = vpop.f32.mrf.mxu0
      %631 = vdwg.mxu0
      %vm632 = vcmp.gt.f32.partialorder %v506, 0.0
      %vm633 = vcmp.gt.f32.partialorder %v509, 0.0
      %vm634 = vcmp.gt.f32.partialorder %v514, 0.0
      %vm635 = vcmp.gt.f32.partialorder %v517, 0.0
      %vm636 = vcmp.gt.f32.partialorder %v522, 0.0
      %vm637 = vcmp.gt.f32.partialorder %v525, 0.0
      %vm638 = vcmp.gt.f32.partialorder %v530, 0.0
      %vm639 = vcmp.gt.f32.partialorder %v533, 0.0
      %vm640 = vcmp.gt.f32.partialorder %v538, 0.0
      %vm641 = vcmp.gt.f32.partialorder %v541, 0.0
      %vm642 = vcmp.gt.f32.partialorder %v546, 0.0
      %vm643 = vcmp.gt.f32.partialorder %v549, 0.0
      %vm644 = vcmp.gt.f32.partialorder %v554, 0.0
      %vm645 = vcmp.gt.f32.partialorder %v557, 0.0
      %vm646 = vcmp.gt.f32.partialorder %v562, 0.0
      %vm647 = vcmp.gt.f32.partialorder %v565, 0.0
      %vm648 = vcmp.gt.f32.partialorder %v570, 0.0
      %vm649 = vcmp.gt.f32.partialorder %v573, 0.0
      %vm650 = vcmp.gt.f32.partialorder %v578, 0.0
      %vm651 = vcmp.gt.f32.partialorder %v581, 0.0
      %vm652 = vcmp.gt.f32.partialorder %v586, 0.0
      %vm653 = vcmp.gt.f32.partialorder %v589, 0.0
      %vm654 = vcmp.gt.f32.partialorder %v594, 0.0
      %vm655 = vcmp.gt.f32.partialorder %v597, 0.0
      %vm656 = vcmp.gt.f32.partialorder %v602, 0.0
      %vm657 = vcmp.gt.f32.partialorder %v605, 0.0
      %vm658 = vcmp.gt.f32.partialorder %v610, 0.0
      %vm659 = vcmp.gt.f32.partialorder %v613, 0.0
      %vm660 = vcmp.gt.f32.partialorder %v618, 0.0
      %vm661 = vcmp.gt.f32.partialorder %v621, 0.0
      %vm662 = vcmp.gt.f32.partialorder %v626, 0.0
      %vm663 = vcmp.gt.f32.partialorder %v629, 0.0
      %v664 = vmul.f32 %v506, 0.2
      %v665 = vmul.f32 %v509, 0.2
      %v666 = vmul.f32 %v514, 0.2
      %v667 = vmul.f32 %v517, 0.2
      %v668 = vmul.f32 %v522, 0.2
      %v669 = vmul.f32 %v525, 0.2
      %v670 = vmul.f32 %v530, 0.2
      %v671 = vmul.f32 %v533, 0.2
      %v672 = vmul.f32 %v538, 0.2
      %v673 = vmul.f32 %v541, 0.2
      %v674 = vmul.f32 %v546, 0.2
      %v675 = vmul.f32 %v549, 0.2
      %v676 = vmul.f32 %v554, 0.2
      %v677 = vmul.f32 %v557, 0.2
      %v678 = vmul.f32 %v562, 0.2
      %v679 = vmul.f32 %v565, 0.2
      %v680 = vmul.f32 %v570, 0.2
      %v681 = vmul.f32 %v573, 0.2
      %v682 = vmul.f32 %v578, 0.2
      %v683 = vmul.f32 %v581, 0.2
      %v684 = vmul.f32 %v586, 0.2
      %v685 = vmul.f32 %v589, 0.2
      %v686 = vmul.f32 %v594, 0.2
      %v687 = vmul.f32 %v597, 0.2
      %v688 = vmul.f32 %v602, 0.2
      %v689 = vmul.f32 %v605, 0.2
      %v690 = vmul.f32 %v610, 0.2
      %v691 = vmul.f32 %v613, 0.2
      %v692 = vmul.f32 %v618, 0.2
      %v693 = vmul.f32 %v621, 0.2
      %v694 = vmul.f32 %v626, 0.2
      %v695 = vmul.f32 %v629, 0.2
      %v696 = vsel %vm632, %v506, %v664
      %v697 = vsel %vm633, %v509, %v665
      %v698 = vsel %vm634, %v514, %v666
      %v699 = vsel %vm635, %v517, %v667
      %v700 = vsel %vm636, %v522, %v668
      %v701 = vsel %vm637, %v525, %v669
      %v702 = vsel %vm638, %v530, %v670
      %v703 = vsel %vm639, %v533, %v671
      %v704 = vsel %vm640, %v538, %v672
      %v705 = vsel %vm641, %v541, %v673
      %v706 = vsel %vm642, %v546, %v674
      %v707 = vsel %vm643, %v549, %v675
      %v708 = vsel %vm644, %v554, %v676
      %v709 = vsel %vm645, %v557, %v677
      %v710 = vsel %vm646, %v562, %v678
      %v711 = vsel %vm647, %v565, %v679
      %v712 = vsel %vm648, %v570, %v680
      %v713 = vsel %vm649, %v573, %v681
      %v714 = vsel %vm650, %v578, %v682
      %v715 = vsel %vm651, %v581, %v683
      %v716 = vsel %vm652, %v586, %v684
      %v717 = vsel %vm653, %v589, %v685
      %v718 = vsel %vm654, %v594, %v686
      %v719 = vsel %vm655, %v597, %v687
      %v720 = vsel %vm656, %v602, %v688
      %v721 = vsel %vm657, %v605, %v689
      %v722 = vsel %vm658, %v610, %v690
      %v723 = vsel %vm659, %v613, %v691
      %v724 = vsel %vm660, %v618, %v692
      %v725 = vsel %vm661, %v621, %v693
      %v726 = vsel %vm662, %v626, %v694
      %v727 = vsel %vm663, %v629, %v695
      %v728 = vpack.c.bf16 %v697, %v696
      %v729 = vpack.c.bf16 %v699, %v698
      %v730 = vpack.c.bf16 %v701, %v700
      %v731 = vpack.c.bf16 %v703, %v702
      %v732 = vpack.c.bf16 %v705, %v704
      %v733 = vpack.c.bf16 %v707, %v706
      %v734 = vpack.c.bf16 %v709, %v708
      %v735 = vpack.c.bf16 %v711, %v710
      %v736 = vpack.c.bf16 %v713, %v712
      %v737 = vpack.c.bf16 %v715, %v714
      %v738 = vpack.c.bf16 %v717, %v716
      %v739 = vpack.c.bf16 %v719, %v718
      %v740 = vpack.c.bf16 %v721, %v720
      %v741 = vpack.c.bf16 %v723, %v722
      %v742 = vpack.c.bf16 %v725, %v724
      %v743 = vpack.c.bf16 %v727, %v726
      %v760 = vunpack.c.l.b16 %v728
      %v761 = vunpack.c.h.b16 %v728
      %v762 = vunpack.c.l.b16 %v729
      %v763 = vunpack.c.h.b16 %v729
      %v764 = vunpack.c.l.b16 %v730
      %v765 = vunpack.c.h.b16 %v730
      %v766 = vunpack.c.l.b16 %v731
      %v767 = vunpack.c.h.b16 %v731
      %v768 = vunpack.c.l.b16 %v732
      %v769 = vunpack.c.h.b16 %v732
      %v770 = vunpack.c.l.b16 %v733
      %v771 = vunpack.c.h.b16 %v733
      %v772 = vunpack.c.l.b16 %v734
      %v773 = vunpack.c.h.b16 %v734
      %v774 = vunpack.c.l.b16 %v735
      %v775 = vunpack.c.h.b16 %v735
      %v776 = vunpack.c.l.b16 %v736
      %v777 = vunpack.c.h.b16 %v736
      %v778 = vunpack.c.l.b16 %v737
      %v779 = vunpack.c.h.b16 %v737
      %v780 = vunpack.c.l.b16 %v738
      %v781 = vunpack.c.h.b16 %v738
      %v782 = vunpack.c.l.b16 %v739
      %v783 = vunpack.c.h.b16 %v739
      %v784 = vunpack.c.l.b16 %v740
      %v785 = vunpack.c.h.b16 %v740
      %v786 = vunpack.c.l.b16 %v741
      %v787 = vunpack.c.h.b16 %v741
      %v788 = vunpack.c.l.b16 %v742
      %v789 = vunpack.c.h.b16 %v742
      %v790 = vunpack.c.l.b16 %v743
      %v791 = vunpack.c.h.b16 %v743
      %v792 = vpack.c.b16 %v760, %v760
      %v793 = vpack.c.b16 %v761, %v761
      %v794 = vpack.c.b16 %v762, %v762
      %v795 = vpack.c.b16 %v763, %v763
      %v796 = vpack.c.b16 %v764, %v764
      %v797 = vpack.c.b16 %v765, %v765
      %v798 = vpack.c.b16 %v766, %v766
      %v799 = vpack.c.b16 %v767, %v767
      %v800 = vpack.c.b16 %v768, %v768
      %v801 = vpack.c.b16 %v769, %v769
      %v802 = vpack.c.b16 %v770, %v770
      %v803 = vpack.c.b16 %v771, %v771
      %v804 = vpack.c.b16 %v772, %v772
      %v805 = vpack.c.b16 %v773, %v773
      %v806 = vpack.c.b16 %v774, %v774
      %v807 = vpack.c.b16 %v775, %v775
      %v808 = vpack.c.b16 %v776, %v776
      %v809 = vpack.c.b16 %v777, %v777
      %v810 = vpack.c.b16 %v778, %v778
      %v811 = vpack.c.b16 %v779, %v779
      %v812 = vpack.c.b16 %v780, %v780
      %v813 = vpack.c.b16 %v781, %v781
      %v814 = vpack.c.b16 %v782, %v782
      %v815 = vpack.c.b16 %v783, %v783
      %v816 = vpack.c.b16 %v784, %v784
      %v817 = vpack.c.b16 %v785, %v785
      %v818 = vpack.c.b16 %v786, %v786
      %v819 = vpack.c.b16 %v787, %v787
      %v820 = vpack.c.b16 %v788, %v788
      %v821 = vpack.c.b16 %v789, %v789
      %v822 = vpack.c.b16 %v790, %v790
      %v823 = vpack.c.b16 %v791, %v791
      %vm856 = vcmask 519168
      %857 = vst.msk [vmem:[%s148] sm:$0xf] %vm856, %v792
      %858 = vst.msk [vmem:[%s148 + $0x4] sm:$0xf] %vm856, %v793
      %859 = vst.msk [vmem:[%s148 + $0x8] sm:$0xf] %vm856, %v794
      %860 = vst.msk [vmem:[%s148 + $0xc] sm:$0xf] %vm856, %v795
      %861 = vst.msk [vmem:[%s148 + $0x10] sm:$0xf] %vm856, %v796
      %862 = vst.msk [vmem:[%s148 + $0x14] sm:$0xf] %vm856, %v797
      %863 = vst.msk [vmem:[%s148 + $0x18] sm:$0xf] %vm856, %v798
      %864 = vst.msk [vmem:[%s148 + $0x1c] sm:$0xf] %vm856, %v799
      %865 = vst.msk [vmem:[%s148 + $0x20] sm:$0xf] %vm856, %v800
      %866 = vst.msk [vmem:[%s148 + $0x24] sm:$0xf] %vm856, %v801
      %867 = vst.msk [vmem:[%s148 + $0x28] sm:$0xf] %vm856, %v802
      %868 = vst.msk [vmem:[%s148 + $0x2c] sm:$0xf] %vm856, %v803
      %869 = vst.msk [vmem:[%s148 + $0x30] sm:$0xf] %vm856, %v804
      %870 = vst.msk [vmem:[%s148 + $0x34] sm:$0xf] %vm856, %v805
      %871 = vst.msk [vmem:[%s148 + $0x38] sm:$0xf] %vm856, %v806
      %872 = vst.msk [vmem:[%s148 + $0x3c] sm:$0xf] %vm856, %v807
      %873 = vst.msk [vmem:[%s148 + $0x40] sm:$0xf] %vm856, %v808
      %874 = vst.msk [vmem:[%s148 + $0x44] sm:$0xf] %vm856, %v809
      %875 = vst.msk [vmem:[%s148 + $0x48] sm:$0xf] %vm856, %v810
      %876 = vst.msk [vmem:[%s148 + $0x4c] sm:$0xf] %vm856, %v811
      %877 = vst.msk [vmem:[%s148 + $0x50] sm:$0xf] %vm856, %v812
      %878 = vst.msk [vmem:[%s148 + $0x54] sm:$0xf] %vm856, %v813
      %879 = vst.msk [vmem:[%s148 + $0x58] sm:$0xf] %vm856, %v814
      %880 = vst.msk [vmem:[%s148 + $0x5c] sm:$0xf] %vm856, %v815
      %881 = vst.msk [vmem:[%s148 + $0x60] sm:$0xf] %vm856, %v816
      %882 = vst.msk [vmem:[%s148 + $0x64] sm:$0xf] %vm856, %v817
      %883 = vst.msk [vmem:[%s148 + $0x68] sm:$0xf] %vm856, %v818
      %884 = vst.msk [vmem:[%s148 + $0x6c] sm:$0xf] %vm856, %v819
      %885 = vst.msk [vmem:[%s148 + $0x70] sm:$0xf] %vm856, %v820
      %886 = vst.msk [vmem:[%s148 + $0x74] sm:$0xf] %vm856, %v821
      %887 = vst.msk [vmem:[%s148 + $0x78] sm:$0xf] %vm856, %v822
      %888 = vst.msk [vmem:[%s148 + $0x7c] sm:$0xf] %vm856, %v823
      %s889 = smul.u32 32, %s13
      %p890 = scmp.lt.s32.totalorder %s889, 63
      %s891 = scalar_select %p890, %s889, 63
      %s892 = smul.addr %s891, 4
      %s893 = scalar_lea.vmem %s2, %s892
      // Predicated region
      $region29: #{discriminator_forward.3} parent=27 // pred_check
        %p894 = pneg %p78
      $region30: #{discriminator_forward.3} parent=27 // pred_check_branch
        %896 = sbr.rel (%p894) target = $region32
      $region31: #{discriminator_forward.3} parent=27 // pred_region
        %s897 = smul.u32 32, %s13
      $region32: #{discriminator_forward.3} parent=27 // pred_fallthru
        _
    $region28: #{discriminator_forward.3} parent=5 // pred_fallthru
      _
    %p898 = scmp.le.s32.totalorder 2, %s8
    // Predicated region
    $region33: #{discriminator_forward.3} parent=5 // pred_check
      %p899 = pneg %p898
    $region34: #{discriminator_forward.3} parent=5 // pred_check_branch
      %901 = sbr.rel (%p899) target = $region36
    $region35: #{discriminator_forward.3} parent=5 // pred_region
      %s902 = ssub.s32 %s8, 2
      // Predicated region
      $region37: #{discriminator_forward.3} parent=35 // pred_check
        %p903 = pneg %p84
      $region38: #{discriminator_forward.3} parent=35 // pred_check_branch
        %905 = sbr.rel (%p903) target = $region40
      $region39: #{discriminator_forward.3} parent=35 // pred_region
        %s906 = smul.u32 32, %s14
        %p907 = scmp.lt.s32.totalorder %s906, 63
        %s908 = scalar_select %p907, %s906, 63
        %s909 = smul.addr %s908, 4
        %s910 = scalar_lea.vmem %s2, %s909
      $region40: #{discriminator_forward.3} parent=35 // pred_fallthru
        _
    $region36: #{discriminator_forward.3} parent=5 // pred_fallthru
      _
  $region6: #{discriminator_forward.3} parent=0 // loop_footer
    %s12 = sadd.s32 1, %s8
  $region7: #{discriminator_forward.3} parent=0 // loop_footer_branch
    %7 = sbr.rel target = $region3
  $region8: #{discriminator_forward.3} parent=0 // loop_exit
    _

// kernel: discriminator_forward.4
$region0: #{discriminator_forward.4}
  #allocation0 [shape = 'u32[]', space=smem, size = 0x4, offset = 0x4, fixed_abs, tag = 'smem constant byte address 0x4 - core index']
  #allocation1 [shape = 'u32[144,128]{1,0:T(1,128)}', space=vmem, size = 0x12000, scoped, tag = 'internal scratch']
  %s0 = inlined_call_operand.vmem [shape: bf16[98,1024], index: 0, kind: input, shape index: {}]
  %s1 = inlined_call_operand.vmem [shape: bf16[1024,128], index: 1, kind: input, shape index: {}]
  %s2 = inlined_call_operand.vmem [shape: f32[1,128], index: 2, kind: input, shape index: {}]
  %s3 = inlined_call_operand.vmem [shape: f32[1,128], index: 3, kind: input, shape index: {}]
  %s4 = inlined_call_operand.vmem [shape: bf16[98,128], index: 4, kind: output, shape index: {}]
  %s5 = sld [smem:[#allocation0]]
  $region26: #{discriminator_forward.4} parent=0
    _
  %s7 = ssub.s32 1, %s5
  %s8 = scalar_select 0, %s7, %s5
  // Predicated region
  $region2: #{discriminator_forward.4} parent=0 // pred_check
    _
  $region3: #{discriminator_forward.4} parent=0 // pred_check_branch
    %10 = sbr.rel (0) target = $region5
  $region4: #{discriminator_forward.4} parent=0 // pred_region
    _
  $region5: #{discriminator_forward.4} parent=0 // pred_fallthru
    _
  // Predicated region
  $region6: #{discriminator_forward.4} parent=0 // pred_check
    _
  $region7: #{discriminator_forward.4} parent=0 // pred_check_branch
    %12 = sbr.rel (0) target = $region9
  $region8: #{discriminator_forward.4} parent=0 // pred_region
    _
  $region9: #{discriminator_forward.4} parent=0 // pred_fallthru
    _
  // Predicated region
  $region10: #{discriminator_forward.4} parent=0 // pred_check
    _
  $region11: #{discriminator_forward.4} parent=0 // pred_check_branch
    %14 = sbr.rel (0) target = $region13
  $region12: #{discriminator_forward.4} parent=0 // pred_region
    _
  $region13: #{discriminator_forward.4} parent=0 // pred_fallthru
    _
  // Predicated region
  $region14: #{discriminator_forward.4} parent=0 // pred_check
    _
  $region15: #{discriminator_forward.4} parent=0 // pred_check_branch
    %16 = sbr.rel (0) target = $region17
  $region16: #{discriminator_forward.4} parent=0 // pred_region
    _
  $region17: #{discriminator_forward.4} parent=0 // pred_fallthru
    _
  %v18 = vld [vmem:[%s0] sm:$0xff]
  %v19 = vld [vmem:[%s0 + $0x8] sm:$0xff]
  %v20 = vld [vmem:[%s0 + $0x10] sm:$0xff]
  %v21 = vld [vmem:[%s0 + $0x18] sm:$0xff]
  %v22 = vld [vmem:[%s0 + $0x20] sm:$0xff]
  %v23 = vld [vmem:[%s0 + $0x28] sm:$0xff]
  %v24 = vld [vmem:[%s0 + $0x30] sm:$0xff]
  %v25 = vld [vmem:[%s0 + $0x38] sm:$0xff]
  %v26 = vld [vmem:[%s0 + $0x40] sm:$0xff]
  %v27 = vld [vmem:[%s0 + $0x48] sm:$0xff]
  %v28 = vld [vmem:[%s0 + $0x50] sm:$0xff]
  %v29 = vld [vmem:[%s0 + $0x58] sm:$0xff]
  %v30 = vld [vmem:[%s0 + $0x60] sm:$0xff]
  %v31 = vld [vmem:[%s0 + $0x68] sm:$0xff]
  %v32 = vld [vmem:[%s0 + $0x70] sm:$0xff]
  %v33 = vld [vmem:[%s0 + $0x78] sm:$0xff]
  %v34 = vld [vmem:[%s0 + $0x80] sm:$0xff]
  %v35 = vld [vmem:[%s0 + $0x88] sm:$0xff]
  %v36 = vld [vmem:[%s0 + $0x90] sm:$0xff]
  %v37 = vld [vmem:[%s0 + $0x98] sm:$0xff]
  %v38 = vld [vmem:[%s0 + $0xa0] sm:$0xff]
  %v39 = vld [vmem:[%s0 + $0xa8] sm:$0xff]
  %v40 = vld [vmem:[%s0 + $0xb0] sm:$0xff]
  %v41 = vld [vmem:[%s0 + $0xb8] sm:$0xff]
  %v42 = vld [vmem:[%s0 + $0xc0] sm:$0xff]
  %v43 = vld [vmem:[%s0 + $0xc8] sm:$0xff]
  %v44 = vld [vmem:[%s0 + $0xd0] sm:$0xff]
  %v45 = vld [vmem:[%s0 + $0xd8] sm:$0xff]
  %v46 = vld [vmem:[%s0 + $0xe0] sm:$0xff]
  %v47 = vld [vmem:[%s0 + $0xe8] sm:$0xff]
  %v48 = vld [vmem:[%s0 + $0xf0] sm:$0xff]
  %v49 = vld [vmem:[%s0 + $0xf8] sm:$0xff]
  %v50 = vld [vmem:[%s0 + $0x100] sm:$0xff]
  %v51 = vld [vmem:[%s0 + $0x108] sm:$0xff]
  %v52 = vld [vmem:[%s0 + $0x110] sm:$0xff]
  %v53 = vld [vmem:[%s0 + $0x118] sm:$0xff]
  %v54 = vld [vmem:[%s0 + $0x120] sm:$0xff]
  %v55 = vld [vmem:[%s0 + $0x128] sm:$0xff]
  %v56 = vld [vmem:[%s0 + $0x130] sm:$0xff]
  %v57 = vld [vmem:[%s0 + $0x138] sm:$0xff]
  %v58 = vld [vmem:[%s0 + $0x140] sm:$0xff]
  %v59 = vld [vmem:[%s0 + $0x148] sm:$0xff]
  %v60 = vld [vmem:[%s0 + $0x150] sm:$0xff]
  %v61 = vld [vmem:[%s0 + $0x158] sm:$0xff]
  %v62 = vld [vmem:[%s0 + $0x160] sm:$0xff]
  %v63 = vld [vmem:[%s0 + $0x168] sm:$0xff]
  %v64 = vld [vmem:[%s0 + $0x170] sm:$0xff]
  %v65 = vld [vmem:[%s0 + $0x178] sm:$0xff]
  %v66 = vld [vmem:[%s0 + $0x180] sm:$0x11]
  %v67 = vld [vmem:[%s0 + $0x188] sm:$0x11]
  %v68 = vld [vmem:[%s0 + $0x190] sm:$0x11]
  %v69 = vld [vmem:[%s0 + $0x198] sm:$0x11]
  %v70 = vld [vmem:[%s1] sm:$0xf]
  %v71 = vld [vmem:[%s1 + $0x4] sm:$0xf]
  %v72 = vld [vmem:[%s1 + $0x8] sm:$0xf]
  %v73 = vld [vmem:[%s1 + $0xc] sm:$0xf]
  %v74 = vld [vmem:[%s1 + $0x10] sm:$0xf]
  %v75 = vld [vmem:[%s1 + $0x14] sm:$0xf]
  %v76 = vld [vmem:[%s1 + $0x18] sm:$0xf]
  %v77 = vld [vmem:[%s1 + $0x1c] sm:$0xf]
  %v78 = vld [vmem:[%s1 + $0x20] sm:$0xf]
  %v79 = vld [vmem:[%s1 + $0x24] sm:$0xf]
  %v80 = vld [vmem:[%s1 + $0x28] sm:$0xf]
  %v81 = vld [vmem:[%s1 + $0x2c] sm:$0xf]
  %v82 = vld [vmem:[%s1 + $0x30] sm:$0xf]
  %v83 = vld [vmem:[%s1 + $0x34] sm:$0xf]
  %v84 = vld [vmem:[%s1 + $0x38] sm:$0xf]
  %v85 = vld [vmem:[%s1 + $0x3c] sm:$0xf]
  %v86 = vld [vmem:[%s1 + $0x40] sm:$0xf]
  %v87 = vld [vmem:[%s1 + $0x44] sm:$0xf]
  %v88 = vld [vmem:[%s1 + $0x48] sm:$0xf]
  %v89 = vld [vmem:[%s1 + $0x4c] sm:$0xf]
  %v90 = vld [vmem:[%s1 + $0x50] sm:$0xf]
  %v91 = vld [vmem:[%s1 + $0x54] sm:$0xf]
  %v92 = vld [vmem:[%s1 + $0x58] sm:$0xf]
  %v93 = vld [vmem:[%s1 + $0x5c] sm:$0xf]
  %v94 = vld [vmem:[%s1 + $0x60] sm:$0xf]
  %v95 = vld [vmem:[%s1 + $0x64] sm:$0xf]
  %v96 = vld [vmem:[%s1 + $0x68] sm:$0xf]
  %v97 = vld [vmem:[%s1 + $0x6c] sm:$0xf]
  %v98 = vld [vmem:[%s1 + $0x70] sm:$0xf]
  %v99 = vld [vmem:[%s1 + $0x74] sm:$0xf]
  %v100 = vld [vmem:[%s1 + $0x78] sm:$0xf]
  %v101 = vld [vmem:[%s1 + $0x7c] sm:$0xf]
  %v102 = vld [vmem:[%s1 + $0x80] sm:$0xf]
  %v103 = vld [vmem:[%s1 + $0x84] sm:$0xf]
  %v104 = vld [vmem:[%s1 + $0x88] sm:$0xf]
  %v105 = vld [vmem:[%s1 + $0x8c] sm:$0xf]
  %v106 = vld [vmem:[%s1 + $0x90] sm:$0xf]
  %v107 = vld [vmem:[%s1 + $0x94] sm:$0xf]
  %v108 = vld [vmem:[%s1 + $0x98] sm:$0xf]
  %v109 = vld [vmem:[%s1 + $0x9c] sm:$0xf]
  %v110 = vld [vmem:[%s1 + $0xa0] sm:$0xf]
  %v111 = vld [vmem:[%s1 + $0xa4] sm:$0xf]
  %v112 = vld [vmem:[%s1 + $0xa8] sm:$0xf]
  %v113 = vld [vmem:[%s1 + $0xac] sm:$0xf]
  %v114 = vld [vmem:[%s1 + $0xb0] sm:$0xf]
  %v115 = vld [vmem:[%s1 + $0xb4] sm:$0xf]
  %v116 = vld [vmem:[%s1 + $0xb8] sm:$0xf]
  %v117 = vld [vmem:[%s1 + $0xbc] sm:$0xf]
  %v118 = vld [vmem:[%s1 + $0xc0] sm:$0xf]
  %v119 = vld [vmem:[%s1 + $0xc4] sm:$0xf]
  %v120 = vld [vmem:[%s1 + $0xc8] sm:$0xf]
  %v121 = vld [vmem:[%s1 + $0xcc] sm:$0xf]
  %v122 = vld [vmem:[%s1 + $0xd0] sm:$0xf]
  %v123 = vld [vmem:[%s1 + $0xd4] sm:$0xf]
  %v124 = vld [vmem:[%s1 + $0xd8] sm:$0xf]
  %v125 = vld [vmem:[%s1 + $0xdc] sm:$0xf]
  %v126 = vld [vmem:[%s1 + $0xe0] sm:$0xf]
  %v127 = vld [vmem:[%s1 + $0xe4] sm:$0xf]
  %v128 = vld [vmem:[%s1 + $0xe8] sm:$0xf]
  %v129 = vld [vmem:[%s1 + $0xec] sm:$0xf]
  %v130 = vld [vmem:[%s1 + $0xf0] sm:$0xf]
  %v131 = vld [vmem:[%s1 + $0xf4] sm:$0xf]
  %v132 = vld [vmem:[%s1 + $0xf8] sm:$0xf]
  %v133 = vld [vmem:[%s1 + $0xfc] sm:$0xf]
  %v134 = vld [vmem:[%s1 + $0x100] sm:$0xf]
  %v135 = vld [vmem:[%s1 + $0x104] sm:$0xf]
  %v136 = vld [vmem:[%s1 + $0x108] sm:$0xf]
  %v137 = vld [vmem:[%s1 + $0x10c] sm:$0xf]
  %v138 = vld [vmem:[%s1 + $0x110] sm:$0xf]
  %v139 = vld [vmem:[%s1 + $0x114] sm:$0xf]
  %v140 = vld [vmem:[%s1 + $0x118] sm:$0xf]
  %v141 = vld [vmem:[%s1 + $0x11c] sm:$0xf]
  %v142 = vld [vmem:[%s1 + $0x120] sm:$0xf]
  %v143 = vld [vmem:[%s1 + $0x124] sm:$0xf]
  %v144 = vld [vmem:[%s1 + $0x128] sm:$0xf]
  %v145 = vld [vmem:[%s1 + $0x12c] sm:$0xf]
  %v146 = vld [vmem:[%s1 + $0x130] sm:$0xf]
  %v147 = vld [vmem:[%s1 + $0x134] sm:$0xf]
  %v148 = vld [vmem:[%s1 + $0x138] sm:$0xf]
  %v149 = vld [vmem:[%s1 + $0x13c] sm:$0xf]
  %v150 = vld [vmem:[%s1 + $0x140] sm:$0xf]
  %v151 = vld [vmem:[%s1 + $0x144] sm:$0xf]
  %v152 = vld [vmem:[%s1 + $0x148] sm:$0xf]
  %v153 = vld [vmem:[%s1 + $0x14c] sm:$0xf]
  %v154 = vld [vmem:[%s1 + $0x150] sm:$0xf]
  %v155 = vld [vmem:[%s1 + $0x154] sm:$0xf]
  %v156 = vld [vmem:[%s1 + $0x158] sm:$0xf]
  %v157 = vld [vmem:[%s1 + $0x15c] sm:$0xf]
  %v158 = vld [vmem:[%s1 + $0x160] sm:$0xf]
  %v159 = vld [vmem:[%s1 + $0x164] sm:$0xf]
  %v160 = vld [vmem:[%s1 + $0x168] sm:$0xf]
  %v161 = vld [vmem:[%s1 + $0x16c] sm:$0xf]
  %v162 = vld [vmem:[%s1 + $0x170] sm:$0xf]
  %v163 = vld [vmem:[%s1 + $0x174] sm:$0xf]
  %v164 = vld [vmem:[%s1 + $0x178] sm:$0xf]
  %v165 = vld [vmem:[%s1 + $0x17c] sm:$0xf]
  %v166 = vld [vmem:[%s1 + $0x180] sm:$0xf]
  %v167 = vld [vmem:[%s1 + $0x184] sm:$0xf]
  %v168 = vld [vmem:[%s1 + $0x188] sm:$0xf]
  %v169 = vld [vmem:[%s1 + $0x18c] sm:$0xf]
  %v170 = vld [vmem:[%s1 + $0x190] sm:$0xf]
  %v171 = vld [vmem:[%s1 + $0x194] sm:$0xf]
  %v172 = vld [vmem:[%s1 + $0x198] sm:$0xf]
  %v173 = vld [vmem:[%s1 + $0x19c] sm:$0xf]
  %v174 = vld [vmem:[%s1 + $0x1a0] sm:$0xf]
  %v175 = vld [vmem:[%s1 + $0x1a4] sm:$0xf]
  %v176 = vld [vmem:[%s1 + $0x1a8] sm:$0xf]
  %v177 = vld [vmem:[%s1 + $0x1ac] sm:$0xf]
  %v178 = vld [vmem:[%s1 + $0x1b0] sm:$0xf]
  %v179 = vld [vmem:[%s1 + $0x1b4] sm:$0xf]
  %v180 = vld [vmem:[%s1 + $0x1b8] sm:$0xf]
  %v181 = vld [vmem:[%s1 + $0x1bc] sm:$0xf]
  %v182 = vld [vmem:[%s1 + $0x1c0] sm:$0xf]
  %v183 = vld [vmem:[%s1 + $0x1c4] sm:$0xf]
  %v184 = vld [vmem:[%s1 + $0x1c8] sm:$0xf]
  %v185 = vld [vmem:[%s1 + $0x1cc] sm:$0xf]
  %v186 = vld [vmem:[%s1 + $0x1d0] sm:$0xf]
  %v187 = vld [vmem:[%s1 + $0x1d4] sm:$0xf]
  %v188 = vld [vmem:[%s1 + $0x1d8] sm:$0xf]
  %v189 = vld [vmem:[%s1 + $0x1dc] sm:$0xf]
  %v190 = vld [vmem:[%s1 + $0x1e0] sm:$0xf]
  %v191 = vld [vmem:[%s1 + $0x1e4] sm:$0xf]
  %v192 = vld [vmem:[%s1 + $0x1e8] sm:$0xf]
  %v193 = vld [vmem:[%s1 + $0x1ec] sm:$0xf]
  %v194 = vld [vmem:[%s1 + $0x1f0] sm:$0xf]
  %v195 = vld [vmem:[%s1 + $0x1f4] sm:$0xf]
  %v196 = vld [vmem:[%s1 + $0x1f8] sm:$0xf]
  %v197 = vld [vmem:[%s1 + $0x1fc] sm:$0xf]
  %v250 = vunpack.c.l.b16 %v18
  %v251 = vunpack.c.h.b16 %v18
  %v252 = vunpack.c.l.b16 %v19
  %v253 = vunpack.c.h.b16 %v19
  %v254 = vunpack.c.l.b16 %v20
  %v255 = vunpack.c.h.b16 %v20
  %v256 = vunpack.c.l.b16 %v21
  %v257 = vunpack.c.h.b16 %v21
  %v258 = vunpack.c.l.b16 %v22
  %v259 = vunpack.c.h.b16 %v22
  %v260 = vunpack.c.l.b16 %v23
  %v261 = vunpack.c.h.b16 %v23
  %v262 = vunpack.c.l.b16 %v24
  %v263 = vunpack.c.h.b16 %v24
  %v264 = vunpack.c.l.b16 %v25
  %v265 = vunpack.c.h.b16 %v25
  %v266 = vunpack.c.l.b16 %v26
  %v267 = vunpack.c.h.b16 %v26
  %v268 = vunpack.c.l.b16 %v27
  %v269 = vunpack.c.h.b16 %v27
  %v270 = vunpack.c.l.b16 %v28
  %v271 = vunpack.c.h.b16 %v28
  %v272 = vunpack.c.l.b16 %v29
  %v273 = vunpack.c.h.b16 %v29
  %v274 = vunpack.c.l.b16 %v30
  %v275 = vunpack.c.h.b16 %v30
  %v276 = vunpack.c.l.b16 %v31
  %v277 = vunpack.c.h.b16 %v31
  %v278 = vunpack.c.l.b16 %v32
  %v279 = vunpack.c.h.b16 %v32
  %v280 = vunpack.c.l.b16 %v33
  %v281 = vunpack.c.h.b16 %v33
  %v282 = vunpack.c.l.b16 %v34
  %v283 = vunpack.c.h.b16 %v34
  %v284 = vunpack.c.l.b16 %v35
  %v285 = vunpack.c.h.b16 %v35
  %v286 = vunpack.c.l.b16 %v36
  %v287 = vunpack.c.h.b16 %v36
  %v288 = vunpack.c.l.b16 %v37
  %v289 = vunpack.c.h.b16 %v37
  %v290 = vunpack.c.l.b16 %v38
  %v291 = vunpack.c.h.b16 %v38
  %v292 = vunpack.c.l.b16 %v39
  %v293 = vunpack.c.h.b16 %v39
  %v294 = vunpack.c.l.b16 %v40
  %v295 = vunpack.c.h.b16 %v40
  %v296 = vunpack.c.l.b16 %v41
  %v297 = vunpack.c.h.b16 %v41
  %v298 = vunpack.c.l.b16 %v42
  %v299 = vunpack.c.h.b16 %v42
  %v300 = vunpack.c.l.b16 %v43
  %v301 = vunpack.c.h.b16 %v43
  %v302 = vunpack.c.l.b16 %v44
  %v303 = vunpack.c.h.b16 %v44
  %v304 = vunpack.c.l.b16 %v45
  %v305 = vunpack.c.h.b16 %v45
  %v306 = vunpack.c.l.b16 %v46
  %v307 = vunpack.c.h.b16 %v46
  %v308 = vunpack.c.l.b16 %v47
  %v309 = vunpack.c.h.b16 %v47
  %v310 = vunpack.c.l.b16 %v48
  %v311 = vunpack.c.h.b16 %v48
  %v312 = vunpack.c.l.b16 %v49
  %v313 = vunpack.c.h.b16 %v49
  %v314 = vunpack.c.l.b16 %v50
  %v315 = vunpack.c.h.b16 %v50
  %v316 = vunpack.c.l.b16 %v51
  %v317 = vunpack.c.h.b16 %v51
  %v318 = vunpack.c.l.b16 %v52
  %v319 = vunpack.c.h.b16 %v52
  %v320 = vunpack.c.l.b16 %v53
  %v321 = vunpack.c.h.b16 %v53
  %v322 = vunpack.c.l.b16 %v54
  %v323 = vunpack.c.h.b16 %v54
  %v324 = vunpack.c.l.b16 %v55
  %v325 = vunpack.c.h.b16 %v55
  %v326 = vunpack.c.l.b16 %v56
  %v327 = vunpack.c.h.b16 %v56
  %v328 = vunpack.c.l.b16 %v57
  %v329 = vunpack.c.h.b16 %v57
  %v330 = vunpack.c.l.b16 %v58
  %v331 = vunpack.c.h.b16 %v58
  %v332 = vunpack.c.l.b16 %v59
  %v333 = vunpack.c.h.b16 %v59
  %v334 = vunpack.c.l.b16 %v60
  %v335 = vunpack.c.h.b16 %v60
  %v336 = vunpack.c.l.b16 %v61
  %v337 = vunpack.c.h.b16 %v61
  %v338 = vunpack.c.l.b16 %v62
  %v339 = vunpack.c.h.b16 %v62
  %v340 = vunpack.c.l.b16 %v63
  %v341 = vunpack.c.h.b16 %v63
  %v342 = vunpack.c.l.b16 %v64
  %v343 = vunpack.c.h.b16 %v64
  %v344 = vunpack.c.l.b16 %v65
  %v345 = vunpack.c.h.b16 %v65
  %v346 = vunpack.c.l.b16 %v66
  %v347 = vunpack.c.h.b16 %v66
  %v348 = vunpack.c.l.b16 %v67
  %v349 = vunpack.c.h.b16 %v67
  %v350 = vunpack.c.l.b16 %v68
  %v351 = vunpack.c.h.b16 %v68
  %v352 = vunpack.c.l.b16 %v69
  %v353 = vunpack.c.h.b16 %v69
  %v354 = vpack.c.b16 %v258, %v250
  %v355 = vpack.c.b16 %v259, %v251
  %v356 = vpack.c.b16 %v260, %v252
  %v357 = vpack.c.b16 %v261, %v253
  %v358 = vpack.c.b16 %v262, %v254
  %v359 = vpack.c.b16 %v263, %v255
  %v360 = vpack.c.b16 %v264, %v256
  %v361 = vpack.c.b16 %v265, %v257
  %v362 = vpack.c.b16 %v274, %v266
  %v363 = vpack.c.b16 %v275, %v267
  %v364 = vpack.c.b16 %v276, %v268
  %v365 = vpack.c.b16 %v277, %v269
  %v366 = vpack.c.b16 %v278, %v270
  %v367 = vpack.c.b16 %v279, %v271
  %v368 = vpack.c.b16 %v280, %v272
  %v369 = vpack.c.b16 %v281, %v273
  %v370 = vpack.c.b16 %v290, %v282
  %v371 = vpack.c.b16 %v291, %v283
  %v372 = vpack.c.b16 %v292, %v284
  %v373 = vpack.c.b16 %v293, %v285
  %v374 = vpack.c.b16 %v294, %v286
  %v375 = vpack.c.b16 %v295, %v287
  %v376 = vpack.c.b16 %v296, %v288
  %v377 = vpack.c.b16 %v297, %v289
  %v378 = vpack.c.b16 %v306, %v298
  %v379 = vpack.c.b16 %v307, %v299
  %v380 = vpack.c.b16 %v308, %v300
  %v381 = vpack.c.b16 %v309, %v301
  %v382 = vpack.c.b16 %v310, %v302
  %v383 = vpack.c.b16 %v311, %v303
  %v384 = vpack.c.b16 %v312, %v304
  %v385 = vpack.c.b16 %v313, %v305
  %v386 = vpack.c.b16 %v322, %v314
  %v387 = vpack.c.b16 %v323, %v315
  %v388 = vpack.c.b16 %v324, %v316
  %v389 = vpack.c.b16 %v325, %v317
  %v390 = vpack.c.b16 %v326, %v318
  %v391 = vpack.c.b16 %v327, %v319
  %v392 = vpack.c.b16 %v328, %v320
  %v393 = vpack.c.b16 %v329, %v321
  %v394 = vpack.c.b16 %v338, %v330
  %v395 = vpack.c.b16 %v339, %v331
  %v396 = vpack.c.b16 %v340, %v332
  %v397 = vpack.c.b16 %v341, %v333
  %v398 = vpack.c.b16 %v342, %v334
  %v399 = vpack.c.b16 %v343, %v335
  %v400 = vpack.c.b16 %v344, %v336
  %v401 = vpack.c.b16 %v345, %v337
  %v402 = vpack.c.b16 %v346, %v346
  %v403 = vpack.c.b16 %v347, %v347
  %v404 = vpack.c.b16 %v348, %v348
  %v405 = vpack.c.b16 %v349, %v349
  %v406 = vpack.c.b16 %v350, %v350
  %v407 = vpack.c.b16 %v351, %v351
  %v408 = vpack.c.b16 %v352, %v352
  %v409 = vpack.c.b16 %v353, %v353
  %v594 = vunpack.c.l.b16 %v70
  %v595 = vunpack.c.l.b16 %v71
  %v596 = vunpack.c.l.b16 %v72
  %v597 = vunpack.c.l.b16 %v73
  %v598 = vunpack.c.l.b16 %v74
  %v599 = vunpack.c.l.b16 %v75
  %v600 = vunpack.c.l.b16 %v76
  %v601 = vunpack.c.l.b16 %v77
  %v602 = vunpack.c.l.b16 %v78
  %v603 = vunpack.c.l.b16 %v79
  %v604 = vunpack.c.l.b16 %v80
  %v605 = vunpack.c.l.b16 %v81
  %v606 = vunpack.c.l.b16 %v82
  %v607 = vunpack.c.l.b16 %v83
  %v608 = vunpack.c.l.b16 %v84
  %v609 = vunpack.c.l.b16 %v85
  %v610 = vunpack.c.l.b16 %v86
  %v611 = vunpack.c.l.b16 %v87
  %v612 = vunpack.c.l.b16 %v88
  %v613 = vunpack.c.l.b16 %v89
  %v614 = vunpack.c.l.b16 %v90
  %v615 = vunpack.c.l.b16 %v91
  %v616 = vunpack.c.l.b16 %v92
  %v617 = vunpack.c.l.b16 %v93
  %v618 = vunpack.c.l.b16 %v94
  %v619 = vunpack.c.l.b16 %v95
  %v620 = vunpack.c.l.b16 %v96
  %v621 = vunpack.c.l.b16 %v97
  %v622 = vunpack.c.l.b16 %v98
  %v623 = vunpack.c.l.b16 %v99
  %v624 = vunpack.c.l.b16 %v100
  %v625 = vunpack.c.l.b16 %v101
  %v626 = vunpack.c.l.b16 %v102
  %v627 = vunpack.c.l.b16 %v103
  %v628 = vunpack.c.l.b16 %v104
  %v629 = vunpack.c.l.b16 %v105
  %v630 = vunpack.c.l.b16 %v106
  %v631 = vunpack.c.l.b16 %v107
  %v632 = vunpack.c.l.b16 %v108
  %v633 = vunpack.c.l.b16 %v109
  %v634 = vunpack.c.l.b16 %v110
  %v635 = vunpack.c.l.b16 %v111
  %v636 = vunpack.c.l.b16 %v112
  %v637 = vunpack.c.l.b16 %v113
  %v638 = vunpack.c.l.b16 %v114
  %v639 = vunpack.c.l.b16 %v115
  %v640 = vunpack.c.l.b16 %v116
  %v641 = vunpack.c.l.b16 %v117
  %v642 = vunpack.c.l.b16 %v118
  %v643 = vunpack.c.l.b16 %v119
  %v644 = vunpack.c.l.b16 %v120
  %v645 = vunpack.c.l.b16 %v121
  %v646 = vunpack.c.l.b16 %v122
  %v647 = vunpack.c.l.b16 %v123
  %v648 = vunpack.c.l.b16 %v124
  %v649 = vunpack.c.l.b16 %v125
  %v650 = vunpack.c.l.b16 %v126
  %v651 = vunpack.c.l.b16 %v127
  %v652 = vunpack.c.l.b16 %v128
  %v653 = vunpack.c.l.b16 %v129
  %v654 = vunpack.c.l.b16 %v130
  %v655 = vunpack.c.l.b16 %v131
  %v656 = vunpack.c.l.b16 %v132
  %v657 = vunpack.c.l.b16 %v133
  %v658 = vunpack.c.l.b16 %v134
  %v659 = vunpack.c.l.b16 %v135
  %v660 = vunpack.c.l.b16 %v136
  %v661 = vunpack.c.l.b16 %v137
  %v662 = vunpack.c.l.b16 %v138
  %v663 = vunpack.c.l.b16 %v139
  %v664 = vunpack.c.l.b16 %v140
  %v665 = vunpack.c.l.b16 %v141
  %v666 = vunpack.c.l.b16 %v142
  %v667 = vunpack.c.l.b16 %v143
  %v668 = vunpack.c.l.b16 %v144
  %v669 = vunpack.c.l.b16 %v145
  %v670 = vunpack.c.l.b16 %v146
  %v671 = vunpack.c.l.b16 %v147
  %v672 = vunpack.c.l.b16 %v148
  %v673 = vunpack.c.l.b16 %v149
  %v674 = vunpack.c.l.b16 %v150
  %v675 = vunpack.c.l.b16 %v151
  %v676 = vunpack.c.l.b16 %v152
  %v677 = vunpack.c.l.b16 %v153
  %v678 = vunpack.c.l.b16 %v154
  %v679 = vunpack.c.l.b16 %v155
  %v680 = vunpack.c.l.b16 %v156
  %v681 = vunpack.c.l.b16 %v157
  %v682 = vunpack.c.l.b16 %v158
  %v683 = vunpack.c.l.b16 %v159
  %v684 = vunpack.c.l.b16 %v160
  %v685 = vunpack.c.l.b16 %v161
  %v686 = vunpack.c.l.b16 %v162
  %v687 = vunpack.c.l.b16 %v163
  %v688 = vunpack.c.l.b16 %v164
  %v689 = vunpack.c.l.b16 %v165
  %v690 = vunpack.c.l.b16 %v166
  %v691 = vunpack.c.l.b16 %v167
  %v692 = vunpack.c.l.b16 %v168
  %v693 = vunpack.c.l.b16 %v169
  %v694 = vunpack.c.l.b16 %v170
  %v695 = vunpack.c.l.b16 %v171
  %v696 = vunpack.c.l.b16 %v172
  %v697 = vunpack.c.l.b16 %v173
  %v698 = vunpack.c.l.b16 %v174
  %v699 = vunpack.c.l.b16 %v175
  %v700 = vunpack.c.l.b16 %v176
  %v701 = vunpack.c.l.b16 %v177
  %v702 = vunpack.c.l.b16 %v178
  %v703 = vunpack.c.l.b16 %v179
  %v704 = vunpack.c.l.b16 %v180
  %v705 = vunpack.c.l.b16 %v181
  %v706 = vunpack.c.l.b16 %v182
  %v707 = vunpack.c.l.b16 %v183
  %v708 = vunpack.c.l.b16 %v184
  %v709 = vunpack.c.l.b16 %v185
  %v710 = vunpack.c.l.b16 %v186
  %v711 = vunpack.c.l.b16 %v187
  %v712 = vunpack.c.l.b16 %v188
  %v713 = vunpack.c.l.b16 %v189
  %v714 = vunpack.c.l.b16 %v190
  %v715 = vunpack.c.l.b16 %v191
  %v716 = vunpack.c.l.b16 %v192
  %v717 = vunpack.c.l.b16 %v193
  %v718 = vunpack.c.l.b16 %v194
  %v719 = vunpack.c.l.b16 %v195
  %v720 = vunpack.c.l.b16 %v196
  %v721 = vunpack.c.l.b16 %v197
  %v722 = vpack.c.b16 %v595, %v594
  %v723 = vpack.c.b16 %v597, %v596
  %v724 = vpack.c.b16 %v599, %v598
  %v725 = vpack.c.b16 %v601, %v600
  %v726 = vpack.c.b16 %v603, %v602
  %v727 = vpack.c.b16 %v605, %v604
  %v728 = vpack.c.b16 %v607, %v606
  %v729 = vpack.c.b16 %v609, %v608
  %v730 = vpack.c.b16 %v611, %v610
  %v731 = vpack.c.b16 %v613, %v612
  %v732 = vpack.c.b16 %v615, %v614
  %v733 = vpack.c.b16 %v617, %v616
  %v734 = vpack.c.b16 %v619, %v618
  %v735 = vpack.c.b16 %v621, %v620
  %v736 = vpack.c.b16 %v623, %v622
  %v737 = vpack.c.b16 %v625, %v624
  %v738 = vpack.c.b16 %v627, %v626
  %v739 = vpack.c.b16 %v629, %v628
  %v740 = vpack.c.b16 %v631, %v630
  %v741 = vpack.c.b16 %v633, %v632
  %v742 = vpack.c.b16 %v635, %v634
  %v743 = vpack.c.b16 %v637, %v636
  %v744 = vpack.c.b16 %v639, %v638
  %v745 = vpack.c.b16 %v641, %v640
  %v746 = vpack.c.b16 %v643, %v642
  %v747 = vpack.c.b16 %v645, %v644
  %v748 = vpack.c.b16 %v647, %v646
  %v749 = vpack.c.b16 %v649, %v648
  %v750 = vpack.c.b16 %v651, %v650
  %v751 = vpack.c.b16 %v653, %v652
  %v752 = vpack.c.b16 %v655, %v654
  %v753 = vpack.c.b16 %v657, %v656
  %v754 = vpack.c.b16 %v659, %v658
  %v755 = vpack.c.b16 %v661, %v660
  %v756 = vpack.c.b16 %v663, %v662
  %v757 = vpack.c.b16 %v665, %v664
  %v758 = vpack.c.b16 %v667, %v666
  %v759 = vpack.c.b16 %v669, %v668
  %v760 = vpack.c.b16 %v671, %v670
  %v761 = vpack.c.b16 %v673, %v672
  %v762 = vpack.c.b16 %v675, %v674
  %v763 = vpack.c.b16 %v677, %v676
  %v764 = vpack.c.b16 %v679, %v678
  %v765 = vpack.c.b16 %v681, %v680
  %v766 = vpack.c.b16 %v683, %v682
  %v767 = vpack.c.b16 %v685, %v684
  %v768 = vpack.c.b16 %v687, %v686
  %v769 = vpack.c.b16 %v689, %v688
  %v770 = vpack.c.b16 %v691, %v690
  %v771 = vpack.c.b16 %v693, %v692
  %v772 = vpack.c.b16 %v695, %v694
  %v773 = vpack.c.b16 %v697, %v696
  %v774 = vpack.c.b16 %v699, %v698
  %v775 = vpack.c.b16 %v701, %v700
  %v776 = vpack.c.b16 %v703, %v702
  %v777 = vpack.c.b16 %v705, %v704
  %v778 = vpack.c.b16 %v707, %v706
  %v779 = vpack.c.b16 %v709, %v708
  %v780 = vpack.c.b16 %v711, %v710
  %v781 = vpack.c.b16 %v713, %v712
  %v782 = vpack.c.b16 %v715, %v714
  %v783 = vpack.c.b16 %v717, %v716
  %v784 = vpack.c.b16 %v719, %v718
  %v785 = vpack.c.b16 %v721, %v720
  %850 = vmatprep.subr.bf16.mxu0 0
  %851 = vmatpush1.bf16.msra.mxu0 %v729
  %852 = vmatprep.subr.bf16.mxu0 0
  %853 = vmatpush1.bf16.msra.mxu0 %v728
  %854 = vmatprep.subr.bf16.mxu0 0
  %855 = vmatpush1.bf16.msra.mxu0 %v727
  %856 = vmatprep.subr.bf16.mxu0 0
  %857 = vmatpush1.bf16.msra.mxu0 %v726
  %858 = vmatprep.subr.bf16.mxu0 0
  %859 = vmatpush1.bf16.msra.mxu0 %v725
  %860 = vmatprep.subr.bf16.mxu0 0
  %861 = vmatpush1.bf16.msra.mxu0 %v724
  %862 = vmatprep.subr.bf16.mxu0 0
  %863 = vmatpush1.bf16.msra.mxu0 %v723
  %864 = vmatprep.subr.bf16.mxu0 0
  %865 = vmatpush1.bf16.msra.mxu0 %v722
  %866 = vmatprep.subr.bf16.mxu0 0
  %867 = vmatpush2.bf16.msra.mxu0 %v737
  %868 = vmatprep.subr.bf16.mxu0 0
  %869 = vmatpush2.bf16.msra.mxu0 %v736
  %870 = vmatprep.subr.bf16.mxu0 0
  %871 = vmatpush2.bf16.msra.mxu0 %v735
  %872 = vmatprep.subr.bf16.mxu0 0
  %873 = vmatpush2.bf16.msra.mxu0 %v734
  %874 = vmatprep.subr.bf16.mxu0 0
  %875 = vmatpush2.bf16.msra.mxu0 %v733
  %876 = vmatprep.subr.bf16.mxu0 0
  %877 = vmatpush2.bf16.msra.mxu0 %v732
  %878 = vmatprep.subr.bf16.mxu0 0
  %879 = vmatpush2.bf16.msra.mxu0 %v731
  %880 = vmatprep.subr.bf16.mxu0 0
  %881 = vmatpush2.bf16.msra.mxu0 %v730
  %882 = vmatprep.mubr.bf16.mxu0 %v355
  %883 = vmatmul.mubr.bf16.gmra.mxu0 %v354
  %v884 = vpop.f32.mrf.mxu0
  %v885 = vadd.f32 0.0, %v884
  %v886 = vpop.f32.mrf.mxu0
  %v887 = vpop.f32.mrf.mxu0
  %v888 = vadd.f32 0.0, %v887
  %v889 = vpop.f32.mrf.mxu0
  %890 = vmatprep.mubr.bf16.mxu0 %v363
  %891 = vmatmul.mubr.bf16.gmra.mxu0 %v362
  %v892 = vpop.f32.mrf.mxu0
  %v893 = vadd.f32 0.0, %v892
  %v894 = vpop.f32.mrf.mxu0
  %v895 = vpop.f32.mrf.mxu0
  %v896 = vadd.f32 0.0, %v895
  %v897 = vpop.f32.mrf.mxu0
  %898 = vmatprep.mubr.bf16.mxu0 %v371
  %899 = vmatmul.mubr.bf16.gmra.mxu0 %v370
  %v900 = vpop.f32.mrf.mxu0
  %v901 = vadd.f32 0.0, %v900
  %v902 = vpop.f32.mrf.mxu0
  %v903 = vpop.f32.mrf.mxu0
  %v904 = vadd.f32 0.0, %v903
  %v905 = vpop.f32.mrf.mxu0
  %906 = vmatprep.mubr.bf16.mxu0 %v379
  %907 = vmatmul.mubr.bf16.gmra.mxu0 %v378
  %v908 = vpop.f32.mrf.mxu0
  %v909 = vadd.f32 0.0, %v908
  %v910 = vpop.f32.mrf.mxu0
  %v911 = vpop.f32.mrf.mxu0
  %v912 = vadd.f32 0.0, %v911
  %v913 = vpop.f32.mrf.mxu0
  %914 = vmatprep.mubr.bf16.mxu0 %v387
  %915 = vmatmul.mubr.bf16.gmra.mxu0 %v386
  %v916 = vpop.f32.mrf.mxu0
  %v917 = vadd.f32 0.0, %v916
  %v918 = vpop.f32.mrf.mxu0
  %v919 = vpop.f32.mrf.mxu0
  %v920 = vadd.f32 0.0, %v919
  %v921 = vpop.f32.mrf.mxu0
  %922 = vmatprep.mubr.bf16.mxu0 %v395
  %923 = vmatmul.mubr.bf16.gmra.mxu0 %v394
  %v924 = vpop.f32.mrf.mxu0
  %v925 = vadd.f32 0.0, %v924
  %v926 = vpop.f32.mrf.mxu0
  %v927 = vpop.f32.mrf.mxu0
  %v928 = vadd.f32 0.0, %v927
  %v929 = vpop.f32.mrf.mxu0
  %930 = vmatprep.mubr.bf16.mxu0 %v403
  %931 = vmatmul.mubr.bf16.gmra.mxu0 %v402
  %v932 = vpop.f32.mrf.mxu0
  %v933 = vadd.f32 0.0, %v932
  %v934 = vpop.f32.mrf.mxu0
  %v935 = vpop.f32.mrf.mxu0
  %v936 = vpop.f32.mrf.mxu0
  %937 = vdwg.mxu0
  %938 = vmatprep.subr.bf16.mxu0 0
  %939 = vmatpush1.bf16.msra.mxu0 %v745
  %940 = vmatprep.subr.bf16.mxu0 0
  %941 = vmatpush1.bf16.msra.mxu0 %v744
  %942 = vmatprep.subr.bf16.mxu0 0
  %943 = vmatpush1.bf16.msra.mxu0 %v743
  %944 = vmatprep.subr.bf16.mxu0 0
  %945 = vmatpush1.bf16.msra.mxu0 %v742
  %946 = vmatprep.subr.bf16.mxu0 0
  %947 = vmatpush1.bf16.msra.mxu0 %v741
  %948 = vmatprep.subr.bf16.mxu0 0
  %949 = vmatpush1.bf16.msra.mxu0 %v740
  %950 = vmatprep.subr.bf16.mxu0 0
  %951 = vmatpush1.bf16.msra.mxu0 %v739
  %952 = vmatprep.subr.bf16.mxu0 0
  %953 = vmatpush1.bf16.msra.mxu0 %v738
  %954 = vmatprep.subr.bf16.mxu0 0
  %955 = vmatpush2.bf16.msra.mxu0 %v753
  %956 = vmatprep.subr.bf16.mxu0 0
  %957 = vmatpush2.bf16.msra.mxu0 %v752
  %958 = vmatprep.subr.bf16.mxu0 0
  %959 = vmatpush2.bf16.msra.mxu0 %v751
  %960 = vmatprep.subr.bf16.mxu0 0
  %961 = vmatpush2.bf16.msra.mxu0 %v750
  %962 = vmatprep.subr.bf16.mxu0 0
  %963 = vmatpush2.bf16.msra.mxu0 %v749
  %964 = vmatprep.subr.bf16.mxu0 0
  %965 = vmatpush2.bf16.msra.mxu0 %v748
  %966 = vmatprep.subr.bf16.mxu0 0
  %967 = vmatpush2.bf16.msra.mxu0 %v747
  %968 = vmatprep.subr.bf16.mxu0 0
  %969 = vmatpush2.bf16.msra.mxu0 %v746
  %970 = vmatprep.mubr.bf16.mxu0 %v357
  %971 = vmatmul.mubr.bf16.gmra.mxu0 %v356
  %v972 = vpop.f32.mrf.mxu0
  %v973 = vadd.f32 %v885, %v972
  %v974 = vpop.f32.mrf.mxu0
  %v975 = vpop.f32.mrf.mxu0
  %v976 = vadd.f32 %v888, %v975
  %v977 = vpop.f32.mrf.mxu0
  %978 = vmatprep.mubr.bf16.mxu0 %v365
  %979 = vmatmul.mubr.bf16.gmra.mxu0 %v364
  %v980 = vpop.f32.mrf.mxu0
  %v981 = vadd.f32 %v893, %v980
  %v982 = vpop.f32.mrf.mxu0
  %v983 = vpop.f32.mrf.mxu0
  %v984 = vadd.f32 %v896, %v983
  %v985 = vpop.f32.mrf.mxu0
  %986 = vmatprep.mubr.bf16.mxu0 %v373
  %987 = vmatmul.mubr.bf16.gmra.mxu0 %v372
  %v988 = vpop.f32.mrf.mxu0
  %v989 = vadd.f32 %v901, %v988
  %v990 = vpop.f32.mrf.mxu0
  %v991 = vpop.f32.mrf.mxu0
  %v992 = vadd.f32 %v904, %v991
  %v993 = vpop.f32.mrf.mxu0
  %994 = vmatprep.mubr.bf16.mxu0 %v381
  %995 = vmatmul.mubr.bf16.gmra.mxu0 %v380
  %v996 = vpop.f32.mrf.mxu0
  %v997 = vadd.f32 %v909, %v996
  %v998 = vpop.f32.mrf.mxu0
  %v999 = vpop.f32.mrf.mxu0
  %v1000 = vadd.f32 %v912, %v999
  %v1001 = vpop.f32.mrf.mxu0
  %1002 = vmatprep.mubr.bf16.mxu0 %v389
  %1003 = vmatmul.mubr.bf16.gmra.mxu0 %v388
  %v1004 = vpop.f32.mrf.mxu0
  %v1005 = vadd.f32 %v917, %v1004
  %v1006 = vpop.f32.mrf.mxu0
  %v1007 = vpop.f32.mrf.mxu0
  %v1008 = vadd.f32 %v920, %v1007
  %v1009 = vpop.f32.mrf.mxu0
  %1010 = vmatprep.mubr.bf16.mxu0 %v397
  %1011 = vmatmul.mubr.bf16.gmra.mxu0 %v396
  %v1012 = vpop.f32.mrf.mxu0
  %v1013 = vadd.f32 %v925, %v1012
  %v1014 = vpop.f32.mrf.mxu0
  %v1015 = vpop.f32.mrf.mxu0
  %v1016 = vadd.f32 %v928, %v1015
  %v1017 = vpop.f32.mrf.mxu0
  %1018 = vmatprep.mubr.bf16.mxu0 %v405
  %1019 = vmatmul.mubr.bf16.gmra.mxu0 %v404
  %v1020 = vpop.f32.mrf.mxu0
  %v1021 = vadd.f32 %v933, %v1020
  %v1022 = vpop.f32.mrf.mxu0
  %v1023 = vpop.f32.mrf.mxu0
  %v1024 = vpop.f32.mrf.mxu0
  %1025 = vdwg.mxu0
  %1026 = vmatprep.subr.bf16.mxu0 0
  %1027 = vmatpush1.bf16.msra.mxu0 %v761
  %1028 = vmatprep.subr.bf16.mxu0 0
  %1029 = vmatpush1.bf16.msra.mxu0 %v760
  %1030 = vmatprep.subr.bf16.mxu0 0
  %1031 = vmatpush1.bf16.msra.mxu0 %v759
  %1032 = vmatprep.subr.bf16.mxu0 0
  %1033 = vmatpush1.bf16.msra.mxu0 %v758
  %1034 = vmatprep.subr.bf16.mxu0 0
  %1035 = vmatpush1.bf16.msra.mxu0 %v757
  %1036 = vmatprep.subr.bf16.mxu0 0
  %1037 = vmatpush1.bf16.msra.mxu0 %v756
  %1038 = vmatprep.subr.bf16.mxu0 0
  %1039 = vmatpush1.bf16.msra.mxu0 %v755
  %1040 = vmatprep.subr.bf16.mxu0 0
  %1041 = vmatpush1.bf16.msra.mxu0 %v754
  %1042 = vmatprep.subr.bf16.mxu0 0
  %1043 = vmatpush2.bf16.msra.mxu0 %v769
  %1044 = vmatprep.subr.bf16.mxu0 0
  %1045 = vmatpush2.bf16.msra.mxu0 %v768
  %1046 = vmatprep.subr.bf16.mxu0 0
  %1047 = vmatpush2.bf16.msra.mxu0 %v767
  %1048 = vmatprep.subr.bf16.mxu0 0
  %1049 = vmatpush2.bf16.msra.mxu0 %v766
  %1050 = vmatprep.subr.bf16.mxu0 0
  %1051 = vmatpush2.bf16.msra.mxu0 %v765
  %1052 = vmatprep.subr.bf16.mxu0 0
  %1053 = vmatpush2.bf16.msra.mxu0 %v764
  %1054 = vmatprep.subr.bf16.mxu0 0
  %1055 = vmatpush2.bf16.msra.mxu0 %v763
  %1056 = vmatprep.subr.bf16.mxu0 0
  %1057 = vmatpush2.bf16.msra.mxu0 %v762
  %1058 = vmatprep.mubr.bf16.mxu0 %v359
  %1059 = vmatmul.mubr.bf16.gmra.mxu0 %v358
  %v1060 = vpop.f32.mrf.mxu0
  %v1061 = vadd.f32 %v973, %v1060
  %v1062 = vpop.f32.mrf.mxu0
  %v1063 = vpop.f32.mrf.mxu0
  %v1064 = vadd.f32 %v976, %v1063
  %v1065 = vpop.f32.mrf.mxu0
  %1066 = vmatprep.mubr.bf16.mxu0 %v367
  %1067 = vmatmul.mubr.bf16.gmra.mxu0 %v366
  %v1068 = vpop.f32.mrf.mxu0
  %v1069 = vadd.f32 %v981, %v1068
  %v1070 = vpop.f32.mrf.mxu0
  %v1071 = vpop.f32.mrf.mxu0
  %v1072 = vadd.f32 %v984, %v1071
  %v1073 = vpop.f32.mrf.mxu0
  %1074 = vmatprep.mubr.bf16.mxu0 %v375
  %1075 = vmatmul.mubr.bf16.gmra.mxu0 %v374
  %v1076 = vpop.f32.mrf.mxu0
  %v1077 = vadd.f32 %v989, %v1076
  %v1078 = vpop.f32.mrf.mxu0
  %v1079 = vpop.f32.mrf.mxu0
  %v1080 = vadd.f32 %v992, %v1079
  %v1081 = vpop.f32.mrf.mxu0
  %1082 = vmatprep.mubr.bf16.mxu0 %v383
  %1083 = vmatmul.mubr.bf16.gmra.mxu0 %v382
  %v1084 = vpop.f32.mrf.mxu0
  %v1085 = vadd.f32 %v997, %v1084
  %v1086 = vpop.f32.mrf.mxu0
  %v1087 = vpop.f32.mrf.mxu0
  %v1088 = vadd.f32 %v1000, %v1087
  %v1089 = vpop.f32.mrf.mxu0
  %1090 = vmatprep.mubr.bf16.mxu0 %v391
  %1091 = vmatmul.mubr.bf16.gmra.mxu0 %v390
  %v1092 = vpop.f32.mrf.mxu0
  %v1093 = vadd.f32 %v1005, %v1092
  %v1094 = vpop.f32.mrf.mxu0
  %v1095 = vpop.f32.mrf.mxu0
  %v1096 = vadd.f32 %v1008, %v1095
  %v1097 = vpop.f32.mrf.mxu0
  %1098 = vmatprep.mubr.bf16.mxu0 %v399
  %1099 = vmatmul.mubr.bf16.gmra.mxu0 %v398
  %v1100 = vpop.f32.mrf.mxu0
  %v1101 = vadd.f32 %v1013, %v1100
  %v1102 = vpop.f32.mrf.mxu0
  %v1103 = vpop.f32.mrf.mxu0
  %v1104 = vadd.f32 %v1016, %v1103
  %v1105 = vpop.f32.mrf.mxu0
  %1106 = vmatprep.mubr.bf16.mxu0 %v407
  %1107 = vmatmul.mubr.bf16.gmra.mxu0 %v406
  %v1108 = vpop.f32.mrf.mxu0
  %v1109 = vadd.f32 %v1021, %v1108
  %v1110 = vpop.f32.mrf.mxu0
  %v1111 = vpop.f32.mrf.mxu0
  %v1112 = vpop.f32.mrf.mxu0
  %1113 = vdwg.mxu0
  %1114 = vmatprep.subr.bf16.mxu0 0
  %1115 = vmatpush1.bf16.msra.mxu0 %v777
  %1116 = vmatprep.subr.bf16.mxu0 0
  %1117 = vmatpush1.bf16.msra.mxu0 %v776
  %1118 = vmatprep.subr.bf16.mxu0 0
  %1119 = vmatpush1.bf16.msra.mxu0 %v775
  %1120 = vmatprep.subr.bf16.mxu0 0
  %1121 = vmatpush1.bf16.msra.mxu0 %v774
  %1122 = vmatprep.subr.bf16.mxu0 0
  %1123 = vmatpush1.bf16.msra.mxu0 %v773
  %1124 = vmatprep.subr.bf16.mxu0 0
  %1125 = vmatpush1.bf16.msra.mxu0 %v772
  %1126 = vmatprep.subr.bf16.mxu0 0
  %1127 = vmatpush1.bf16.msra.mxu0 %v771
  %1128 = vmatprep.subr.bf16.mxu0 0
  %1129 = vmatpush1.bf16.msra.mxu0 %v770
  %1130 = vmatprep.subr.bf16.mxu0 0
  %1131 = vmatpush2.bf16.msra.mxu0 %v785
  %1132 = vmatprep.subr.bf16.mxu0 0
  %1133 = vmatpush2.bf16.msra.mxu0 %v784
  %1134 = vmatprep.subr.bf16.mxu0 0
  %1135 = vmatpush2.bf16.msra.mxu0 %v783
  %1136 = vmatprep.subr.bf16.mxu0 0
  %1137 = vmatpush2.bf16.msra.mxu0 %v782
  %1138 = vmatprep.subr.bf16.mxu0 0
  %1139 = vmatpush2.bf16.msra.mxu0 %v781
  %1140 = vmatprep.subr.bf16.mxu0 0
  %1141 = vmatpush2.bf16.msra.mxu0 %v780
  %1142 = vmatprep.subr.bf16.mxu0 0
  %1143 = vmatpush2.bf16.msra.mxu0 %v779
  %1144 = vmatprep.subr.bf16.mxu0 0
  %1145 = vmatpush2.bf16.msra.mxu0 %v778
  %1146 = vmatprep.mubr.bf16.mxu0 %v361
  %1147 = vmatmul.mubr.bf16.gmra.mxu0 %v360
  %v1148 = vpop.f32.mrf.mxu0
  %v1149 = vadd.f32 %v1061, %v1148
  %v1150 = vpop.f32.mrf.mxu0
  %v1151 = vpop.f32.mrf.mxu0
  %v1152 = vadd.f32 %v1064, %v1151
  %v1153 = vpop.f32.mrf.mxu0
  %1154 = vmatprep.mubr.bf16.mxu0 %v369
  %1155 = vmatmul.mubr.bf16.gmra.mxu0 %v368
  %v1156 = vpop.f32.mrf.mxu0
  %v1157 = vadd.f32 %v1069, %v1156
  %v1158 = vpop.f32.mrf.mxu0
  %v1159 = vpop.f32.mrf.mxu0
  %v1160 = vadd.f32 %v1072, %v1159
  %v1161 = vpop.f32.mrf.mxu0
  %1162 = vmatprep.mubr.bf16.mxu0 %v377
  %1163 = vmatmul.mubr.bf16.gmra.mxu0 %v376
  %v1164 = vpop.f32.mrf.mxu0
  %v1165 = vadd.f32 %v1077, %v1164
  %v1166 = vpop.f32.mrf.mxu0
  %v1167 = vpop.f32.mrf.mxu0
  %v1168 = vadd.f32 %v1080, %v1167
  %v1169 = vpop.f32.mrf.mxu0
  %1170 = vmatprep.mubr.bf16.mxu0 %v385
  %1171 = vmatmul.mubr.bf16.gmra.mxu0 %v384
  %v1172 = vpop.f32.mrf.mxu0
  %v1173 = vadd.f32 %v1085, %v1172
  %v1174 = vpop.f32.mrf.mxu0
  %v1175 = vpop.f32.mrf.mxu0
  %v1176 = vadd.f32 %v1088, %v1175
  %v1177 = vpop.f32.mrf.mxu0
  %1178 = vmatprep.mubr.bf16.mxu0 %v393
  %1179 = vmatmul.mubr.bf16.gmra.mxu0 %v392
  %v1180 = vpop.f32.mrf.mxu0
  %v1181 = vadd.f32 %v1093, %v1180
  %v1182 = vpop.f32.mrf.mxu0
  %v1183 = vpop.f32.mrf.mxu0
  %v1184 = vadd.f32 %v1096, %v1183
  %v1185 = vpop.f32.mrf.mxu0
  %1186 = vmatprep.mubr.bf16.mxu0 %v401
  %1187 = vmatmul.mubr.bf16.gmra.mxu0 %v400
  %v1188 = vpop.f32.mrf.mxu0
  %v1189 = vadd.f32 %v1101, %v1188
  %v1190 = vpop.f32.mrf.mxu0
  %v1191 = vpop.f32.mrf.mxu0
  %v1192 = vadd.f32 %v1104, %v1191
  %v1193 = vpop.f32.mrf.mxu0
  %1194 = vmatprep.mubr.bf16.mxu0 %v409
  %1195 = vmatmul.mubr.bf16.gmra.mxu0 %v408
  %v1196 = vpop.f32.mrf.mxu0
  %v1197 = vadd.f32 %v1109, %v1196
  %v1198 = vpop.f32.mrf.mxu0
  %v1199 = vpop.f32.mrf.mxu0
  %v1200 = vpop.f32.mrf.mxu0
  %1201 = vdwg.mxu0
  %v1202 = vadd.f32 %v1149, %v1152
  %v1203 = vadd.f32 %v1202, %v1157
  %v1204 = vadd.f32 %v1203, %v1160
  %v1205 = vadd.f32 %v1204, %v1165
  %v1206 = vadd.f32 %v1205, %v1168
  %v1207 = vadd.f32 %v1206, %v1173
  %v1208 = vadd.f32 %v1207, %v1176
  %v1209 = vadd.f32 %v1208, %v1181
  %v1210 = vadd.f32 %v1209, %v1184
  %v1211 = vadd.f32 %v1210, %v1189
  %v1212 = vadd.f32 %v1211, %v1192
  %vm1213 = vcmask 1041408
  %v1214 = vsel %vm1213, %v1197, 0.0
  %v1215 = vadd.f32 %v1212, %v1214
  %v1216 = vrot.slane %v1215, 4
  %v1217 = vadd.f32 %v1215, %v1216
  %v1218 = vrot.slane %v1217, 2
  %v1219 = vadd.f32 %v1217, %v1218
  %v1220 = vrot.slane %v1219, 1
  %v1221 = vadd.f32 %v1219, %v1220
  %v1222 = vrcp.pop 98.0
  %v1223 = vmul.f32 %v1221, %v1222
  %v1224 = vmul.f32 %v1149, %v1149
  %v1225 = vmul.f32 %v1152, %v1152
  %v1226 = vmul.f32 %v1157, %v1157
  %v1227 = vmul.f32 %v1160, %v1160
  %v1228 = vmul.f32 %v1165, %v1165
  %v1229 = vmul.f32 %v1168, %v1168
  %v1230 = vmul.f32 %v1173, %v1173
  %v1231 = vmul.f32 %v1176, %v1176
  %v1232 = vmul.f32 %v1181, %v1181
  %v1233 = vmul.f32 %v1184, %v1184
  %v1234 = vmul.f32 %v1189, %v1189
  %v1235 = vmul.f32 %v1192, %v1192
  %v1236 = vmul.f32 %v1197, %v1197
  %v1237 = vadd.f32 %v1224, %v1225
  %v1238 = vadd.f32 %v1237, %v1226
  %v1239 = vadd.f32 %v1238, %v1227
  %v1240 = vadd.f32 %v1239, %v1228
  %v1241 = vadd.f32 %v1240, %v1229
  %v1242 = vadd.f32 %v1241, %v1230
  %v1243 = vadd.f32 %v1242, %v1231
  %v1244 = vadd.f32 %v1243, %v1232
  %v1245 = vadd.f32 %v1244, %v1233
  %v1246 = vadd.f32 %v1245, %v1234
  %v1247 = vadd.f32 %v1246, %v1235
  %v1248 = vsel %vm1213, %v1236, 0.0
  %v1249 = vadd.f32 %v1247, %v1248
  %v1250 = vrot.slane %v1249, 4
  %v1251 = vadd.f32 %v1249, %v1250
  %v1252 = vrot.slane %v1251, 2
  %v1253 = vadd.f32 %v1251, %v1252
  %v1254 = vrot.slane %v1253, 1
  %v1255 = vadd.f32 %v1253, %v1254
  %v1256 = vmul.f32 %v1255, %v1222
  %v1257 = vmul.f32 %v1223, %v1223
  %v1258 = vsub.f32 %v1256, %v1257
  %v1259 = vmax.f32 %v1258, 0.0
  %v1260 = vsub.f32 %v1149, %v1223
  %v1261 = vsub.f32 %v1152, %v1223
  %v1262 = vsub.f32 %v1157, %v1223
  %v1263 = vsub.f32 %v1160, %v1223
  %v1264 = vsub.f32 %v1165, %v1223
  %v1265 = vsub.f32 %v1168, %v1223
  %v1266 = vsub.f32 %v1173, %v1223
  %v1267 = vsub.f32 %v1176, %v1223
  %v1268 = vsub.f32 %v1181, %v1223
  %v1269 = vsub.f32 %v1184, %v1223
  %v1270 = vsub.f32 %v1189, %v1223
  %v1271 = vsub.f32 %v1192, %v1223
  %v1272 = vsub.f32 %v1197, %v1223
  %v1273 = vadd.f32 %v1259, 1e-05
  %v1274 = vrsqrt.pop %v1273
  %v1275 = vmul.f32 %v1260, %v1274
  %v1276 = vmul.f32 %v1261, %v1274
  %v1277 = vmul.f32 %v1262, %v1274
  %v1278 = vmul.f32 %v1263, %v1274
  %v1279 = vmul.f32 %v1264, %v1274
  %v1280 = vmul.f32 %v1265, %v1274
  %v1281 = vmul.f32 %v1266, %v1274
  %v1282 = vmul.f32 %v1267, %v1274
  %v1283 = vmul.f32 %v1268, %v1274
  %v1284 = vmul.f32 %v1269, %v1274
  %v1285 = vmul.f32 %v1270, %v1274
  %v1286 = vmul.f32 %v1271, %v1274
  %v1287 = vmul.f32 %v1272, %v1274
  %v1288 = vld [vmem:[%s2] sm:$0x1]
  %v1290 = vlaneseq
  %v1291 = vshrl.u32 %v1290, 7
  %v1292 = vsub.s32 0, %v1291
  %v1293 = vrot.slane %v1288, %v1292
  %v1295 = vmul.f32 %v1275, %v1293
  %v1296 = vmul.f32 %v1276, %v1293
  %v1297 = vmul.f32 %v1277, %v1293
  %v1298 = vmul.f32 %v1278, %v1293
  %v1299 = vmul.f32 %v1279, %v1293
  %v1300 = vmul.f32 %v1280, %v1293
  %v1301 = vmul.f32 %v1281, %v1293
  %v1302 = vmul.f32 %v1282, %v1293
  %v1303 = vmul.f32 %v1283, %v1293
  %v1304 = vmul.f32 %v1284, %v1293
  %v1305 = vmul.f32 %v1285, %v1293
  %v1306 = vmul.f32 %v1286, %v1293
  %v1307 = vmul.f32 %v1287, %v1293
  %v1308 = vld [vmem:[%s3] sm:$0x1]
  %v1310 = vlaneseq
  %v1311 = vshrl.u32 %v1310, 7
  %v1312 = vsub.s32 0, %v1311
  %v1313 = vrot.slane %v1308, %v1312
  %v1315 = vadd.f32 %v1295, %v1313
  %v1316 = vadd.f32 %v1296, %v1313
  %v1317 = vadd.f32 %v1297, %v1313
  %v1318 = vadd.f32 %v1298, %v1313
  %v1319 = vadd.f32 %v1299, %v1313
  %v1320 = vadd.f32 %v1300, %v1313
  %v1321 = vadd.f32 %v1301, %v1313
  %v1322 = vadd.f32 %v1302, %v1313
  %v1323 = vadd.f32 %v1303, %v1313
  %v1324 = vadd.f32 %v1304, %v1313
  %v1325 = vadd.f32 %v1305, %v1313
  %v1326 = vadd.f32 %v1306, %v1313
  %v1327 = vadd.f32 %v1307, %v1313
  %vm1328 = vcmp.gt.f32.partialorder %v1315, 0.0
  %vm1329 = vcmp.gt.f32.partialorder %v1316, 0.0
  %vm1330 = vcmp.gt.f32.partialorder %v1317, 0.0
  %vm1331 = vcmp.gt.f32.partialorder %v1318, 0.0
  %vm1332 = vcmp.gt.f32.partialorder %v1319, 0.0
  %vm1333 = vcmp.gt.f32.partialorder %v1320, 0.0
  %vm1334 = vcmp.gt.f32.partialorder %v1321, 0.0
  %vm1335 = vcmp.gt.f32.partialorder %v1322, 0.0
  %vm1336 = vcmp.gt.f32.partialorder %v1323, 0.0
  %vm1337 = vcmp.gt.f32.partialorder %v1324, 0.0
  %vm1338 = vcmp.gt.f32.partialorder %v1325, 0.0
  %vm1339 = vcmp.gt.f32.partialorder %v1326, 0.0
  %vm1340 = vcmp.gt.f32.partialorder %v1327, 0.0
  %v1341 = vmul.f32 %v1315, 0.2
  %v1342 = vmul.f32 %v1316, 0.2
  %v1343 = vmul.f32 %v1317, 0.2
  %v1344 = vmul.f32 %v1318, 0.2
  %v1345 = vmul.f32 %v1319, 0.2
  %v1346 = vmul.f32 %v1320, 0.2
  %v1347 = vmul.f32 %v1321, 0.2
  %v1348 = vmul.f32 %v1322, 0.2
  %v1349 = vmul.f32 %v1323, 0.2
  %v1350 = vmul.f32 %v1324, 0.2
  %v1351 = vmul.f32 %v1325, 0.2
  %v1352 = vmul.f32 %v1326, 0.2
  %v1353 = vmul.f32 %v1327, 0.2
  %v1354 = vsel %vm1328, %v1315, %v1341
  %v1355 = vsel %vm1329, %v1316, %v1342
  %v1356 = vsel %vm1330, %v1317, %v1343
  %v1357 = vsel %vm1331, %v1318, %v1344
  %v1358 = vsel %vm1332, %v1319, %v1345
  %v1359 = vsel %vm1333, %v1320, %v1346
  %v1360 = vsel %vm1334, %v1321, %v1347
  %v1361 = vsel %vm1335, %v1322, %v1348
  %v1362 = vsel %vm1336, %v1323, %v1349
  %v1363 = vsel %vm1337, %v1324, %v1350
  %v1364 = vsel %vm1338, %v1325, %v1351
  %v1365 = vsel %vm1339, %v1326, %v1352
  %v1366 = vsel %vm1340, %v1327, %v1353
  %v1367 = vpack.c.bf16 %v1355, %v1354
  %v1368 = vpack.c.bf16 %v1357, %v1356
  %v1369 = vpack.c.bf16 %v1359, %v1358
  %v1370 = vpack.c.bf16 %v1361, %v1360
  %v1371 = vpack.c.bf16 %v1363, %v1362
  %v1372 = vpack.c.bf16 %v1365, %v1364
  %v1373 = vpack.c.bf16 %v1366, %v1366
  %v1381 = vunpack.c.l.b16 %v1367
  %v1382 = vunpack.c.h.b16 %v1367
  %v1383 = vunpack.c.l.b16 %v1368
  %v1384 = vunpack.c.h.b16 %v1368
  %v1385 = vunpack.c.l.b16 %v1369
  %v1386 = vunpack.c.h.b16 %v1369
  %v1387 = vunpack.c.l.b16 %v1370
  %v1388 = vunpack.c.h.b16 %v1370
  %v1389 = vunpack.c.l.b16 %v1371
  %v1390 = vunpack.c.h.b16 %v1371
  %v1391 = vunpack.c.l.b16 %v1372
  %v1392 = vunpack.c.h.b16 %v1372
  %v1393 = vunpack.c.l.b16 %v1373
  %v1394 = vpack.c.b16 %v1381, %v1381
  %v1395 = vpack.c.b16 %v1382, %v1382
  %v1396 = vpack.c.b16 %v1383, %v1383
  %v1397 = vpack.c.b16 %v1384, %v1384
  %v1398 = vpack.c.b16 %v1385, %v1385
  %v1399 = vpack.c.b16 %v1386, %v1386
  %v1400 = vpack.c.b16 %v1387, %v1387
  %v1401 = vpack.c.b16 %v1388, %v1388
  %v1402 = vpack.c.b16 %v1389, %v1389
  %v1403 = vpack.c.b16 %v1390, %v1390
  %v1404 = vpack.c.b16 %v1391, %v1391
  %v1405 = vpack.c.b16 %v1392, %v1392
  %v1406 = vpack.c.b16 %v1393, %v1393
  %1420 = vst [vmem:[%s4] sm:$0xf] %v1394
  %1421 = vst [vmem:[%s4 + $0x4] sm:$0xf] %v1395
  %1422 = vst [vmem:[%s4 + $0x8] sm:$0xf] %v1396
  %1423 = vst [vmem:[%s4 + $0xc] sm:$0xf] %v1397
  %1424 = vst [vmem:[%s4 + $0x10] sm:$0xf] %v1398
  %1425 = vst [vmem:[%s4 + $0x14] sm:$0xf] %v1399
  %1426 = vst [vmem:[%s4 + $0x18] sm:$0xf] %v1400
  %1427 = vst [vmem:[%s4 + $0x1c] sm:$0xf] %v1401
  %1428 = vst [vmem:[%s4 + $0x20] sm:$0xf] %v1402
  %1429 = vst [vmem:[%s4 + $0x24] sm:$0xf] %v1403
  %1430 = vst [vmem:[%s4 + $0x28] sm:$0xf] %v1404
  %1431 = vst [vmem:[%s4 + $0x2c] sm:$0xf] %v1405
  %1432 = vst [vmem:[%s4 + $0x30] sm:$0x1] %v1406
  // Predicated region
  $region18: #{discriminator_forward.4} parent=0 // pred_check
    _
  $region19: #{discriminator_forward.4} parent=0 // pred_check_branch
    %1434 = sbr.rel (0) target = $region21
  $region20: #{discriminator_forward.4} parent=0 // pred_region
    _
  $region21: #{discriminator_forward.4} parent=0 // pred_fallthru
    _
  // Predicated region
  $region22: #{discriminator_forward.4} parent=0 // pred_check
    _
  $region23: #{discriminator_forward.4} parent=0 // pred_check_branch
    %1436 = sbr.rel (0) target = $region25
  $region24: #{discriminator_forward.4} parent=0 // pred_region
    _
  $region25: #{discriminator_forward.4} parent=0 // pred_fallthru
    _

// kernel: tile.9
$region0: #{tile.9}
  %s0 = inlined_call_operand.vmem [shape: f32[2,9,256], index: 0, kind: input, shape index: {}]
  %s1 = inlined_call_operand.vmem [shape: f32[18,256], index: 1, kind: output, shape index: {}]
  %v2 = vld [vmem:[%s0] sm:$0xff]
  %3 = vst [vmem:[%s1] sm:$0xff] %v2
  %s4 = scalar_lea.vmem %s0, 8
  %v5 = vld [vmem:[%s4] sm:$0xff]
  %s6 = scalar_lea.vmem %s1, 8
  %7 = vst [vmem:[%s6] sm:$0xff] %v5
  %s8 = scalar_lea.vmem %s0, 16
  %v9 = vld [vmem:[%s8] ss:$8 sm:$0x7]
  %s10 = scalar_lea.vmem %s1, 16
  %11 = vst [vmem:[%s10] ss:$8 sm:$0x3] %v9
  %s12 = scalar_lea.vmem %s1, 15
  %13 = vst [vmem:[%s12] sm:$0x4] %v9
  %s14 = scalar_lea.vmem %s0, 33
  %v15 = vld [vmem:[%s14] sm:$0xff]
  %s16 = scalar_lea.vmem %s1, 18
  %17 = vst [vmem:[%s16] sm:$0x3f] %v15
  %s18 = scalar_lea.vmem %s1, 74
  %19 = vst [vmem:[%s18] ss:$-7 sm:$0xc0] %v15
  %s20 = scalar_lea.vmem %s0, 41
  %v21 = vld [vmem:[%s20] sm:$0xff]
  %s22 = scalar_lea.vmem %s1, 26
  %23 = vst [vmem:[%s22] sm:$0x3f] %v21
  %s24 = scalar_lea.vmem %s1, 82
  %25 = vst [vmem:[%s24] ss:$-7 sm:$0xc0] %v21
  %s26 = scalar_lea.vmem %s0, 56
  %v27 = vld [vmem:[%s26] sm:$0x1]
  %s28 = scalar_lea.vmem %s1, 41
  %29 = vst [vmem:[%s28] sm:$0x1] %v27

// kernel: discriminator_forward.5
$region0: #{discriminator_forward.5}
  #allocation0 [shape = 'u32[]', space=smem, size = 0x4, offset = 0x4, fixed_abs, tag = 'smem constant byte address 0x4 - core index']
  #allocation1 [shape = 'u32[144,128]{1,0:T(1,128)}', space=vmem, size = 0x12000, scoped, tag = 'internal scratch']
  %s0 = inlined_call_operand.vmem [shape: bf16[18,1152], index: 0, kind: input, shape index: {}]
  %s1 = inlined_call_operand.vmem [shape: bf16[1152,256], index: 1, kind: input, shape index: {}]
  %s2 = inlined_call_operand.vmem [shape: f32[1,256], index: 2, kind: input, shape index: {}]
  %s3 = inlined_call_operand.vmem [shape: f32[1,256], index: 3, kind: input, shape index: {}]
  %s4 = inlined_call_operand.vmem [shape: f32[18,256], index: 4, kind: input, shape index: {}]
  %s5 = inlined_call_operand.vmem [shape: f32[2,18], index: 5, kind: input, shape index: {}]
  %s6 = inlined_call_operand.vmem [shape: f32[2,1], index: 6, kind: output, shape index: {}]
  %s7 = sld [smem:[#allocation0]]
  $region34: #{discriminator_forward.5} parent=0
    _
  %s9 = ssub.s32 1, %s7
  %s10 = scalar_select 0, %s9, %s7
  // Predicated region
  $region2: #{discriminator_forward.5} parent=0 // pred_check
    _
  $region3: #{discriminator_forward.5} parent=0 // pred_check_branch
    %12 = sbr.rel (0) target = $region5
  $region4: #{discriminator_forward.5} parent=0 // pred_region
    _
  $region5: #{discriminator_forward.5} parent=0 // pred_fallthru
    _
  // Predicated region
  $region6: #{discriminator_forward.5} parent=0 // pred_check
    _
  $region7: #{discriminator_forward.5} parent=0 // pred_check_branch
    %14 = sbr.rel (0) target = $region9
  $region8: #{discriminator_forward.5} parent=0 // pred_region
    _
  $region9: #{discriminator_forward.5} parent=0 // pred_fallthru
    _
  // Predicated region
  $region10: #{discriminator_forward.5} parent=0 // pred_check
    _
  $region11: #{discriminator_forward.5} parent=0 // pred_check_branch
    %16 = sbr.rel (0) target = $region13
  $region12: #{discriminator_forward.5} parent=0 // pred_region
    _
  $region13: #{discriminator_forward.5} parent=0 // pred_fallthru
    _
  // Predicated region
  $region14: #{discriminator_forward.5} parent=0 // pred_check
    _
  $region15: #{discriminator_forward.5} parent=0 // pred_check_branch
    %18 = sbr.rel (0) target = $region17
  $region16: #{discriminator_forward.5} parent=0 // pred_region
    _
  $region17: #{discriminator_forward.5} parent=0 // pred_fallthru
    _
  // Predicated region
  $region18: #{discriminator_forward.5} parent=0 // pred_check
    _
  $region19: #{discriminator_forward.5} parent=0 // pred_check_branch
    %20 = sbr.rel (0) target = $region21
  $region20: #{discriminator_forward.5} parent=0 // pred_region
    _
  $region21: #{discriminator_forward.5} parent=0 // pred_fallthru
    _
  // Predicated region
  $region22: #{discriminator_forward.5} parent=0 // pred_check
    _
  $region23: #{discriminator_forward.5} parent=0 // pred_check_branch
    %22 = sbr.rel (0) target = $region25
  $region24: #{discriminator_forward.5} parent=0 // pred_region
    _
  $region25: #{discriminator_forward.5} parent=0 // pred_fallthru
    _
  %v24 = vld [vmem:[%s0] sm:$0xff]
  %v25 = vld [vmem:[%s0 + $0x8] sm:$0xff]
  %v26 = vld [vmem:[%s0 + $0x10] sm:$0xff]
  %v27 = vld [vmem:[%s0 + $0x18] sm:$0xff]
  %v28 = vld [vmem:[%s0 + $0x20] sm:$0xf]
  %v29 = vld [vmem:[%s0 + $0x24] sm:$0xff]
  %v30 = vld [vmem:[%s0 + $0x2c] sm:$0xff]
  %v31 = vld [vmem:[%s0 + $0x34] sm:$0xff]
  %v32 = vld [vmem:[%s0 + $0x3c] sm:$0xff]
  %v33 = vld [vmem:[%s0 + $0x44] sm:$0xf]
  %v34 = vld [vmem:[%s0 + $0x48] sm:$0x11]
  %v35 = vld [vmem:[%s0 + $0x50] sm:$0x11]
  %v36 = vld [vmem:[%s0 + $0x58] sm:$0x11]
  %v37 = vld [vmem:[%s0 + $0x60] sm:$0x11]
  %v38 = vld [vmem:[%s0 + $0x68] sm:$0x1]
  %v39 = vld [vmem:[%s1] sm:$0xff]
  %v40 = vld [vmem:[%s1 + $0x8] sm:$0xff]
  %v41 = vld [vmem:[%s1 + $0x10] sm:$0xff]
  %v42 = vld [vmem:[%s1 + $0x18] sm:$0xff]
  %v43 = vld [vmem:[%s1 + $0x20] sm:$0xff]
  %v44 = vld [vmem:[%s1 + $0x28] sm:$0xff]
  %v45 = vld [vmem:[%s1 + $0x30] sm:$0xff]
  %v46 = vld [vmem:[%s1 + $0x38] sm:$0xff]
  %v47 = vld [vmem:[%s1 + $0x40] sm:$0xff]
  %v48 = vld [vmem:[%s1 + $0x48] sm:$0xff]
  %v49 = vld [vmem:[%s1 + $0x50] sm:$0xff]
  %v50 = vld [vmem:[%s1 + $0x58] sm:$0xff]
  %v51 = vld [vmem:[%s1 + $0x60] sm:$0xff]
  %v52 = vld [vmem:[%s1 + $0x68] sm:$0xff]
  %v53 = vld [vmem:[%s1 + $0x70] sm:$0xff]
  %v54 = vld [vmem:[%s1 + $0x78] sm:$0xff]
  %v55 = vld [vmem:[%s1 + $0x80] sm:$0xff]
  %v56 = vld [vmem:[%s1 + $0x88] sm:$0xff]
  %v57 = vld [vmem:[%s1 + $0x90] sm:$0xff]
  %v58 = vld [vmem:[%s1 + $0x98] sm:$0xff]
  %v59 = vld [vmem:[%s1 + $0xa0] sm:$0xff]
  %v60 = vld [vmem:[%s1 + $0xa8] sm:$0xff]
  %v61 = vld [vmem:[%s1 + $0xb0] sm:$0xff]
  %v62 = vld [vmem:[%s1 + $0xb8] sm:$0xff]
  %v63 = vld [vmem:[%s1 + $0xc0] sm:$0xff]
  %v64 = vld [vmem:[%s1 + $0xc8] sm:$0xff]
  %v65 = vld [vmem:[%s1 + $0xd0] sm:$0xff]
  %v66 = vld [vmem:[%s1 + $0xd8] sm:$0xff]
  %v67 = vld [vmem:[%s1 + $0xe0] sm:$0xff]
  %v68 = vld [vmem:[%s1 + $0xe8] sm:$0xff]
  %v69 = vld [vmem:[%s1 + $0xf0] sm:$0xff]
  %v70 = vld [vmem:[%s1 + $0xf8] sm:$0xff]
  %v71 = vld [vmem:[%s1 + $0x100] sm:$0xff]
  %v72 = vld [vmem:[%s1 + $0x108] sm:$0xff]
  %v73 = vld [vmem:[%s1 + $0x110] sm:$0xff]
  %v74 = vld [vmem:[%s1 + $0x118] sm:$0xff]
  %v75 = vld [vmem:[%s1 + $0x120] sm:$0xff]
  %v76 = vld [vmem:[%s1 + $0x128] sm:$0xff]
  %v77 = vld [vmem:[%s1 + $0x130] sm:$0xff]
  %v78 = vld [vmem:[%s1 + $0x138] sm:$0xff]
  %v79 = vld [vmem:[%s1 + $0x140] sm:$0xff]
  %v80 = vld [vmem:[%s1 + $0x148] sm:$0xff]
  %v81 = vld [vmem:[%s1 + $0x150] sm:$0xff]
  %v82 = vld [vmem:[%s1 + $0x158] sm:$0xff]
  %v83 = vld [vmem:[%s1 + $0x160] sm:$0xff]
  %v84 = vld [vmem:[%s1 + $0x168] sm:$0xff]
  %v85 = vld [vmem:[%s1 + $0x170] sm:$0xff]
  %v86 = vld [vmem:[%s1 + $0x178] sm:$0xff]
  %v87 = vld [vmem:[%s1 + $0x180] sm:$0xff]
  %v88 = vld [vmem:[%s1 + $0x188] sm:$0xff]
  %v89 = vld [vmem:[%s1 + $0x190] sm:$0xff]
  %v90 = vld [vmem:[%s1 + $0x198] sm:$0xff]
  %v91 = vld [vmem:[%s1 + $0x1a0] sm:$0xff]
  %v92 = vld [vmem:[%s1 + $0x1a8] sm:$0xff]
  %v93 = vld [vmem:[%s1 + $0x1b0] sm:$0xff]
  %v94 = vld [vmem:[%s1 + $0x1b8] sm:$0xff]
  %v95 = vld [vmem:[%s1 + $0x1c0] sm:$0xff]
  %v96 = vld [vmem:[%s1 + $0x1c8] sm:$0xff]
  %v97 = vld [vmem:[%s1 + $0x1d0] sm:$0xff]
  %v98 = vld [vmem:[%s1 + $0x1d8] sm:$0xff]
  %v99 = vld [vmem:[%s1 + $0x1e0] sm:$0xff]
  %v100 = vld [vmem:[%s1 + $0x1e8] sm:$0xff]
  %v101 = vld [vmem:[%s1 + $0x1f0] sm:$0xff]
  %v102 = vld [vmem:[%s1 + $0x1f8] sm:$0xff]
  %v103 = vld [vmem:[%s1 + $0x200] sm:$0xff]
  %v104 = vld [vmem:[%s1 + $0x208] sm:$0xff]
  %v105 = vld [vmem:[%s1 + $0x210] sm:$0xff]
  %v106 = vld [vmem:[%s1 + $0x218] sm:$0xff]
  %v107 = vld [vmem:[%s1 + $0x220] sm:$0xff]
  %v108 = vld [vmem:[%s1 + $0x228] sm:$0xff]
  %v109 = vld [vmem:[%s1 + $0x230] sm:$0xff]
  %v110 = vld [vmem:[%s1 + $0x238] sm:$0xff]
  %v111 = vld [vmem:[%s1 + $0x240] sm:$0xff]
  %v112 = vld [vmem:[%s1 + $0x248] sm:$0xff]
  %v113 = vld [vmem:[%s1 + $0x250] sm:$0xff]
  %v114 = vld [vmem:[%s1 + $0x258] sm:$0xff]
  %v115 = vld [vmem:[%s1 + $0x260] sm:$0xff]
  %v116 = vld [vmem:[%s1 + $0x268] sm:$0xff]
  %v117 = vld [vmem:[%s1 + $0x270] sm:$0xff]
  %v118 = vld [vmem:[%s1 + $0x278] sm:$0xff]
  %v119 = vld [vmem:[%s1 + $0x280] sm:$0xff]
  %v120 = vld [vmem:[%s1 + $0x288] sm:$0xff]
  %v121 = vld [vmem:[%s1 + $0x290] sm:$0xff]
  %v122 = vld [vmem:[%s1 + $0x298] sm:$0xff]
  %v123 = vld [vmem:[%s1 + $0x2a0] sm:$0xff]
  %v124 = vld [vmem:[%s1 + $0x2a8] sm:$0xff]
  %v125 = vld [vmem:[%s1 + $0x2b0] sm:$0xff]
  %v126 = vld [vmem:[%s1 + $0x2b8] sm:$0xff]
  %v127 = vld [vmem:[%s1 + $0x2c0] sm:$0xff]
  %v128 = vld [vmem:[%s1 + $0x2c8] sm:$0xff]
  %v129 = vld [vmem:[%s1 + $0x2d0] sm:$0xff]
  %v130 = vld [vmem:[%s1 + $0x2d8] sm:$0xff]
  %v131 = vld [vmem:[%s1 + $0x2e0] sm:$0xff]
  %v132 = vld [vmem:[%s1 + $0x2e8] sm:$0xff]
  %v133 = vld [vmem:[%s1 + $0x2f0] sm:$0xff]
  %v134 = vld [vmem:[%s1 + $0x2f8] sm:$0xff]
  %v135 = vld [vmem:[%s1 + $0x300] sm:$0xff]
  %v136 = vld [vmem:[%s1 + $0x308] sm:$0xff]
  %v137 = vld [vmem:[%s1 + $0x310] sm:$0xff]
  %v138 = vld [vmem:[%s1 + $0x318] sm:$0xff]
  %v139 = vld [vmem:[%s1 + $0x320] sm:$0xff]
  %v140 = vld [vmem:[%s1 + $0x328] sm:$0xff]
  %v141 = vld [vmem:[%s1 + $0x330] sm:$0xff]
  %v142 = vld [vmem:[%s1 + $0x338] sm:$0xff]
  %v143 = vld [vmem:[%s1 + $0x340] sm:$0xff]
  %v144 = vld [vmem:[%s1 + $0x348] sm:$0xff]
  %v145 = vld [vmem:[%s1 + $0x350] sm:$0xff]
  %v146 = vld [vmem:[%s1 + $0x358] sm:$0xff]
  %v147 = vld [vmem:[%s1 + $0x360] sm:$0xff]
  %v148 = vld [vmem:[%s1 + $0x368] sm:$0xff]
  %v149 = vld [vmem:[%s1 + $0x370] sm:$0xff]
  %v150 = vld [vmem:[%s1 + $0x378] sm:$0xff]
  %v151 = vld [vmem:[%s1 + $0x380] sm:$0xff]
  %v152 = vld [vmem:[%s1 + $0x388] sm:$0xff]
  %v153 = vld [vmem:[%s1 + $0x390] sm:$0xff]
  %v154 = vld [vmem:[%s1 + $0x398] sm:$0xff]
  %v155 = vld [vmem:[%s1 + $0x3a0] sm:$0xff]
  %v156 = vld [vmem:[%s1 + $0x3a8] sm:$0xff]
  %v157 = vld [vmem:[%s1 + $0x3b0] sm:$0xff]
  %v158 = vld [vmem:[%s1 + $0x3b8] sm:$0xff]
  %v159 = vld [vmem:[%s1 + $0x3c0] sm:$0xff]
  %v160 = vld [vmem:[%s1 + $0x3c8] sm:$0xff]
  %v161 = vld [vmem:[%s1 + $0x3d0] sm:$0xff]
  %v162 = vld [vmem:[%s1 + $0x3d8] sm:$0xff]
  %v163 = vld [vmem:[%s1 + $0x3e0] sm:$0xff]
  %v164 = vld [vmem:[%s1 + $0x3e8] sm:$0xff]
  %v165 = vld [vmem:[%s1 + $0x3f0] sm:$0xff]
  %v166 = vld [vmem:[%s1 + $0x3f8] sm:$0xff]
  %v167 = vld [vmem:[%s1 + $0x400] sm:$0xff]
  %v168 = vld [vmem:[%s1 + $0x408] sm:$0xff]
  %v169 = vld [vmem:[%s1 + $0x410] sm:$0xff]
  %v170 = vld [vmem:[%s1 + $0x418] sm:$0xff]
  %v171 = vld [vmem:[%s1 + $0x420] sm:$0xff]
  %v172 = vld [vmem:[%s1 + $0x428] sm:$0xff]
  %v173 = vld [vmem:[%s1 + $0x430] sm:$0xff]
  %v174 = vld [vmem:[%s1 + $0x438] sm:$0xff]
  %v175 = vld [vmem:[%s1 + $0x440] sm:$0xff]
  %v176 = vld [vmem:[%s1 + $0x448] sm:$0xff]
  %v177 = vld [vmem:[%s1 + $0x450] sm:$0xff]
  %v178 = vld [vmem:[%s1 + $0x458] sm:$0xff]
  %v179 = vld [vmem:[%s1 + $0x460] sm:$0xff]
  %v180 = vld [vmem:[%s1 + $0x468] sm:$0xff]
  %v181 = vld [vmem:[%s1 + $0x470] sm:$0xff]
  %v182 = vld [vmem:[%s1 + $0x478] sm:$0xff]
  %v198 = vunpack.c.l.b16 %v24
  %v199 = vunpack.c.h.b16 %v24
  %v200 = vunpack.c.l.b16 %v25
  %v201 = vunpack.c.h.b16 %v25
  %v202 = vunpack.c.l.b16 %v26
  %v203 = vunpack.c.h.b16 %v26
  %v204 = vunpack.c.l.b16 %v27
  %v205 = vunpack.c.h.b16 %v27
  %v206 = vunpack.c.l.b16 %v28
  %v207 = vunpack.c.l.b16 %v29
  %v208 = vunpack.c.h.b16 %v29
  %v209 = vunpack.c.l.b16 %v30
  %v210 = vunpack.c.h.b16 %v30
  %v211 = vunpack.c.l.b16 %v31
  %v212 = vunpack.c.h.b16 %v31
  %v213 = vunpack.c.l.b16 %v32
  %v214 = vunpack.c.h.b16 %v32
  %v215 = vunpack.c.l.b16 %v33
  %v216 = vunpack.c.l.b16 %v34
  %v217 = vunpack.c.h.b16 %v34
  %v218 = vunpack.c.l.b16 %v35
  %v219 = vunpack.c.h.b16 %v35
  %v220 = vunpack.c.l.b16 %v36
  %v221 = vunpack.c.h.b16 %v36
  %v222 = vunpack.c.l.b16 %v37
  %v223 = vunpack.c.h.b16 %v37
  %v224 = vunpack.c.l.b16 %v38
  %v225 = vpack.c.b16 %v207, %v198
  %v226 = vpack.c.b16 %v208, %v199
  %v227 = vpack.c.b16 %v209, %v200
  %v228 = vpack.c.b16 %v210, %v201
  %v229 = vpack.c.b16 %v211, %v202
  %v230 = vpack.c.b16 %v212, %v203
  %v231 = vpack.c.b16 %v213, %v204
  %v232 = vpack.c.b16 %v214, %v205
  %v233 = vpack.c.b16 %v215, %v206
  %v234 = vpack.c.b16 %v216, %v216
  %v235 = vpack.c.b16 %v217, %v217
  %v236 = vpack.c.b16 %v218, %v218
  %v237 = vpack.c.b16 %v219, %v219
  %v238 = vpack.c.b16 %v220, %v220
  %v239 = vpack.c.b16 %v221, %v221
  %v240 = vpack.c.b16 %v222, %v222
  %v241 = vpack.c.b16 %v223, %v223
  %v242 = vpack.c.b16 %v224, %v224
  %v405 = vunpack.c.l.b16 %v39
  %v406 = vunpack.c.h.b16 %v39
  %v407 = vunpack.c.l.b16 %v40
  %v408 = vunpack.c.h.b16 %v40
  %v409 = vunpack.c.l.b16 %v41
  %v410 = vunpack.c.h.b16 %v41
  %v411 = vunpack.c.l.b16 %v42
  %v412 = vunpack.c.h.b16 %v42
  %v413 = vunpack.c.l.b16 %v43
  %v414 = vunpack.c.h.b16 %v43
  %v415 = vunpack.c.l.b16 %v44
  %v416 = vunpack.c.h.b16 %v44
  %v417 = vunpack.c.l.b16 %v45
  %v418 = vunpack.c.h.b16 %v45
  %v419 = vunpack.c.l.b16 %v46
  %v420 = vunpack.c.h.b16 %v46
  %v421 = vunpack.c.l.b16 %v47
  %v422 = vunpack.c.h.b16 %v47
  %v423 = vunpack.c.l.b16 %v48
  %v424 = vunpack.c.h.b16 %v48
  %v425 = vunpack.c.l.b16 %v49
  %v426 = vunpack.c.h.b16 %v49
  %v427 = vunpack.c.l.b16 %v50
  %v428 = vunpack.c.h.b16 %v50
  %v429 = vunpack.c.l.b16 %v51
  %v430 = vunpack.c.h.b16 %v51
  %v431 = vunpack.c.l.b16 %v52
  %v432 = vunpack.c.h.b16 %v52
  %v433 = vunpack.c.l.b16 %v53
  %v434 = vunpack.c.h.b16 %v53
  %v435 = vunpack.c.l.b16 %v54
  %v436 = vunpack.c.h.b16 %v54
  %v437 = vunpack.c.l.b16 %v55
  %v438 = vunpack.c.h.b16 %v55
  %v439 = vunpack.c.l.b16 %v56
  %v440 = vunpack.c.h.b16 %v56
  %v441 = vunpack.c.l.b16 %v57
  %v442 = vunpack.c.h.b16 %v57
  %v443 = vunpack.c.l.b16 %v58
  %v444 = vunpack.c.h.b16 %v58
  %v445 = vunpack.c.l.b16 %v59
  %v446 = vunpack.c.h.b16 %v59
  %v447 = vunpack.c.l.b16 %v60
  %v448 = vunpack.c.h.b16 %v60
  %v449 = vunpack.c.l.b16 %v61
  %v450 = vunpack.c.h.b16 %v61
  %v451 = vunpack.c.l.b16 %v62
  %v452 = vunpack.c.h.b16 %v62
  %v453 = vunpack.c.l.b16 %v63
  %v454 = vunpack.c.h.b16 %v63
  %v455 = vunpack.c.l.b16 %v64
  %v456 = vunpack.c.h.b16 %v64
  %v457 = vunpack.c.l.b16 %v65
  %v458 = vunpack.c.h.b16 %v65
  %v459 = vunpack.c.l.b16 %v66
  %v460 = vunpack.c.h.b16 %v66
  %v461 = vunpack.c.l.b16 %v67
  %v462 = vunpack.c.h.b16 %v67
  %v463 = vunpack.c.l.b16 %v68
  %v464 = vunpack.c.h.b16 %v68
  %v465 = vunpack.c.l.b16 %v69
  %v466 = vunpack.c.h.b16 %v69
  %v467 = vunpack.c.l.b16 %v70
  %v468 = vunpack.c.h.b16 %v70
  %v469 = vunpack.c.l.b16 %v71
  %v470 = vunpack.c.h.b16 %v71
  %v471 = vunpack.c.l.b16 %v72
  %v472 = vunpack.c.h.b16 %v72
  %v473 = vunpack.c.l.b16 %v73
  %v474 = vunpack.c.h.b16 %v73
  %v475 = vunpack.c.l.b16 %v74
  %v476 = vunpack.c.h.b16 %v74
  %v477 = vunpack.c.l.b16 %v75
  %v478 = vunpack.c.h.b16 %v75
  %v479 = vunpack.c.l.b16 %v76
  %v480 = vunpack.c.h.b16 %v76
  %v481 = vunpack.c.l.b16 %v77
  %v482 = vunpack.c.h.b16 %v77
  %v483 = vunpack.c.l.b16 %v78
  %v484 = vunpack.c.h.b16 %v78
  %v485 = vunpack.c.l.b16 %v79
  %v486 = vunpack.c.h.b16 %v79
  %v487 = vunpack.c.l.b16 %v80
  %v488 = vunpack.c.h.b16 %v80
  %v489 = vunpack.c.l.b16 %v81
  %v490 = vunpack.c.h.b16 %v81
  %v491 = vunpack.c.l.b16 %v82
  %v492 = vunpack.c.h.b16 %v82
  %v493 = vunpack.c.l.b16 %v83
  %v494 = vunpack.c.h.b16 %v83
  %v495 = vunpack.c.l.b16 %v84
  %v496 = vunpack.c.h.b16 %v84
  %v497 = vunpack.c.l.b16 %v85
  %v498 = vunpack.c.h.b16 %v85
  %v499 = vunpack.c.l.b16 %v86
  %v500 = vunpack.c.h.b16 %v86
  %v501 = vunpack.c.l.b16 %v87
  %v502 = vunpack.c.h.b16 %v87
  %v503 = vunpack.c.l.b16 %v88
  %v504 = vunpack.c.h.b16 %v88
  %v505 = vunpack.c.l.b16 %v89
  %v506 = vunpack.c.h.b16 %v89
  %v507 = vunpack.c.l.b16 %v90
  %v508 = vunpack.c.h.b16 %v90
  %v509 = vunpack.c.l.b16 %v91
  %v510 = vunpack.c.h.b16 %v91
  %v511 = vunpack.c.l.b16 %v92
  %v512 = vunpack.c.h.b16 %v92
  %v513 = vunpack.c.l.b16 %v93
  %v514 = vunpack.c.h.b16 %v93
  %v515 = vunpack.c.l.b16 %v94
  %v516 = vunpack.c.h.b16 %v94
  %v517 = vunpack.c.l.b16 %v95
  %v518 = vunpack.c.h.b16 %v95
  %v519 = vunpack.c.l.b16 %v96
  %v520 = vunpack.c.h.b16 %v96
  %v521 = vunpack.c.l.b16 %v97
  %v522 = vunpack.c.h.b16 %v97
  %v523 = vunpack.c.l.b16 %v98
  %v524 = vunpack.c.h.b16 %v98
  %v525 = vunpack.c.l.b16 %v99
  %v526 = vunpack.c.h.b16 %v99
  %v527 = vunpack.c.l.b16 %v100
  %v528 = vunpack.c.h.b16 %v100
  %v529 = vunpack.c.l.b16 %v101
  %v530 = vunpack.c.h.b16 %v101
  %v531 = vunpack.c.l.b16 %v102
  %v532 = vunpack.c.h.b16 %v102
  %v533 = vunpack.c.l.b16 %v103
  %v534 = vunpack.c.h.b16 %v103
  %v535 = vunpack.c.l.b16 %v104
  %v536 = vunpack.c.h.b16 %v104
  %v537 = vunpack.c.l.b16 %v105
  %v538 = vunpack.c.h.b16 %v105
  %v539 = vunpack.c.l.b16 %v106
  %v540 = vunpack.c.h.b16 %v106
  %v541 = vunpack.c.l.b16 %v107
  %v542 = vunpack.c.h.b16 %v107
  %v543 = vunpack.c.l.b16 %v108
  %v544 = vunpack.c.h.b16 %v108
  %v545 = vunpack.c.l.b16 %v109
  %v546 = vunpack.c.h.b16 %v109
  %v547 = vunpack.c.l.b16 %v110
  %v548 = vunpack.c.h.b16 %v110
  %v549 = vunpack.c.l.b16 %v111
  %v550 = vunpack.c.h.b16 %v111
  %v551 = vunpack.c.l.b16 %v112
  %v552 = vunpack.c.h.b16 %v112
  %v553 = vunpack.c.l.b16 %v113
  %v554 = vunpack.c.h.b16 %v113
  %v555 = vunpack.c.l.b16 %v114
  %v556 = vunpack.c.h.b16 %v114
  %v557 = vunpack.c.l.b16 %v115
  %v558 = vunpack.c.h.b16 %v115
  %v559 = vunpack.c.l.b16 %v116
  %v560 = vunpack.c.h.b16 %v116
  %v561 = vunpack.c.l.b16 %v117
  %v562 = vunpack.c.h.b16 %v117
  %v563 = vunpack.c.l.b16 %v118
  %v564 = vunpack.c.h.b16 %v118
  %v565 = vunpack.c.l.b16 %v119
  %v566 = vunpack.c.h.b16 %v119
  %v567 = vunpack.c.l.b16 %v120
  %v568 = vunpack.c.h.b16 %v120
  %v569 = vunpack.c.l.b16 %v121
  %v570 = vunpack.c.h.b16 %v121
  %v571 = vunpack.c.l.b16 %v122
  %v572 = vunpack.c.h.b16 %v122
  %v573 = vunpack.c.l.b16 %v123
  %v574 = vunpack.c.h.b16 %v123
  %v575 = vunpack.c.l.b16 %v124
  %v576 = vunpack.c.h.b16 %v124
  %v577 = vunpack.c.l.b16 %v125
  %v578 = vunpack.c.h.b16 %v125
  %v579 = vunpack.c.l.b16 %v126
  %v580 = vunpack.c.h.b16 %v126
  %v581 = vunpack.c.l.b16 %v127
  %v582 = vunpack.c.h.b16 %v127
  %v583 = vunpack.c.l.b16 %v128
  %v584 = vunpack.c.h.b16 %v128
  %v585 = vunpack.c.l.b16 %v129
  %v586 = vunpack.c.h.b16 %v129
  %v587 = vunpack.c.l.b16 %v130
  %v588 = vunpack.c.h.b16 %v130
  %v589 = vunpack.c.l.b16 %v131
  %v590 = vunpack.c.h.b16 %v131
  %v591 = vunpack.c.l.b16 %v132
  %v592 = vunpack.c.h.b16 %v132
  %v593 = vunpack.c.l.b16 %v133
  %v594 = vunpack.c.h.b16 %v133
  %v595 = vunpack.c.l.b16 %v134
  %v596 = vunpack.c.h.b16 %v134
  %v597 = vunpack.c.l.b16 %v135
  %v598 = vunpack.c.h.b16 %v135
  %v599 = vunpack.c.l.b16 %v136
  %v600 = vunpack.c.h.b16 %v136
  %v601 = vunpack.c.l.b16 %v137
  %v602 = vunpack.c.h.b16 %v137
  %v603 = vunpack.c.l.b16 %v138
  %v604 = vunpack.c.h.b16 %v138
  %v605 = vunpack.c.l.b16 %v139
  %v606 = vunpack.c.h.b16 %v139
  %v607 = vunpack.c.l.b16 %v140
  %v608 = vunpack.c.h.b16 %v140
  %v609 = vunpack.c.l.b16 %v141
  %v610 = vunpack.c.h.b16 %v141
  %v611 = vunpack.c.l.b16 %v142
  %v612 = vunpack.c.h.b16 %v142
  %v613 = vunpack.c.l.b16 %v143
  %v614 = vunpack.c.h.b16 %v143
  %v615 = vunpack.c.l.b16 %v144
  %v616 = vunpack.c.h.b16 %v144
  %v617 = vunpack.c.l.b16 %v145
  %v618 = vunpack.c.h.b16 %v145
  %v619 = vunpack.c.l.b16 %v146
  %v620 = vunpack.c.h.b16 %v146
  %v621 = vunpack.c.l.b16 %v147
  %v622 = vunpack.c.h.b16 %v147
  %v623 = vunpack.c.l.b16 %v148
  %v624 = vunpack.c.h.b16 %v148
  %v625 = vunpack.c.l.b16 %v149
  %v626 = vunpack.c.h.b16 %v149
  %v627 = vunpack.c.l.b16 %v150
  %v628 = vunpack.c.h.b16 %v150
  %v629 = vunpack.c.l.b16 %v151
  %v630 = vunpack.c.h.b16 %v151
  %v631 = vunpack.c.l.b16 %v152
  %v632 = vunpack.c.h.b16 %v152
  %v633 = vunpack.c.l.b16 %v153
  %v634 = vunpack.c.h.b16 %v153
  %v635 = vunpack.c.l.b16 %v154
  %v636 = vunpack.c.h.b16 %v154
  %v637 = vunpack.c.l.b16 %v155
  %v638 = vunpack.c.h.b16 %v155
  %v639 = vunpack.c.l.b16 %v156
  %v640 = vunpack.c.h.b16 %v156
  %v641 = vunpack.c.l.b16 %v157
  %v642 = vunpack.c.h.b16 %v157
  %v643 = vunpack.c.l.b16 %v158
  %v644 = vunpack.c.h.b16 %v158
  %v645 = vunpack.c.l.b16 %v159
  %v646 = vunpack.c.h.b16 %v159
  %v647 = vunpack.c.l.b16 %v160
  %v648 = vunpack.c.h.b16 %v160
  %v649 = vunpack.c.l.b16 %v161
  %v650 = vunpack.c.h.b16 %v161
  %v651 = vunpack.c.l.b16 %v162
  %v652 = vunpack.c.h.b16 %v162
  %v653 = vunpack.c.l.b16 %v163
  %v654 = vunpack.c.h.b16 %v163
  %v655 = vunpack.c.l.b16 %v164
  %v656 = vunpack.c.h.b16 %v164
  %v657 = vunpack.c.l.b16 %v165
  %v658 = vunpack.c.h.b16 %v165
  %v659 = vunpack.c.l.b16 %v166
  %v660 = vunpack.c.h.b16 %v166
  %v661 = vunpack.c.l.b16 %v167
  %v662 = vunpack.c.h.b16 %v167
  %v663 = vunpack.c.l.b16 %v168
  %v664 = vunpack.c.h.b16 %v168
  %v665 = vunpack.c.l.b16 %v169
  %v666 = vunpack.c.h.b16 %v169
  %v667 = vunpack.c.l.b16 %v170
  %v668 = vunpack.c.h.b16 %v170
  %v669 = vunpack.c.l.b16 %v171
  %v670 = vunpack.c.h.b16 %v171
  %v671 = vunpack.c.l.b16 %v172
  %v672 = vunpack.c.h.b16 %v172
  %v673 = vunpack.c.l.b16 %v173
  %v674 = vunpack.c.h.b16 %v173
  %v675 = vunpack.c.l.b16 %v174
  %v676 = vunpack.c.h.b16 %v174
  %v677 = vunpack.c.l.b16 %v175
  %v678 = vunpack.c.h.b16 %v175
  %v679 = vunpack.c.l.b16 %v176
  %v680 = vunpack.c.h.b16 %v176
  %v681 = vunpack.c.l.b16 %v177
  %v682 = vunpack.c.h.b16 %v177
  %v683 = vunpack.c.l.b16 %v178
  %v684 = vunpack.c.h.b16 %v178
  %v685 = vunpack.c.l.b16 %v179
  %v686 = vunpack.c.h.b16 %v179
  %v687 = vunpack.c.l.b16 %v180
  %v688 = vunpack.c.h.b16 %v180
  %v689 = vunpack.c.l.b16 %v181
  %v690 = vunpack.c.h.b16 %v181
  %v691 = vunpack.c.l.b16 %v182
  %v692 = vunpack.c.h.b16 %v182
  %v693 = vpack.c.b16 %v407, %v405
  %v694 = vpack.c.b16 %v408, %v406
  %v695 = vpack.c.b16 %v411, %v409
  %v696 = vpack.c.b16 %v412, %v410
  %v697 = vpack.c.b16 %v415, %v413
  %v698 = vpack.c.b16 %v416, %v414
  %v699 = vpack.c.b16 %v419, %v417
  %v700 = vpack.c.b16 %v420, %v418
  %v701 = vpack.c.b16 %v423, %v421
  %v702 = vpack.c.b16 %v424, %v422
  %v703 = vpack.c.b16 %v427, %v425
  %v704 = vpack.c.b16 %v428, %v426
  %v705 = vpack.c.b16 %v431, %v429
  %v706 = vpack.c.b16 %v432, %v430
  %v707 = vpack.c.b16 %v435, %v433
  %v708 = vpack.c.b16 %v436, %v434
  %v709 = vpack.c.b16 %v439, %v437
  %v710 = vpack.c.b16 %v440, %v438
  %v711 = vpack.c.b16 %v443, %v441
  %v712 = vpack.c.b16 %v444, %v442
  %v713 = vpack.c.b16 %v447, %v445
  %v714 = vpack.c.b16 %v448, %v446
  %v715 = vpack.c.b16 %v451, %v449
  %v716 = vpack.c.b16 %v452, %v450
  %v717 = vpack.c.b16 %v455, %v453
  %v718 = vpack.c.b16 %v456, %v454
  %v719 = vpack.c.b16 %v459, %v457
  %v720 = vpack.c.b16 %v460, %v458
  %v721 = vpack.c.b16 %v463, %v461
  %v722 = vpack.c.b16 %v464, %v462
  %v723 = vpack.c.b16 %v467, %v465
  %v724 = vpack.c.b16 %v468, %v466
  %v725 = vpack.c.b16 %v471, %v469
  %v726 = vpack.c.b16 %v472, %v470
  %v727 = vpack.c.b16 %v475, %v473
  %v728 = vpack.c.b16 %v476, %v474
  %v729 = vpack.c.b16 %v479, %v477
  %v730 = vpack.c.b16 %v480, %v478
  %v731 = vpack.c.b16 %v483, %v481
  %v732 = vpack.c.b16 %v484, %v482
  %v733 = vpack.c.b16 %v487, %v485
  %v734 = vpack.c.b16 %v488, %v486
  %v735 = vpack.c.b16 %v491, %v489
  %v736 = vpack.c.b16 %v492, %v490
  %v737 = vpack.c.b16 %v495, %v493
  %v738 = vpack.c.b16 %v496, %v494
  %v739 = vpack.c.b16 %v499, %v497
  %v740 = vpack.c.b16 %v500, %v498
  %v741 = vpack.c.b16 %v503, %v501
  %v742 = vpack.c.b16 %v504, %v502
  %v743 = vpack.c.b16 %v507, %v505
  %v744 = vpack.c.b16 %v508, %v506
  %v745 = vpack.c.b16 %v511, %v509
  %v746 = vpack.c.b16 %v512, %v510
  %v747 = vpack.c.b16 %v515, %v513
  %v748 = vpack.c.b16 %v516, %v514
  %v749 = vpack.c.b16 %v519, %v517
  %v750 = vpack.c.b16 %v520, %v518
  %v751 = vpack.c.b16 %v523, %v521
  %v752 = vpack.c.b16 %v524, %v522
  %v753 = vpack.c.b16 %v527, %v525
  %v754 = vpack.c.b16 %v528, %v526
  %v755 = vpack.c.b16 %v531, %v529
  %v756 = vpack.c.b16 %v532, %v530
  %v757 = vpack.c.b16 %v535, %v533
  %v758 = vpack.c.b16 %v536, %v534
  %v759 = vpack.c.b16 %v539, %v537
  %v760 = vpack.c.b16 %v540, %v538
  %v761 = vpack.c.b16 %v543, %v541
  %v762 = vpack.c.b16 %v544, %v542
  %v763 = vpack.c.b16 %v547, %v545
  %v764 = vpack.c.b16 %v548, %v546
  %v765 = vpack.c.b16 %v551, %v549
  %v766 = vpack.c.b16 %v552, %v550
  %v767 = vpack.c.b16 %v555, %v553
  %v768 = vpack.c.b16 %v556, %v554
  %v769 = vpack.c.b16 %v559, %v557
  %v770 = vpack.c.b16 %v560, %v558
  %v771 = vpack.c.b16 %v563, %v561
  %v772 = vpack.c.b16 %v564, %v562
  %v773 = vpack.c.b16 %v567, %v565
  %v774 = vpack.c.b16 %v568, %v566
  %v775 = vpack.c.b16 %v571, %v569
  %v776 = vpack.c.b16 %v572, %v570
  %v777 = vpack.c.b16 %v575, %v573
  %v778 = vpack.c.b16 %v576, %v574
  %v779 = vpack.c.b16 %v579, %v577
  %v780 = vpack.c.b16 %v580, %v578
  %v781 = vpack.c.b16 %v583, %v581
  %v782 = vpack.c.b16 %v584, %v582
  %v783 = vpack.c.b16 %v587, %v585
  %v784 = vpack.c.b16 %v588, %v586
  %v785 = vpack.c.b16 %v591, %v589
  %v786 = vpack.c.b16 %v592, %v590
  %v787 = vpack.c.b16 %v595, %v593
  %v788 = vpack.c.b16 %v596, %v594
  %v789 = vpack.c.b16 %v599, %v597
  %v790 = vpack.c.b16 %v600, %v598
  %v791 = vpack.c.b16 %v603, %v601
  %v792 = vpack.c.b16 %v604, %v602
  %v793 = vpack.c.b16 %v607, %v605
  %v794 = vpack.c.b16 %v608, %v606
  %v795 = vpack.c.b16 %v611, %v609
  %v796 = vpack.c.b16 %v612, %v610
  %v797 = vpack.c.b16 %v615, %v613
  %v798 = vpack.c.b16 %v616, %v614
  %v799 = vpack.c.b16 %v619, %v617
  %v800 = vpack.c.b16 %v620, %v618
  %v801 = vpack.c.b16 %v623, %v621
  %v802 = vpack.c.b16 %v624, %v622
  %v803 = vpack.c.b16 %v627, %v625
  %v804 = vpack.c.b16 %v628, %v626
  %v805 = vpack.c.b16 %v631, %v629
  %v806 = vpack.c.b16 %v632, %v630
  %v807 = vpack.c.b16 %v635, %v633
  %v808 = vpack.c.b16 %v636, %v634
  %v809 = vpack.c.b16 %v639, %v637
  %v810 = vpack.c.b16 %v640, %v638
  %v811 = vpack.c.b16 %v643, %v641
  %v812 = vpack.c.b16 %v644, %v642
  %v813 = vpack.c.b16 %v647, %v645
  %v814 = vpack.c.b16 %v648, %v646
  %v815 = vpack.c.b16 %v651, %v649
  %v816 = vpack.c.b16 %v652, %v650
  %v817 = vpack.c.b16 %v655, %v653
  %v818 = vpack.c.b16 %v656, %v654
  %v819 = vpack.c.b16 %v659, %v657
  %v820 = vpack.c.b16 %v660, %v658
  %v821 = vpack.c.b16 %v663, %v661
  %v822 = vpack.c.b16 %v664, %v662
  %v823 = vpack.c.b16 %v667, %v665
  %v824 = vpack.c.b16 %v668, %v666
  %v825 = vpack.c.b16 %v671, %v669
  %v826 = vpack.c.b16 %v672, %v670
  %v827 = vpack.c.b16 %v675, %v673
  %v828 = vpack.c.b16 %v676, %v674
  %v829 = vpack.c.b16 %v679, %v677
  %v830 = vpack.c.b16 %v680, %v678
  %v831 = vpack.c.b16 %v683, %v681
  %v832 = vpack.c.b16 %v684, %v682
  %v833 = vpack.c.b16 %v687, %v685
  %v834 = vpack.c.b16 %v688, %v686
  %v835 = vpack.c.b16 %v691, %v689
  %v836 = vpack.c.b16 %v692, %v690
  %981 = vmatprep.subr.bf16.mxu0 %v708
  %982 = vmatpush1.bf16.msra.mxu0 %v707
  %983 = vmatprep.subr.bf16.mxu0 %v706
  %984 = vmatpush1.bf16.msra.mxu0 %v705
  %985 = vmatprep.subr.bf16.mxu0 %v704
  %986 = vmatpush1.bf16.msra.mxu0 %v703
  %987 = vmatprep.subr.bf16.mxu0 %v702
  %988 = vmatpush1.bf16.msra.mxu0 %v701
  %989 = vmatprep.subr.bf16.mxu0 %v700
  %990 = vmatpush1.bf16.msra.mxu0 %v699
  %991 = vmatprep.subr.bf16.mxu0 %v698
  %992 = vmatpush1.bf16.msra.mxu0 %v697
  %993 = vmatprep.subr.bf16.mxu0 %v696
  %994 = vmatpush1.bf16.msra.mxu0 %v695
  %995 = vmatprep.subr.bf16.mxu0 %v694
  %996 = vmatpush1.bf16.msra.mxu0 %v693
  %997 = vmatprep.subr.bf16.mxu0 %v724
  %998 = vmatpush2.bf16.msra.mxu0 %v723
  %999 = vmatprep.subr.bf16.mxu0 %v722
  %1000 = vmatpush2.bf16.msra.mxu0 %v721
  %1001 = vmatprep.subr.bf16.mxu0 %v720
  %1002 = vmatpush2.bf16.msra.mxu0 %v719
  %1003 = vmatprep.subr.bf16.mxu0 %v718
  %1004 = vmatpush2.bf16.msra.mxu0 %v717
  %1005 = vmatprep.subr.bf16.mxu0 %v716
  %1006 = vmatpush2.bf16.msra.mxu0 %v715
  %1007 = vmatprep.subr.bf16.mxu0 %v714
  %1008 = vmatpush2.bf16.msra.mxu0 %v713
  %1009 = vmatprep.subr.bf16.mxu0 %v712
  %1010 = vmatpush2.bf16.msra.mxu0 %v711
  %1011 = vmatprep.subr.bf16.mxu0 %v710
  %1012 = vmatpush2.bf16.msra.mxu0 %v709
  %1013 = vmatprep.mubr.bf16.mxu0 %v226
  %1014 = vmatmul.mubr.bf16.gmra.mxu0 %v225
  %v1015 = vpop.f32.mrf.mxu0
  %v1016 = vadd.f32 0.0, %v1015
  %v1017 = vpop.f32.mrf.mxu0
  %v1018 = vadd.f32 0.0, %v1017
  %v1019 = vpop.f32.mrf.mxu0
  %v1020 = vadd.f32 0.0, %v1019
  %v1021 = vpop.f32.mrf.mxu0
  %v1022 = vadd.f32 0.0, %v1021
  %1023 = vmatprep.mubr.bf16.mxu0 %v235
  %1024 = vmatmul.mubr.bf16.gmra.mxu0 %v234
  %v1025 = vpop.f32.mrf.mxu0
  %v1026 = vadd.f32 0.0, %v1025
  %v1027 = vpop.f32.mrf.mxu0
  %v1028 = vadd.f32 0.0, %v1027
  %v1029 = vpop.f32.mrf.mxu0
  %v1030 = vpop.f32.mrf.mxu0
  %1031 = vdwg.mxu0
  %1032 = vmatprep.subr.bf16.mxu0 %v740
  %1033 = vmatpush1.bf16.msra.mxu0 %v739
  %1034 = vmatprep.subr.bf16.mxu0 %v738
  %1035 = vmatpush1.bf16.msra.mxu0 %v737
  %1036 = vmatprep.subr.bf16.mxu0 %v736
  %1037 = vmatpush1.bf16.msra.mxu0 %v735
  %1038 = vmatprep.subr.bf16.mxu0 %v734
  %1039 = vmatpush1.bf16.msra.mxu0 %v733
  %1040 = vmatprep.subr.bf16.mxu0 %v732
  %1041 = vmatpush1.bf16.msra.mxu0 %v731
  %1042 = vmatprep.subr.bf16.mxu0 %v730
  %1043 = vmatpush1.bf16.msra.mxu0 %v729
  %1044 = vmatprep.subr.bf16.mxu0 %v728
  %1045 = vmatpush1.bf16.msra.mxu0 %v727
  %1046 = vmatprep.subr.bf16.mxu0 %v726
  %1047 = vmatpush1.bf16.msra.mxu0 %v725
  %1048 = vmatprep.subr.bf16.mxu0 %v756
  %1049 = vmatpush2.bf16.msra.mxu0 %v755
  %1050 = vmatprep.subr.bf16.mxu0 %v754
  %1051 = vmatpush2.bf16.msra.mxu0 %v753
  %1052 = vmatprep.subr.bf16.mxu0 %v752
  %1053 = vmatpush2.bf16.msra.mxu0 %v751
  %1054 = vmatprep.subr.bf16.mxu0 %v750
  %1055 = vmatpush2.bf16.msra.mxu0 %v749
  %1056 = vmatprep.subr.bf16.mxu0 %v748
  %1057 = vmatpush2.bf16.msra.mxu0 %v747
  %1058 = vmatprep.subr.bf16.mxu0 %v746
  %1059 = vmatpush2.bf16.msra.mxu0 %v745
  %1060 = vmatprep.subr.bf16.mxu0 %v744
  %1061 = vmatpush2.bf16.msra.mxu0 %v743
  %1062 = vmatprep.subr.bf16.mxu0 %v742
  %1063 = vmatpush2.bf16.msra.mxu0 %v741
  %1064 = vmatprep.mubr.bf16.mxu0 %v228
  %1065 = vmatmul.mubr.bf16.gmra.mxu0 %v227
  %v1066 = vpop.f32.mrf.mxu0
  %v1067 = vadd.f32 %v1016, %v1066
  %v1068 = vpop.f32.mrf.mxu0
  %v1069 = vadd.f32 %v1018, %v1068
  %v1070 = vpop.f32.mrf.mxu0
  %v1071 = vadd.f32 %v1020, %v1070
  %v1072 = vpop.f32.mrf.mxu0
  %v1073 = vadd.f32 %v1022, %v1072
  %1074 = vmatprep.mubr.bf16.mxu0 %v237
  %1075 = vmatmul.mubr.bf16.gmra.mxu0 %v236
  %v1076 = vpop.f32.mrf.mxu0
  %v1077 = vadd.f32 %v1026, %v1076
  %v1078 = vpop.f32.mrf.mxu0
  %v1079 = vadd.f32 %v1028, %v1078
  %v1080 = vpop.f32.mrf.mxu0
  %v1081 = vpop.f32.mrf.mxu0
  %1082 = vdwg.mxu0
  %1083 = vmatprep.subr.bf16.mxu0 %v772
  %1084 = vmatpush1.bf16.msra.mxu0 %v771
  %1085 = vmatprep.subr.bf16.mxu0 %v770
  %1086 = vmatpush1.bf16.msra.mxu0 %v769
  %1087 = vmatprep.subr.bf16.mxu0 %v768
  %1088 = vmatpush1.bf16.msra.mxu0 %v767
  %1089 = vmatprep.subr.bf16.mxu0 %v766
  %1090 = vmatpush1.bf16.msra.mxu0 %v765
  %1091 = vmatprep.subr.bf16.mxu0 %v764
  %1092 = vmatpush1.bf16.msra.mxu0 %v763
  %1093 = vmatprep.subr.bf16.mxu0 %v762
  %1094 = vmatpush1.bf16.msra.mxu0 %v761
  %1095 = vmatprep.subr.bf16.mxu0 %v760
  %1096 = vmatpush1.bf16.msra.mxu0 %v759
  %1097 = vmatprep.subr.bf16.mxu0 %v758
  %1098 = vmatpush1.bf16.msra.mxu0 %v757
  %1099 = vmatprep.subr.bf16.mxu0 %v788
  %1100 = vmatpush2.bf16.msra.mxu0 %v787
  %1101 = vmatprep.subr.bf16.mxu0 %v786
  %1102 = vmatpush2.bf16.msra.mxu0 %v785
  %1103 = vmatprep.subr.bf16.mxu0 %v784
  %1104 = vmatpush2.bf16.msra.mxu0 %v783
  %1105 = vmatprep.subr.bf16.mxu0 %v782
  %1106 = vmatpush2.bf16.msra.mxu0 %v781
  %1107 = vmatprep.subr.bf16.mxu0 %v780
  %1108 = vmatpush2.bf16.msra.mxu0 %v779
  %1109 = vmatprep.subr.bf16.mxu0 %v778
  %1110 = vmatpush2.bf16.msra.mxu0 %v777
  %1111 = vmatprep.subr.bf16.mxu0 %v776
  %1112 = vmatpush2.bf16.msra.mxu0 %v775
  %1113 = vmatprep.subr.bf16.mxu0 %v774
  %1114 = vmatpush2.bf16.msra.mxu0 %v773
  %1115 = vmatprep.mubr.bf16.mxu0 %v230
  %1116 = vmatmul.mubr.bf16.gmra.mxu0 %v229
  %v1117 = vpop.f32.mrf.mxu0
  %v1118 = vadd.f32 %v1067, %v1117
  %v1119 = vpop.f32.mrf.mxu0
  %v1120 = vadd.f32 %v1069, %v1119
  %v1121 = vpop.f32.mrf.mxu0
  %v1122 = vadd.f32 %v1071, %v1121
  %v1123 = vpop.f32.mrf.mxu0
  %v1124 = vadd.f32 %v1073, %v1123
  %1125 = vmatprep.mubr.bf16.mxu0 %v239
  %1126 = vmatmul.mubr.bf16.gmra.mxu0 %v238
  %v1127 = vpop.f32.mrf.mxu0
  %v1128 = vadd.f32 %v1077, %v1127
  %v1129 = vpop.f32.mrf.mxu0
  %v1130 = vadd.f32 %v1079, %v1129
  %v1131 = vpop.f32.mrf.mxu0
  %v1132 = vpop.f32.mrf.mxu0
  %1133 = vdwg.mxu0
  %1134 = vmatprep.subr.bf16.mxu0 %v804
  %1135 = vmatpush1.bf16.msra.mxu0 %v803
  %1136 = vmatprep.subr.bf16.mxu0 %v802
  %1137 = vmatpush1.bf16.msra.mxu0 %v801
  %1138 = vmatprep.subr.bf16.mxu0 %v800
  %1139 = vmatpush1.bf16.msra.mxu0 %v799
  %1140 = vmatprep.subr.bf16.mxu0 %v798
  %1141 = vmatpush1.bf16.msra.mxu0 %v797
  %1142 = vmatprep.subr.bf16.mxu0 %v796
  %1143 = vmatpush1.bf16.msra.mxu0 %v795
  %1144 = vmatprep.subr.bf16.mxu0 %v794
  %1145 = vmatpush1.bf16.msra.mxu0 %v793
  %1146 = vmatprep.subr.bf16.mxu0 %v792
  %1147 = vmatpush1.bf16.msra.mxu0 %v791
  %1148 = vmatprep.subr.bf16.mxu0 %v790
  %1149 = vmatpush1.bf16.msra.mxu0 %v789
  %1150 = vmatprep.subr.bf16.mxu0 %v820
  %1151 = vmatpush2.bf16.msra.mxu0 %v819
  %1152 = vmatprep.subr.bf16.mxu0 %v818
  %1153 = vmatpush2.bf16.msra.mxu0 %v817
  %1154 = vmatprep.subr.bf16.mxu0 %v816
  %1155 = vmatpush2.bf16.msra.mxu0 %v815
  %1156 = vmatprep.subr.bf16.mxu0 %v814
  %1157 = vmatpush2.bf16.msra.mxu0 %v813
  %1158 = vmatprep.subr.bf16.mxu0 %v812
  %1159 = vmatpush2.bf16.msra.mxu0 %v811
  %1160 = vmatprep.subr.bf16.mxu0 %v810
  %1161 = vmatpush2.bf16.msra.mxu0 %v809
  %1162 = vmatprep.subr.bf16.mxu0 %v808
  %1163 = vmatpush2.bf16.msra.mxu0 %v807
  %1164 = vmatprep.subr.bf16.mxu0 %v806
  %1165 = vmatpush2.bf16.msra.mxu0 %v805
  %1166 = vmatprep.mubr.bf16.mxu0 %v232
  %1167 = vmatmul.mubr.bf16.gmra.mxu0 %v231
  %v1168 = vpop.f32.mrf.mxu0
  %v1169 = vadd.f32 %v1118, %v1168
  %v1170 = vpop.f32.mrf.mxu0
  %v1171 = vadd.f32 %v1120, %v1170
  %v1172 = vpop.f32.mrf.mxu0
  %v1173 = vadd.f32 %v1122, %v1172
  %v1174 = vpop.f32.mrf.mxu0
  %v1175 = vadd.f32 %v1124, %v1174
  %1176 = vmatprep.mubr.bf16.mxu0 %v241
  %1177 = vmatmul.mubr.bf16.gmra.mxu0 %v240
  %v1178 = vpop.f32.mrf.mxu0
  %v1179 = vadd.f32 %v1128, %v1178
  %v1180 = vpop.f32.mrf.mxu0
  %v1181 = vadd.f32 %v1130, %v1180
  %v1182 = vpop.f32.mrf.mxu0
  %v1183 = vpop.f32.mrf.mxu0
  %1184 = vdwg.mxu0
  %1185 = vmatprep.subr.bf16.mxu0 %v836
  %1186 = vmatpush1.bf16.msra.mxu0 %v835
  %1187 = vmatprep.subr.bf16.mxu0 %v834
  %1188 = vmatpush1.bf16.msra.mxu0 %v833
  %1189 = vmatprep.subr.bf16.mxu0 %v832
  %1190 = vmatpush1.bf16.msra.mxu0 %v831
  %1191 = vmatprep.subr.bf16.mxu0 %v830
  %1192 = vmatpush1.bf16.msra.mxu0 %v829
  %1193 = vmatprep.subr.bf16.mxu0 %v828
  %1194 = vmatpush1.bf16.msra.mxu0 %v827
  %1195 = vmatprep.subr.bf16.mxu0 %v826
  %1196 = vmatpush1.bf16.msra.mxu0 %v825
  %1197 = vmatprep.subr.bf16.mxu0 %v824
  %1198 = vmatpush1.bf16.msra.mxu0 %v823
  %1199 = vmatprep.subr.bf16.mxu0 %v822
  %1200 = vmatpush1.bf16.msra.mxu0 %v821
  %1201 = vmatprep.subr.bf16.mxu0 0
  %1202 = vmatpush2.bf16.msra.mxu0 0
  %1203 = vmatprep.subr.bf16.mxu0 0
  %1204 = vmatpush2.bf16.msra.mxu0 0
  %1205 = vmatprep.subr.bf16.mxu0 0
  %1206 = vmatpush2.bf16.msra.mxu0 0
  %1207 = vmatprep.subr.bf16.mxu0 0
  %1208 = vmatpush2.bf16.msra.mxu0 0
  %1209 = vmatprep.subr.bf16.mxu0 0
  %1210 = vmatpush2.bf16.msra.mxu0 0
  %1211 = vmatprep.subr.bf16.mxu0 0
  %1212 = vmatpush2.bf16.msra.mxu0 0
  %1213 = vmatprep.subr.bf16.mxu0 0
  %1214 = vmatpush2.bf16.msra.mxu0 0
  %1215 = vmatprep.subr.bf16.mxu0 0
  %1216 = vmatpush2.bf16.msra.mxu0 0
  %1217 = vmatprep.mubr.bf16.mxu0 0
  %1218 = vmatmul.mubr.bf16.gmra.mxu0 %v233
  %v1219 = vpop.f32.mrf.mxu0
  %v1220 = vadd.f32 %v1169, %v1219
  %v1221 = vpop.f32.mrf.mxu0
  %v1222 = vadd.f32 %v1171, %v1221
  %v1223 = vpop.f32.mrf.mxu0
  %v1224 = vadd.f32 %v1173, %v1223
  %v1225 = vpop.f32.mrf.mxu0
  %v1226 = vadd.f32 %v1175, %v1225
  %1227 = vmatprep.mubr.bf16.mxu0 0
  %1228 = vmatmul.mubr.bf16.gmra.mxu0 %v242
  %v1229 = vpop.f32.mrf.mxu0
  %v1230 = vadd.f32 %v1179, %v1229
  %v1231 = vpop.f32.mrf.mxu0
  %v1232 = vadd.f32 %v1181, %v1231
  %v1233 = vpop.f32.mrf.mxu0
  %v1234 = vpop.f32.mrf.mxu0
  %1235 = vdwg.mxu0
  %v1236 = vadd.f32 %v1220, %v1224
  %vm1237 = vcmask 1041408
  %v1238 = vsel %vm1237, %v1230, 0.0
  %v1239 = vadd.f32 %v1236, %v1238
  %v1240 = vrot.slane %v1239, 4
  %v1241 = vadd.f32 %v1239, %v1240
  %v1242 = vrot.slane %v1241, 2
  %v1243 = vadd.f32 %v1241, %v1242
  %v1244 = vrot.slane %v1243, 1
  %v1245 = vadd.f32 %v1243, %v1244
  %v1246 = vadd.f32 %v1222, %v1226
  %v1247 = vsel %vm1237, %v1232, 0.0
  %v1248 = vadd.f32 %v1246, %v1247
  %v1249 = vrot.slane %v1248, 4
  %v1250 = vadd.f32 %v1248, %v1249
  %v1251 = vrot.slane %v1250, 2
  %v1252 = vadd.f32 %v1250, %v1251
  %v1253 = vrot.slane %v1252, 1
  %v1254 = vadd.f32 %v1252, %v1253
  %v1255 = vrcp.pop 18.0
  %v1256 = vmul.f32 %v1245, %v1255
  %v1257 = vmul.f32 %v1254, %v1255
  %v1258 = vmul.f32 %v1220, %v1220
  %v1259 = vmul.f32 %v1222, %v1222
  %v1260 = vmul.f32 %v1224, %v1224
  %v1261 = vmul.f32 %v1226, %v1226
  %v1262 = vmul.f32 %v1230, %v1230
  %v1263 = vmul.f32 %v1232, %v1232
  %v1264 = vadd.f32 %v1258, %v1260
  %v1265 = vsel %vm1237, %v1262, 0.0
  %v1266 = vadd.f32 %v1264, %v1265
  %v1267 = vrot.slane %v1266, 4
  %v1268 = vadd.f32 %v1266, %v1267
  %v1269 = vrot.slane %v1268, 2
  %v1270 = vadd.f32 %v1268, %v1269
  %v1271 = vrot.slane %v1270, 1
  %v1272 = vadd.f32 %v1270, %v1271
  %v1273 = vadd.f32 %v1259, %v1261
  %v1274 = vsel %vm1237, %v1263, 0.0
  %v1275 = vadd.f32 %v1273, %v1274
  %v1276 = vrot.slane %v1275, 4
  %v1277 = vadd.f32 %v1275, %v1276
  %v1278 = vrot.slane %v1277, 2
  %v1279 = vadd.f32 %v1277, %v1278
  %v1280 = vrot.slane %v1279, 1
  %v1281 = vadd.f32 %v1279, %v1280
  %v1282 = vmul.f32 %v1272, %v1255
  %v1283 = vmul.f32 %v1281, %v1255
  %v1284 = vmul.f32 %v1256, %v1256
  %v1285 = vmul.f32 %v1257, %v1257
  %v1286 = vsub.f32 %v1282, %v1284
  %v1287 = vsub.f32 %v1283, %v1285
  %v1288 = vmax.f32 %v1286, 0.0
  %v1289 = vmax.f32 %v1287, 0.0
  %v1290 = vsub.f32 %v1220, %v1256
  %v1291 = vsub.f32 %v1222, %v1257
  %v1292 = vsub.f32 %v1224, %v1256
  %v1293 = vsub.f32 %v1226, %v1257
  %v1294 = vsub.f32 %v1230, %v1256
  %v1295 = vsub.f32 %v1232, %v1257
  %v1296 = vadd.f32 %v1288, 1e-05
  %v1297 = vadd.f32 %v1289, 1e-05
  %v1298 = vrsqrt.pop %v1296
  %v1299 = vrsqrt.pop %v1297
  %v1300 = vmul.f32 %v1290, %v1298
  %v1301 = vmul.f32 %v1291, %v1299
  %v1302 = vmul.f32 %v1292, %v1298
  %v1303 = vmul.f32 %v1293, %v1299
  %v1304 = vmul.f32 %v1294, %v1298
  %v1305 = vmul.f32 %v1295, %v1299
  %v1306 = vld [vmem:[%s2] sm:$0x3]
  %v1308 = vlaneseq
  %v1309 = vshrl.u32 %v1308, 7
  %v1310 = vsub.s32 0, %v1309
  %v1311 = vrot.slane %v1306, %v1310
  %v1312 = vlaneseq
  %v1313 = vshrl.u32 %v1312, 7
  %v1314 = vsub.s32 1, %v1313
  %v1315 = vrot.slane %v1306, %v1314
  %v1318 = vmul.f32 %v1300, %v1311
  %v1319 = vmul.f32 %v1301, %v1315
  %v1320 = vmul.f32 %v1302, %v1311
  %v1321 = vmul.f32 %v1303, %v1315
  %v1322 = vmul.f32 %v1304, %v1311
  %v1323 = vmul.f32 %v1305, %v1315
  %v1324 = vld [vmem:[%s3] sm:$0x3]
  %v1326 = vlaneseq
  %v1327 = vshrl.u32 %v1326, 7
  %v1328 = vsub.s32 0, %v1327
  %v1329 = vrot.slane %v1324, %v1328
  %v1330 = vlaneseq
  %v1331 = vshrl.u32 %v1330, 7
  %v1332 = vsub.s32 1, %v1331
  %v1333 = vrot.slane %v1324, %v1332
  %v1336 = vadd.f32 %v1318, %v1329
  %v1337 = vadd.f32 %v1319, %v1333
  %v1338 = vadd.f32 %v1320, %v1329
  %v1339 = vadd.f32 %v1321, %v1333
  %v1340 = vadd.f32 %v1322, %v1329
  %v1341 = vadd.f32 %v1323, %v1333
  %vm1342 = vcmp.gt.f32.partialorder %v1336, 0.0
  %vm1343 = vcmp.gt.f32.partialorder %v1337, 0.0
  %vm1344 = vcmp.gt.f32.partialorder %v1338, 0.0
  %vm1345 = vcmp.gt.f32.partialorder %v1339, 0.0
  %vm1346 = vcmp.gt.f32.partialorder %v1340, 0.0
  %vm1347 = vcmp.gt.f32.partialorder %v1341, 0.0
  %v1348 = vmul.f32 %v1336, 0.2
  %v1349 = vmul.f32 %v1337, 0.2
  %v1350 = vmul.f32 %v1338, 0.2
  %v1351 = vmul.f32 %v1339, 0.2
  %v1352 = vmul.f32 %v1340, 0.2
  %v1353 = vmul.f32 %v1341, 0.2
  %v1354 = vsel %vm1342, %v1336, %v1348
  %v1355 = vsel %vm1343, %v1337, %v1349
  %v1356 = vsel %vm1344, %v1338, %v1350
  %v1357 = vsel %vm1345, %v1339, %v1351
  %v1358 = vsel %vm1346, %v1340, %v1352
  %v1359 = vsel %vm1347, %v1341, %v1353
  %v1360 = vld [vmem:[%s4] sm:$0xff]
  %v1361 = vld [vmem:[%s4 + $0x8] sm:$0xff]
  %v1362 = vld [vmem:[%s4 + $0x10] sm:$0xff]
  %v1363 = vld [vmem:[%s4 + $0x18] sm:$0xff]
  %v1364 = vld [vmem:[%s4 + $0x20] sm:$0x3]
  %v1365 = vld [vmem:[%s4 + $0x28] sm:$0x3]
  %v1366 = vmul.f32 %v1354, %v1360
  %v1367 = vmul.f32 %v1355, %v1361
  %v1368 = vmul.f32 %v1356, %v1362
  %v1369 = vmul.f32 %v1357, %v1363
  %v1370 = vmul.f32 %v1358, %v1364
  %v1371 = vmul.f32 %v1359, %v1365
  %v1372 = vld [vmem:[%s5] sm:$0x3]
  %vm1373 = vcmask 146432
  %v1375 = vsel %vm1373, %v1372, 0
  %v1378 = vsel %vm1237, %v1370, 0
  %v1381 = vsel %vm1237, %v1371, 0
  %1383 = vmatprep.subr.mxu0 0.0
  %1384 = vmatpush1.msra.mxu0 0.0
  %1385 = vmatprep.subr.mxu0 0.0
  %1386 = vmatpush1.msra.mxu0 0.0
  %1387 = vmatprep.subr.mxu0 0.0
  %1388 = vmatpush1.msra.mxu0 0.0
  %1389 = vmatprep.subr.mxu0 0.0
  %1390 = vmatpush1.msra.mxu0 0.0
  %1391 = vmatprep.subr.mxu0 0.0
  %1392 = vmatpush1.msra.mxu0 0.0
  %1393 = vmatprep.subr.mxu0 0.0
  %1394 = vmatpush1.msra.mxu0 0.0
  %1395 = vmatprep.subr.mxu0 0.0
  %1396 = vmatpush1.msra.mxu0 0.0
  %1397 = vmatprep.subr.mxu0 0.0
  %1398 = vmatpush1.msra.mxu0 0.0
  %1399 = vmatprep.subr.mxu0 0.0
  %1400 = vmatpush1.msra.mxu0 0.0
  %1401 = vmatprep.subr.mxu0 0.0
  %1402 = vmatpush1.msra.mxu0 0.0
  %1403 = vmatprep.subr.mxu0 0.0
  %1404 = vmatpush1.msra.mxu0 0.0
  %1405 = vmatprep.subr.mxu0 0.0
  %1406 = vmatpush1.msra.mxu0 0.0
  %1407 = vmatprep.subr.mxu0 0.0
  %1408 = vmatpush1.msra.mxu0 0.0
  %1409 = vmatprep.subr.mxu0 %v1381
  %1410 = vmatpush1.msra.mxu0 %v1378
  %1411 = vmatprep.subr.mxu0 %v1369
  %1412 = vmatpush1.msra.mxu0 %v1368
  %1413 = vmatprep.subr.mxu0 %v1367
  %1414 = vmatpush1.msra.mxu0 %v1366
  %1415 = vmatprep.subr.mxu0 0.0
  %1416 = vmatpush2.msra.mxu0 0.0
  %1417 = vmatprep.subr.mxu0 0.0
  %1418 = vmatpush2.msra.mxu0 0.0
  %1419 = vmatprep.subr.mxu0 0.0
  %1420 = vmatpush2.msra.mxu0 0.0
  %1421 = vmatprep.subr.mxu0 0.0
  %1422 = vmatpush2.msra.mxu0 0.0
  %1423 = vmatprep.subr.mxu0 0.0
  %1424 = vmatpush2.msra.mxu0 0.0
  %1425 = vmatprep.subr.mxu0 0.0
  %1426 = vmatpush2.msra.mxu0 0.0
  %1427 = vmatprep.subr.mxu0 0.0
  %1428 = vmatpush2.msra.mxu0 0.0
  %1429 = vmatprep.subr.mxu0 0.0
  %1430 = vmatpush2.msra.mxu0 0.0
  %1431 = vmatprep.subr.mxu0 0.0
  %1432 = vmatpush2.msra.mxu0 0.0
  %1433 = vmatprep.subr.mxu0 0.0
  %1434 = vmatpush2.msra.mxu0 0.0
  %1435 = vmatprep.subr.mxu0 0.0
  %1436 = vmatpush2.msra.mxu0 0.0
  %1437 = vmatprep.subr.mxu0 0.0
  %1438 = vmatpush2.msra.mxu0 0.0
  %1439 = vmatprep.subr.mxu0 0.0
  %1440 = vmatpush2.msra.mxu0 0.0
  %1441 = vmatprep.subr.mxu0 0.0
  %1442 = vmatpush2.msra.mxu0 0.0
  %1443 = vmatprep.subr.mxu0 0.0
  %1444 = vmatpush2.msra.mxu0 0.0
  %1445 = vmatprep.subr.mxu0 0.0
  %1446 = vmatpush2.msra.mxu0 0.0
  %1447 = vmatprep.mubr.f32.mxu0 0.0
  %1448 = vmatmul.mubr.f32.gmra.mxu0 %v1375
  %v1449 = vpop.f32.mrf.mxu0
  %v1450 = vadd.f32 0.0, %v1449
  %v1451 = vpop.f32.mrf.mxu0
  %v1452 = vadd.f32 0.0, %v1451
  %1453 = vdwg.mxu0
  %v1454 = vsel %vm1237, %v1450, 0.0
  %v1455 = vsel %vm1237, %v1452, 0.0
  %v1456 = vadd.f32 %v1454, %v1455
  %1457 = vadd.xlane.f32.xlu0 %v1456
  %v1458 = vpop.xlane.xlu0 %1457
  %v1459 = vxor.u32 %v1458, 2147483648
  %v1460 = vmul.f32 %v1459, 1.442695
  %v1461 = vpow.pop %v1460
  %v1462 = vadd.f32 %v1461, 1.0
  %v1463 = vrcp.pop %v1462
  %v1464 = vmul.f32 1.0, %v1463
  %vm1465 = vcmask 1024
  %1466 = vst.msk [vmem:[%s6] sm:$0x3] %vm1465, %v1464
  // Predicated region
  $region26: #{discriminator_forward.5} parent=0 // pred_check
    _
  $region27: #{discriminator_forward.5} parent=0 // pred_check_branch
    %1468 = sbr.rel (0) target = $region29
  $region28: #{discriminator_forward.5} parent=0 // pred_region
    _
  $region29: #{discriminator_forward.5} parent=0 // pred_fallthru
    _
  // Predicated region
  $region30: #{discriminator_forward.5} parent=0 // pred_check
    _
  $region31: #{discriminator_forward.5} parent=0 // pred_check_branch
    %1470 = sbr.rel (0) target = $region33
  $region32: #{discriminator_forward.5} parent=0 // pred_region
    _
  $region33: #{discriminator_forward.5} parent=0 // pred_fallthru
    _

</llo_original>
